<compile_context>
chip_gen: v7x
topology: tpu7x:2x2x1
jax: 0.10.0
libtpu: 0.0.40
codegen_flags: <defaults>
</compile_context>

<pallas_src>
import functools

import numpy as np
import jax
import jax.numpy as jnp
from jax import lax
from jax.experimental import pallas as pl
from jax.experimental.pallas import tpu as pltpu


def _round_up(x, m):
    return ((x + m - 1) // m) * m


# ----------------------------- Pallas kernels ------------------------------- #

def _matmul_bias_kernel(x_ref, w_ref, b_ref, o_ref, *, apply_relu):
    # x:(TM,K) bf16, w:(K,N) bf16, b:(1,N) f32, o:(TM,N).  f32 accumulation.
    acc = jnp.dot(x_ref[...], w_ref[...], preferred_element_type=jnp.float32)
    acc = acc + b_ref[...]
    if apply_relu:
        acc = jnp.maximum(acc, 0.0)
    o_ref[...] = acc.astype(o_ref.dtype)


def _head_kernel(x_ref, w1_ref, b1_ref, w2_ref, b2_ref, o_ref):
    # Fused Linear-ReLU-Linear:  o = relu(x @ w1 + b1) @ w2 + b2
    h = jnp.dot(x_ref[...], w1_ref[...], preferred_element_type=jnp.float32)
    h = jnp.maximum(h + b1_ref[...], 0.0)                       # f32 hidden
    acc = jnp.dot(h, w2_ref[...], preferred_element_type=jnp.float32)
    o_ref[...] = (acc + b2_ref[...]).astype(o_ref.dtype)


# ------------------------------ wrappers ------------------------------------ #

_TM_MAX = 256  # 2*(TM*K + K*N + TM*N)*2B stays well under v7x's 32MiB scoped VMEM.


def pallas_matmul_bias(x, w, b, *, apply_relu, out_dtype, tm=_TM_MAX):
    """y = x @ w + b (optional ReLU).  x:(M,K), w:(K,N), b:(1,N); N % 128 == 0."""
    M, K = x.shape
    K2, N = w.shape
    assert K == K2 and N % 128 == 0
    TM = min(tm, _round_up(M, 8))
    Mp = _round_up(M, TM)
    if Mp != M:
        x = jnp.pad(x, ((0, Mp - M), (0, 0)))
    out = pl.pallas_call(
        functools.partial(_matmul_bias_kernel, apply_relu=apply_relu),
        out_shape=jax.ShapeDtypeStruct((Mp, N), out_dtype),
        grid=(Mp // TM,),
        in_specs=[
            pl.BlockSpec((TM, K), lambda i: (i, 0)),
            pl.BlockSpec((K, N), lambda i: (0, 0)),
            pl.BlockSpec((1, N), lambda i: (0, 0)),
        ],
        out_specs=pl.BlockSpec((TM, N), lambda i: (i, 0)),
        compiler_params=pltpu.CompilerParams(
            dimension_semantics=(pltpu.PARALLEL,)),
    )(x, w, b)
    return out[:M] if Mp != M else out


def pallas_head(x, w1, b1, w2, b2, *, tm=_TM_MAX):
    """Fused relu(x @ w1 + b1) @ w2 + b2.  All N dims pre-padded to 128."""
    M, K1 = x.shape
    N1 = w1.shape[1]
    N2 = w2.shape[1]
    assert w1.shape[0] == K1 and w2.shape[0] == N1
    TM = min(tm, _round_up(M, 8))
    Mp = _round_up(M, TM)
    if Mp != M:
        x = jnp.pad(x, ((0, Mp - M), (0, 0)))
    out = pl.pallas_call(
        _head_kernel,
        out_shape=jax.ShapeDtypeStruct((Mp, N2), jnp.float32),
        grid=(Mp // TM,),
        in_specs=[
            pl.BlockSpec((TM, K1), lambda i: (i, 0)),
            pl.BlockSpec((K1, N1), lambda i: (0, 0)),
            pl.BlockSpec((1, N1), lambda i: (0, 0)),
            pl.BlockSpec((N1, N2), lambda i: (0, 0)),
            pl.BlockSpec((1, N2), lambda i: (0, 0)),
        ],
        out_specs=pl.BlockSpec((TM, N2), lambda i: (i, 0)),
        compiler_params=pltpu.CompilerParams(
            dimension_semantics=(pltpu.PARALLEL,)),
    )(x, w1, b1, w2, b2)
    return out[:M] if Mp != M else out


# ------------------------------ conv via im2col ------------------------------ #

def im2col_nhwc(x, k, stride, c_in):
    """x: (B,H,W,C) NHWC (C possibly zero-padded; only first c_in channels read).
    Returns (B*OH*OW, k*k*c_in) patches with columns ordered (kh, kw, c),
    built from strided slices (no gather)."""
    B, H, W, _ = x.shape
    OH = (H - k) // stride + 1
    OW = (W - k) // stride + 1
    cols = []
    for kh in range(k):
        for kw in range(k):
            cols.append(lax.slice(
                x,
                (0, kh, kw, 0),
                (B, kh + (OH - 1) * stride + 1, kw + (OW - 1) * stride + 1, c_in),
                (1, stride, stride, 1)))
    patches = jnp.concatenate(cols, axis=-1)          # (B, OH, OW, k*k*c_in)
    return patches.reshape(B * OH * OW, k * k * c_in), OH, OW


def conv2d_pallas(x_nhwc, w_prep, b_prep, *, k, stride, c_in):
    """NHWC VALID conv + ReLU.  w_prep:(k*k*c_in, OC_pad) bf16, b_prep:(1,OC_pad) f32.
    Output (B, OH, OW, OC_pad) bf16 (padded channels are exactly zero)."""
    B = x_nhwc.shape[0]
    patches, OH, OW = im2col_nhwc(x_nhwc, k, stride, c_in)
    out = pallas_matmul_bias(patches, w_prep, b_prep,
                             apply_relu=True, out_dtype=jnp.bfloat16)
    return out.reshape(B, OH, OW, -1)


# ------------------------------ NatureCNN forward ---------------------------- #

def nature_cnn_forward(x, pp, *, n_input, n_out):
    # x arrives NCHW (torch layout); one transpose to NHWC + bf16 cast up front.
    x = jnp.transpose(x, (0, 2, 3, 1)).astype(jnp.bfloat16)
    B = x.shape[0]
    x = conv2d_pallas(x, pp["c1w"], pp["c1b"], k=8, stride=4, c_in=n_input)
    x = conv2d_pallas(x, pp["c2w"], pp["c2b"], k=4, stride=2, c_in=32)
    x = conv2d_pallas(x, pp["c3w"], pp["c3b"], k=3, stride=1, c_in=64)
    # NHWC flatten (h, w, c_pad); f1 weight columns were permuted/padded to match
    # torch's NCHW .view(N, -1) ordering.
    x = x.reshape(B, -1)
    out = pallas_head(x, pp["f1w"], pp["f1b"], pp["f2w"], pp["f2b"])
    return out[:, :n_out]


# --------------------- deterministic parameter init (torch layout) ----------- #

def orthogonal_np(rng, shape, gain=1.0):
    rows = shape[0]
    cols = int(np.prod(shape[1:]))
    a = rng.standard_normal((max(rows, cols), min(rows, cols))).astype(np.float64)
    q, r = np.linalg.qr(a)
    q = q * np.sign(np.diag(r))
    if rows < cols:
        q = q.T
    return (gain * q[:rows, :cols]).reshape(shape).astype(np.float32)


def make_params(n_input, n_hidden, n_out, seed=0):
    rng = np.random.default_rng(seed)
    g = float(np.sqrt(2.0))  # nn.init.calculate_gain('relu')
    return {
        "c1w": jnp.asarray(orthogonal_np(rng, (32, n_input, 8, 8), g)),
        "c1b": jnp.zeros((32,), jnp.float32),
        "c2w": jnp.asarray(orthogonal_np(rng, (64, 32, 4, 4), g)),
        "c2b": jnp.zeros((64,), jnp.float32),
        "c3w": jnp.asarray(orthogonal_np(rng, (32, 64, 3, 3), g)),
        "c3b": jnp.zeros((32,), jnp.float32),
        "f1w": jnp.asarray(orthogonal_np(rng, (n_hidden, 32 * 7 * 7), g)),
        "f1b": jnp.zeros((n_hidden,), jnp.float32),
        "f2w": jnp.asarray(orthogonal_np(rng, (n_out, n_hidden), 1.0)),
        "f2b": jnp.zeros((n_out,), jnp.float32),
    }


# ------------------- one-time kernel-layout weight preparation --------------- #

def prepare_params(p):
    """Pre-transpose / pad / cast all weights once (lane-dense N, bf16 MXU feeds)."""
    def conv_w(w):  # (OC,C,kh,kw) torch -> (kh*kw*C, OC_pad128) bf16, cols (kh,kw,c)
        oc, c, kh, kw = w.shape
        w2 = jnp.transpose(w, (2, 3, 1, 0)).reshape(kh * kw * c, oc)
        w2 = jnp.pad(w2, ((0, 0), (0, _round_up(oc, 128) - oc)))
        return w2.astype(jnp.bfloat16)

    def vec_pad(b):  # (N,) -> (1, N_pad128) f32
        n = b.shape[0]
        return jnp.pad(b, (0, _round_up(n, 128) - n)).reshape(1, -1).astype(jnp.float32)

    n_hidden, feat = p["f1w"].shape          # feat = 32*7*7 (NCHW order)
    n_out = p["f2w"].shape[0]
    nh_pad = _round_up(n_hidden, 128)
    no_pad = _round_up(n_out, 128)

    # f1: permute columns from torch (c,h,w) order to our NHWC-padded (h,w,c_pad) order.
    f1 = p["f1w"].reshape(n_hidden, 32, 7, 7)
    f1 = jnp.transpose(f1, (2, 3, 1, 0))                     # (7,7,32,n_hidden)
    f1 = jnp.pad(f1, ((0, 0), (0, 0), (0, 128 - 32), (0, nh_pad - n_hidden)))
    f1 = f1.reshape(7 * 7 * 128, nh_pad).astype(jnp.bfloat16)

    # f2: (n_out, n_hidden) -> (nh_pad, no_pad) f32 (tiny; kept f32 for accuracy).
    f2 = jnp.pad(p["f2w"].T, ((0, nh_pad - n_hidden), (0, no_pad - n_out)))
    f2 = f2.astype(jnp.float32)

    return {
        "c1w": conv_w(p["c1w"]), "c1b": vec_pad(p["c1b"]),
        "c2w": conv_w(p["c2w"]), "c2b": vec_pad(p["c2b"]),
        "c3w": conv_w(p["c3w"]), "c3b": vec_pad(p["c3b"]),
        "f1w": f1, "f1b": vec_pad(p["f1b"]),
        "f2w": f2, "f2b": vec_pad(p["f2b"]),
    }


# ------------------------------- pure-JAX reference --------------------------- #

def reference_forward(x, p):
    def conv(x, w, b, s):
        y = lax.conv_general_dilated(
            x, w, (s, s), "VALID", dimension_numbers=("NCHW", "OIHW", "NCHW"))
        return jax.nn.relu(y + b[None, :, None, None])
    x = conv(x, p["c1w"], p["c1b"], 4)
    x = conv(x, p["c2w"], p["c2b"], 2)
    x = conv(x, p["c3w"], p["c3b"], 1)
    x = x.reshape(x.shape[0], -1)
    x = jax.nn.relu(x @ p["f1w"].T + p["f1b"])
    return x @ p["f2w"].T + p["f2b"]


if __name__ == "__main__":
    # The head hard-codes 32*7*7 features, which forces 84x84 spatial inputs.
    batch, n_input, n_hidden, n_out = 2, 4, 32, 8
    params = make_params(n_input, n_hidden, n_out, seed=0)
    prepped = prepare_params(params)

    key = jax.random.PRNGKey(0)
    x = jax.random.normal(key, (batch, n_input, 84, 84), dtype=jnp.float32)

    fwd = jax.jit(functools.partial(nature_cnn_forward, n_input=n_input, n_out=n_out))
    out = jax.block_until_ready(fwd(x, prepped))
    assert out.shape == (batch, n_out), out.shape

    ref = reference_forward(x, params)
    # bf16 MXU inputs (f32 accumulation) across 5 layers -> ~1% expected error.
    np.testing.assert_allclose(np.asarray(out), np.asarray(ref), rtol=3e-2, atol=3e-2)

    print("KERNEL_OK")
</pallas_src>

<mosaic_0001>
module attributes {stable_mosaic.version = 11 : i64} {
  func.func @_matmul_bias_kernel(%arg0: i32, %arg1: memref<256x256xbf16, #tpu.memory_space<vmem>>, %arg2: memref<256x128xbf16, #tpu.memory_space<vmem>>, %arg3: memref<1x128xf32, #tpu.memory_space<vmem>>, %arg4: memref<256x128xbf16, #tpu.memory_space<vmem>>) attributes {dimension_semantics = [#tpu.dimension_semantics<parallel>], iteration_bounds = array<i64: 4>, scalar_prefetch = 0 : i64, scratch_operands = 0 : i64, tpu.core_type = #tpu.core_type<tc>, window_params = [{transform_indices = @transform_0, window_bounds = array<i64: 256, 256>}, {pipeline_mode = #tpu.pipeline_mode<synchronous>, transform_indices = @transform_1, window_bounds = array<i64: 256, 128>}, {pipeline_mode = #tpu.pipeline_mode<synchronous>, transform_indices = @transform_2, window_bounds = array<i64: 1, 128>}, {transform_indices = @transform_3, window_bounds = array<i64: 256, 128>}]} {
    %c0 = arith.constant 0 : index
    %c0_0 = arith.constant 0 : index
    %0 = vector.load %arg1[%c0, %c0_0] : memref<256x256xbf16, #tpu.memory_space<vmem>>, vector<256x256xbf16>
    %c0_1 = arith.constant 0 : index
    %c0_2 = arith.constant 0 : index
    %1 = vector.load %arg2[%c0_1, %c0_2] : memref<256x128xbf16, #tpu.memory_space<vmem>>, vector<256x128xbf16>
    %cst = arith.constant dense<0.000000e+00> : vector<256x128xf32>
    %2 = tpu.matmul %0, %1, %cst {dimension_numbers = #tpu.dot_dimension_numbers<[1], [0], [0], [1], [0, 0, 1, 1], [], []>} : vector<256x256xbf16>, vector<256x128xbf16>, vector<256x128xf32> -> vector<256x128xf32>
    %c0_3 = arith.constant 0 : index
    %c0_4 = arith.constant 0 : index
    %3 = vector.load %arg3[%c0_3, %c0_4] : memref<1x128xf32, #tpu.memory_space<vmem>>, vector<1x128xf32>
    %4 = vector.broadcast %3 : vector<1x128xf32> to vector<256x128xf32>
    %5 = arith.addf %2, %4 : vector<256x128xf32>
    %cst_5 = arith.constant 0.000000e+00 : f32
    %6 = vector.broadcast %cst_5 : f32 to vector<256x128xf32>
    %7 = arith.maximumf %5, %6 : vector<256x128xf32>
    %8 = arith.truncf %7 : vector<256x128xf32> to vector<256x128xbf16>
    %c0_6 = arith.constant 0 : index
    %c0_7 = arith.constant 0 : index
    %9 = vector.load %arg4[%c0_6, %c0_7] : memref<256x128xbf16, #tpu.memory_space<vmem>>, vector<256x128xbf16>
    tpu.vector_store %arg4[%c0_6, %c0_7], %8 {strides = array<i32>} : memref<256x128xbf16, #tpu.memory_space<vmem>>, vector<256x128xbf16>,
    return
  }
  func.func @transform_0(%arg0: i32) -> (i32, i32) {
    %c0_i32 = arith.constant 0 : i32
    %c0_i32_0 = arith.constant 0 : i32
    return %arg0, %c0_i32 : i32, i32
  }
  func.func @transform_1(%arg0: i32) -> (i32, i32) {
    %c0_i32 = arith.constant 0 : i32
    %c0_i32_0 = arith.constant 0 : i32
    %c0_i32_1 = arith.constant 0 : i32
    return %c0_i32, %c0_i32_0 : i32, i32
  }
  func.func @transform_2(%arg0: i32) -> (i32, i32) {
    %c0_i32 = arith.constant 0 : i32
    %c0_i32_0 = arith.constant 0 : i32
    %c0_i32_1 = arith.constant 0 : i32
    return %c0_i32, %c0_i32_0 : i32, i32
  }
  func.func @transform_3(%arg0: i32) -> (i32, i32) {
    %c0_i32 = arith.constant 0 : i32
    %c0_i32_0 = arith.constant 0 : i32
    return %arg0, %c0_i32 : i32, i32
  }
}

module attributes {stable_mosaic.version = 11 : i64} {
  func.func @_matmul_bias_kernel(%arg0: i32, %arg1: memref<168x512xbf16, #tpu.memory_space<vmem>>, %arg2: memref<512x128xbf16, #tpu.memory_space<vmem>>, %arg3: memref<1x128xf32, #tpu.memory_space<vmem>>, %arg4: memref<168x128xbf16, #tpu.memory_space<vmem>>) attributes {dimension_semantics = [#tpu.dimension_semantics<parallel>], iteration_bounds = array<i64: 1>, scalar_prefetch = 0 : i64, scratch_operands = 0 : i64, tpu.core_type = #tpu.core_type<tc>, window_params = [{transform_indices = @transform_0, window_bounds = array<i64: 168, 512>}, {pipeline_mode = #tpu.pipeline_mode<synchronous>, transform_indices = @transform_1, window_bounds = array<i64: 512, 128>}, {pipeline_mode = #tpu.pipeline_mode<synchronous>, transform_indices = @transform_2, window_bounds = array<i64: 1, 128>}, {transform_indices = @transform_3, window_bounds = array<i64: 168, 128>}]} {
    %c0 = arith.constant 0 : index
    %c0_0 = arith.constant 0 : index
    %0 = vector.load %arg1[%c0, %c0_0] : memref<168x512xbf16, #tpu.memory_space<vmem>>, vector<168x512xbf16>
    %c0_1 = arith.constant 0 : index
    %c0_2 = arith.constant 0 : index
    %1 = vector.load %arg2[%c0_1, %c0_2] : memref<512x128xbf16, #tpu.memory_space<vmem>>, vector<512x128xbf16>
    %cst = arith.constant dense<0.000000e+00> : vector<168x128xf32>
    %2 = tpu.matmul %0, %1, %cst {dimension_numbers = #tpu.dot_dimension_numbers<[1], [0], [0], [1], [0, 0, 1, 1], [], []>} : vector<168x512xbf16>, vector<512x128xbf16>, vector<168x128xf32> -> vector<168x128xf32>
    %c0_3 = arith.constant 0 : index
    %c0_4 = arith.constant 0 : index
    %3 = vector.load %arg3[%c0_3, %c0_4] : memref<1x128xf32, #tpu.memory_space<vmem>>, vector<1x128xf32>
    %4 = vector.broadcast %3 : vector<1x128xf32> to vector<168x128xf32>
    %5 = arith.addf %2, %4 : vector<168x128xf32>
    %cst_5 = arith.constant 0.000000e+00 : f32
    %6 = vector.broadcast %cst_5 : f32 to vector<168x128xf32>
    %7 = arith.maximumf %5, %6 : vector<168x128xf32>
    %8 = arith.truncf %7 : vector<168x128xf32> to vector<168x128xbf16>
    %c0_6 = arith.constant 0 : index
    %c0_7 = arith.constant 0 : index
    %9 = vector.load %arg4[%c0_6, %c0_7] : memref<168x128xbf16, #tpu.memory_space<vmem>>, vector<168x128xbf16>
    tpu.vector_store %arg4[%c0_6, %c0_7], %8 {strides = array<i32>} : memref<168x128xbf16, #tpu.memory_space<vmem>>, vector<168x128xbf16>,
    return
  }
  func.func @transform_0(%arg0: i32) -> (i32, i32) {
    %c0_i32 = arith.constant 0 : i32
    %c0_i32_0 = arith.constant 0 : i32
    return %arg0, %c0_i32 : i32, i32
  }
  func.func @transform_1(%arg0: i32) -> (i32, i32) {
    %c0_i32 = arith.constant 0 : i32
    %c0_i32_0 = arith.constant 0 : i32
    %c0_i32_1 = arith.constant 0 : i32
    return %c0_i32, %c0_i32_0 : i32, i32
  }
  func.func @transform_2(%arg0: i32) -> (i32, i32) {
    %c0_i32 = arith.constant 0 : i32
    %c0_i32_0 = arith.constant 0 : i32
    %c0_i32_1 = arith.constant 0 : i32
    return %c0_i32, %c0_i32_0 : i32, i32
  }
  func.func @transform_3(%arg0: i32) -> (i32, i32) {
    %c0_i32 = arith.constant 0 : i32
    %c0_i32_0 = arith.constant 0 : i32
    return %arg0, %c0_i32 : i32, i32
  }
}

module attributes {stable_mosaic.version = 11 : i64} {
  func.func @_matmul_bias_kernel(%arg0: i32, %arg1: memref<104x576xbf16, #tpu.memory_space<vmem>>, %arg2: memref<576x128xbf16, #tpu.memory_space<vmem>>, %arg3: memref<1x128xf32, #tpu.memory_space<vmem>>, %arg4: memref<104x128xbf16, #tpu.memory_space<vmem>>) attributes {dimension_semantics = [#tpu.dimension_semantics<parallel>], iteration_bounds = array<i64: 1>, scalar_prefetch = 0 : i64, scratch_operands = 0 : i64, tpu.core_type = #tpu.core_type<tc>, window_params = [{transform_indices = @transform_0, window_bounds = array<i64: 104, 576>}, {pipeline_mode = #tpu.pipeline_mode<synchronous>, transform_indices = @transform_1, window_bounds = array<i64: 576, 128>}, {pipeline_mode = #tpu.pipeline_mode<synchronous>, transform_indices = @transform_2, window_bounds = array<i64: 1, 128>}, {transform_indices = @transform_3, window_bounds = array<i64: 104, 128>}]} {
    %c0 = arith.constant 0 : index
    %c0_0 = arith.constant 0 : index
    %0 = vector.load %arg1[%c0, %c0_0] : memref<104x576xbf16, #tpu.memory_space<vmem>>, vector<104x576xbf16>
    %c0_1 = arith.constant 0 : index
    %c0_2 = arith.constant 0 : index
    %1 = vector.load %arg2[%c0_1, %c0_2] : memref<576x128xbf16, #tpu.memory_space<vmem>>, vector<576x128xbf16>
    %cst = arith.constant dense<0.000000e+00> : vector<104x128xf32>
    %2 = tpu.matmul %0, %1, %cst {dimension_numbers = #tpu.dot_dimension_numbers<[1], [0], [0], [1], [0, 0, 1, 1], [], []>} : vector<104x576xbf16>, vector<576x128xbf16>, vector<104x128xf32> -> vector<104x128xf32>
    %c0_3 = arith.constant 0 : index
    %c0_4 = arith.constant 0 : index
    %3 = vector.load %arg3[%c0_3, %c0_4] : memref<1x128xf32, #tpu.memory_space<vmem>>, vector<1x128xf32>
    %4 = vector.broadcast %3 : vector<1x128xf32> to vector<104x128xf32>
    %5 = arith.addf %2, %4 : vector<104x128xf32>
    %cst_5 = arith.constant 0.000000e+00 : f32
    %6 = vector.broadcast %cst_5 : f32 to vector<104x128xf32>
    %7 = arith.maximumf %5, %6 : vector<104x128xf32>
    %8 = arith.truncf %7 : vector<104x128xf32> to vector<104x128xbf16>
    %c0_6 = arith.constant 0 : index
    %c0_7 = arith.constant 0 : index
    %9 = vector.load %arg4[%c0_6, %c0_7] : memref<104x128xbf16, #tpu.memory_space<vmem>>, vector<104x128xbf16>
    tpu.vector_store %arg4[%c0_6, %c0_7], %8 {strides = array<i32>} : memref<104x128xbf16, #tpu.memory_space<vmem>>, vector<104x128xbf16>,
    return
  }
  func.func @transform_0(%arg0: i32) -> (i32, i32) {
    %c0_i32 = arith.constant 0 : i32
    %c0_i32_0 = arith.constant 0 : i32
    return %arg0, %c0_i32 : i32, i32
  }
  func.func @transform_1(%arg0: i32) -> (i32, i32) {
    %c0_i32 = arith.constant 0 : i32
    %c0_i32_0 = arith.constant 0 : i32
    %c0_i32_1 = arith.constant 0 : i32
    return %c0_i32, %c0_i32_0 : i32, i32
  }
  func.func @transform_2(%arg0: i32) -> (i32, i32) {
    %c0_i32 = arith.constant 0 : i32
    %c0_i32_0 = arith.constant 0 : i32
    %c0_i32_1 = arith.constant 0 : i32
    return %c0_i32, %c0_i32_0 : i32, i32
  }
  func.func @transform_3(%arg0: i32) -> (i32, i32) {
    %c0_i32 = arith.constant 0 : i32
    %c0_i32_0 = arith.constant 0 : i32
    return %arg0, %c0_i32 : i32, i32
  }
}

module attributes {stable_mosaic.version = 11 : i64} {
  func.func @_head_kernel(%arg0: i32, %arg1: memref<8x6272xbf16, #tpu.memory_space<vmem>>, %arg2: memref<6272x128xbf16, #tpu.memory_space<vmem>>, %arg3: memref<1x128xf32, #tpu.memory_space<vmem>>, %arg4: memref<128x128xf32, #tpu.memory_space<vmem>>, %arg5: memref<1x128xf32, #tpu.memory_space<vmem>>, %arg6: memref<8x128xf32, #tpu.memory_space<vmem>>) attributes {dimension_semantics = [#tpu.dimension_semantics<parallel>], iteration_bounds = array<i64: 1>, scalar_prefetch = 0 : i64, scratch_operands = 0 : i64, tpu.core_type = #tpu.core_type<tc>, window_params = [{transform_indices = @transform_0, window_bounds = array<i64: 8, 6272>}, {pipeline_mode = #tpu.pipeline_mode<synchronous>, transform_indices = @transform_1, window_bounds = array<i64: 6272, 128>}, {pipeline_mode = #tpu.pipeline_mode<synchronous>, transform_indices = @transform_2, window_bounds = array<i64: 1, 128>}, {pipeline_mode = #tpu.pipeline_mode<synchronous>, transform_indices = @transform_3, window_bounds = array<i64: 128, 128>}, {pipeline_mode = #tpu.pipeline_mode<synchronous>, transform_indices = @transform_4, window_bounds = array<i64: 1, 128>}, {transform_indices = @transform_5, window_bounds = array<i64: 8, 128>}]} {
    %c0 = arith.constant 0 : index
    %c0_0 = arith.constant 0 : index
    %0 = vector.load %arg1[%c0, %c0_0] : memref<8x6272xbf16, #tpu.memory_space<vmem>>, vector<8x6272xbf16>
    %c0_1 = arith.constant 0 : index
    %c0_2 = arith.constant 0 : index
    %1 = vector.load %arg2[%c0_1, %c0_2] : memref<6272x128xbf16, #tpu.memory_space<vmem>>, vector<6272x128xbf16>
    %cst = arith.constant dense<0.000000e+00> : vector<8x128xf32>
    %2 = tpu.matmul %0, %1, %cst {dimension_numbers = #tpu.dot_dimension_numbers<[1], [0], [0], [1], [0, 0, 1, 1], [], []>} : vector<8x6272xbf16>, vector<6272x128xbf16>, vector<8x128xf32> -> vector<8x128xf32>
    %c0_3 = arith.constant 0 : index
    %c0_4 = arith.constant 0 : index
    %3 = vector.load %arg3[%c0_3, %c0_4] : memref<1x128xf32, #tpu.memory_space<vmem>>, vector<1x128xf32>
    %4 = vector.broadcast %3 : vector<1x128xf32> to vector<8x128xf32>
    %5 = arith.addf %2, %4 : vector<8x128xf32>
    %cst_5 = arith.constant 0.000000e+00 : f32
    %6 = vector.broadcast %cst_5 : f32 to vector<8x128xf32>
    %7 = arith.maximumf %5, %6 : vector<8x128xf32>
    %c0_6 = arith.constant 0 : index
    %c0_7 = arith.constant 0 : index
    %8 = vector.load %arg4[%c0_6, %c0_7] : memref<128x128xf32, #tpu.memory_space<vmem>>, vector<128x128xf32>
    %cst_8 = arith.constant dense<0.000000e+00> : vector<8x128xf32>
    %9 = tpu.matmul %7, %8, %cst_8 {dimension_numbers = #tpu.dot_dimension_numbers<[1], [0], [0], [1], [0, 0, 1, 1], [], []>} : vector<8x128xf32>, vector<128x128xf32>, vector<8x128xf32> -> vector<8x128xf32>
    %c0_9 = arith.constant 0 : index
    %c0_10 = arith.constant 0 : index
    %10 = vector.load %arg5[%c0_9, %c0_10] : memref<1x128xf32, #tpu.memory_space<vmem>>, vector<1x128xf32>
    %11 = vector.broadcast %10 : vector<1x128xf32> to vector<8x128xf32>
    %12 = arith.addf %9, %11 : vector<8x128xf32>
    %c0_11 = arith.constant 0 : index
    %c0_12 = arith.constant 0 : index
    %13 = vector.load %arg6[%c0_11, %c0_12] : memref<8x128xf32, #tpu.memory_space<vmem>>, vector<8x128xf32>
    tpu.vector_store %arg6[%c0_11, %c0_12], %12 {strides = array<i32>} : memref<8x128xf32, #tpu.memory_space<vmem>>, vector<8x128xf32>,
    return
  }
  func.func @transform_0(%arg0: i32) -> (i32, i32) {
    %c0_i32 = arith.constant 0 : i32
    %c0_i32_0 = arith.constant 0 : i32
    return %arg0, %c0_i32 : i32, i32
  }
  func.func @transform_1(%arg0: i32) -> (i32, i32) {
    %c0_i32 = arith.constant 0 : i32
    %c0_i32_0 = arith.constant 0 : i32
    %c0_i32_1 = arith.constant 0 : i32
    return %c0_i32, %c0_i32_0 : i32, i32
  }
  func.func @transform_2(%arg0: i32) -> (i32, i32) {
    %c0_i32 = arith.constant 0 : i32
    %c0_i32_0 = arith.constant 0 : i32
    %c0_i32_1 = arith.constant 0 : i32
    return %c0_i32, %c0_i32_0 : i32, i32
  }
  func.func @transform_3(%arg0: i32) -> (i32, i32) {
    %c0_i32 = arith.constant 0 : i32
    %c0_i32_0 = arith.constant 0 : i32
    %c0_i32_1 = arith.constant 0 : i32
    return %c0_i32, %c0_i32_0 : i32, i32
  }
  func.func @transform_4(%arg0: i32) -> (i32, i32) {
    %c0_i32 = arith.constant 0 : i32
    %c0_i32_0 = arith.constant 0 : i32
    %c0_i32_1 = arith.constant 0 : i32
    return %c0_i32, %c0_i32_0 : i32, i32
  }
  func.func @transform_5(%arg0: i32) -> (i32, i32) {
    %c0_i32 = arith.constant 0 : i32
    %c0_i32_0 = arith.constant 0 : i32
    return %arg0, %c0_i32 : i32, i32
  }
}

</mosaic_0001>

<llo_original>
// kernel: nature_cnn_forward.4
$region0: #{nature_cnn_forward.4}
  #allocation0 [shape = 'u32[]', space=smem, size = 0x4, offset = 0x4, fixed_abs, tag = 'smem constant byte address 0x4 - core index']
  #allocation1 [shape = 'u32[144,128]{1,0:T(1,128)}', space=vmem, size = 0x12000, scoped, tag = 'internal scratch']
  %s0 = inlined_call_operand.vmem [shape: bf16[1024,256], index: 0, kind: input, shape index: {}]
  %s1 = inlined_call_operand.vmem [shape: bf16[256,128], index: 1, kind: input, shape index: {}]
  %s2 = inlined_call_operand.vmem [shape: f32[1,128], index: 2, kind: input, shape index: {}]
  %s3 = inlined_call_operand.vmem [shape: bf16[1024,128], index: 3, kind: output, shape index: {}]
  %s4 = sld [smem:[#allocation0]]
  $region45: #{nature_cnn_forward.4} parent=0
    _
  %s6 = ssub.s32 1, %s4
  %s7 = scalar_select 0, %s6, %s4
  loop: start=0, step=1, limit=6
  $region2: #{nature_cnn_forward.4} parent=0 // loop_pre_header
    _
  $region3: #{nature_cnn_forward.4} parent=0 // loop_header
    %s9 = sphi 0, %s13
    %p10 = scmp.ge.s32.totalorder %s9, 6
    %s19 = sphi 0, %s21
    %s22 = sphi 0, %s19
    %s23 = sphi 0, %s22
    %s39 = sphi 0, %s23
    %s43 = sphi 0, %s43
    %s45 = sphi 0, %s43
    %s46 = sphi 0, %s45
    %s60 = sphi 0, %s46
    %s64 = sphi 0, %s64
    %s66 = sphi 0, %s64
    %s67 = sphi 0, %s66
    %s81 = sphi 0, %s67
    %s87 = sphi 0, %s89
    %s90 = sphi 0, %s87
    %s91 = sphi 0, %s90
    %s107 = sphi 0, %s91
  $region4: #{nature_cnn_forward.4} parent=0 // loop_header_branch
    %12 = sbr.rel (%p10) target = $region8
  $region5: #{nature_cnn_forward.4} parent=0 // loop_body
    %s14 = ssub.s32 %s9, 1
    %s15 = ssub.s32 %s9, 2
    %s16 = sadd.s32 %s9, 1
    %s17 = ssub.s32 %s9, %s16
    %p18 = scmp.eq.s32.totalorder %s17, 0
    %s20 = sadd.s32 %s19, 1
    %s21 = scalar_select %p18, %s19, %s20
    %p24 = pneg %p18
    %p25 = scmp.eq.s32.totalorder %s9, 3
    %p26 = por %p24, %p25
    %p27 = scmp.ne.s32.totalorder %s19, %s22
    %p28 = scmp.eq.s32.totalorder %s9, 0
    %p29 = por %p27, %p28
    %p30 = scmp.ne.s32.totalorder %s19, %s22
    %p31 = scmp.eq.s32.totalorder %s14, 3
    %p32 = por %p30, %p31
    %p33 = scmp.ne.s32.totalorder %s22, %s23
    %p34 = scmp.eq.s32.totalorder %s14, 0
    %p35 = por %p33, %p34
    %p36 = scmp.ne.s32.totalorder %s22, %s23
    %p37 = scmp.eq.s32.totalorder %s15, 3
    %p38 = por %p36, %p37
    %p40 = scmp.ne.s32.totalorder %s23, %s39
    %p41 = scmp.eq.s32.totalorder %s15, 0
    %p42 = por %p40, %p41
    %s44 = sadd.s32 %s43, 1
    %p47 = scmp.eq.s32.totalorder %s9, 3
    %p48 = scmp.ne.s32.totalorder %s43, %s45
    %p49 = scmp.eq.s32.totalorder %s9, 0
    %p50 = por %p48, %p49
    %p51 = scmp.ne.s32.totalorder %s43, %s45
    %p52 = scmp.eq.s32.totalorder %s14, 3
    %p53 = por %p51, %p52
    %p54 = scmp.ne.s32.totalorder %s45, %s46
    %p55 = scmp.eq.s32.totalorder %s14, 0
    %p56 = por %p54, %p55
    %p57 = scmp.ne.s32.totalorder %s45, %s46
    %p58 = scmp.eq.s32.totalorder %s15, 3
    %p59 = por %p57, %p58
    %p61 = scmp.ne.s32.totalorder %s46, %s60
    %p62 = scmp.eq.s32.totalorder %s15, 0
    %p63 = por %p61, %p62
    %s65 = sadd.s32 %s64, 1
    %p68 = scmp.eq.s32.totalorder %s9, 3
    %p69 = scmp.ne.s32.totalorder %s64, %s66
    %p70 = scmp.eq.s32.totalorder %s9, 0
    %p71 = por %p69, %p70
    %p72 = scmp.ne.s32.totalorder %s64, %s66
    %p73 = scmp.eq.s32.totalorder %s14, 3
    %p74 = por %p72, %p73
    %p75 = scmp.ne.s32.totalorder %s66, %s67
    %p76 = scmp.eq.s32.totalorder %s14, 0
    %p77 = por %p75, %p76
    %p78 = scmp.ne.s32.totalorder %s66, %s67
    %p79 = scmp.eq.s32.totalorder %s15, 3
    %p80 = por %p78, %p79
    %p82 = scmp.ne.s32.totalorder %s67, %s81
    %p83 = scmp.eq.s32.totalorder %s15, 0
    %p84 = por %p82, %p83
    %s85 = ssub.s32 %s9, %s16
    %p86 = scmp.eq.s32.totalorder %s85, 0
    %s88 = sadd.s32 %s87, 1
    %s89 = scalar_select %p86, %s87, %s88
    %p92 = pneg %p86
    %p93 = scmp.eq.s32.totalorder %s9, 3
    %p94 = por %p92, %p93
    %p95 = scmp.ne.s32.totalorder %s87, %s90
    %p96 = scmp.eq.s32.totalorder %s9, 0
    %p97 = por %p95, %p96
    %p98 = scmp.ne.s32.totalorder %s87, %s90
    %p99 = scmp.eq.s32.totalorder %s14, 3
    %p100 = por %p98, %p99
    %p101 = scmp.ne.s32.totalorder %s90, %s91
    %p102 = scmp.eq.s32.totalorder %s14, 0
    %p103 = por %p101, %p102
    %p104 = scmp.ne.s32.totalorder %s90, %s91
    %p105 = scmp.eq.s32.totalorder %s15, 3
    %p106 = por %p104, %p105
    %p108 = scmp.ne.s32.totalorder %s91, %s107
    %p109 = scmp.eq.s32.totalorder %s15, 0
    %p110 = por %p108, %p109
    %p111 = scmp.le.s32.totalorder 1, %s9
    %p112 = scmp.lt.s32.totalorder %s9, 5
    %p113 = pnand %p111, %p112
    %p114 = pneg %p113
    // Predicated region
    $region9: #{nature_cnn_forward.4} parent=5 // pred_check
      _
    $region10: #{nature_cnn_forward.4} parent=5 // pred_check_branch
      %116 = sbr.rel (%p113) target = $region12
    $region11: #{nature_cnn_forward.4} parent=5 // pred_region
      %s117 = ssub.s32 %s9, 1
      // Predicated region
      $region13: #{nature_cnn_forward.4} parent=11 // pred_check
        %p118 = pneg %p56
      $region14: #{nature_cnn_forward.4} parent=11 // pred_check_branch
        %120 = sbr.rel (%p118) target = $region16
      $region15: #{nature_cnn_forward.4} parent=11 // pred_region
        _
      $region16: #{nature_cnn_forward.4} parent=11 // pred_fallthru
        _
      // Predicated region
      $region17: #{nature_cnn_forward.4} parent=11 // pred_check
        %p121 = pneg %p77
      $region18: #{nature_cnn_forward.4} parent=11 // pred_check_branch
        %123 = sbr.rel (%p121) target = $region20
      $region19: #{nature_cnn_forward.4} parent=11 // pred_region
        _
      $region20: #{nature_cnn_forward.4} parent=11 // pred_fallthru
        _
    $region12: #{nature_cnn_forward.4} parent=5 // pred_fallthru
      _
    %p124 = scmp.lt.s32.totalorder %s9, 4
    // Predicated region
    $region21: #{nature_cnn_forward.4} parent=5 // pred_check
      %p125 = pneg %p124
    $region22: #{nature_cnn_forward.4} parent=5 // pred_check_branch
      %127 = sbr.rel (%p125) target = $region24
    $region23: #{nature_cnn_forward.4} parent=5 // pred_region
      // Predicated region
      $region25: #{nature_cnn_forward.4} parent=23 // pred_check
        %p128 = pneg %p29
      $region26: #{nature_cnn_forward.4} parent=23 // pred_check_branch
        %130 = sbr.rel (%p128) target = $region28
      $region27: #{nature_cnn_forward.4} parent=23 // pred_region
        %s131 = smul.u32 32, %s9
        %p132 = scmp.lt.s32.totalorder %s131, 127
        %s133 = scalar_select %p132, %s131, 127
        %s134 = smul.addr %s133, 2
        %s135 = smul.addr %s134, 4
        %s136 = scalar_lea.vmem %s0, %s135
        %s137 = smul.u32 32, %s9
      $region28: #{nature_cnn_forward.4} parent=23 // pred_fallthru
        _
    $region24: #{nature_cnn_forward.4} parent=5 // pred_fallthru
      _
    %p138 = scmp.le.s32.totalorder 1, %s9
    %p139 = scmp.lt.s32.totalorder %s9, 5
    %p140 = pnand %p138, %p139
    %p141 = pneg %p140
    // Predicated region
    $region29: #{nature_cnn_forward.4} parent=5 // pred_check
      _
    $region30: #{nature_cnn_forward.4} parent=5 // pred_check_branch
      %143 = sbr.rel (%p140) target = $region32
    $region31: #{nature_cnn_forward.4} parent=5 // pred_region
      %s144 = ssub.s32 %s9, 1
      %s145 = smul.u32 32, %s14
      %p146 = scmp.lt.s32.totalorder %s145, 127
      %s147 = scalar_select %p146, %s145, 127
      %s148 = smul.addr %s147, 2
      %s149 = smul.addr %s148, 4
      %s150 = scalar_lea.vmem %s0, %s149
      %p151 = pneg %p35
      %p152 = pneg %p32
      %p153 = pneg %p56
      %p154 = pneg %p53
      %p155 = pneg %p77
      %p156 = pneg %p74
      %p157 = pneg %p103
      %p158 = pneg %p100
      %s159 = smul.u32 32, %s14
      %p160 = scmp.lt.s32.totalorder %s159, 127
      %s161 = scalar_select %p160, %s159, 127
      %s162 = smul.addr %s161, 4
      %s163 = scalar_lea.vmem %s3, %s162
      %s164 = smul.u32 32, %s14
      %p165 = scmp.lt.s32.totalorder %s164, 127
      %s166 = scalar_select %p165, %s164, 127
      %s167 = smul.addr %s166, 2
      %s168 = smul.addr %s167, 4
      %s169 = scalar_lea.vmem %s0, %s168
      %s170 = smul.u32 32, %s14
      %s171 = smul.u32 32, %s14
      %p172 = scmp.lt.s32.totalorder %s171, 127
      %s173 = scalar_select %p172, %s171, 127
      %s174 = smul.addr %s173, 4
      %s175 = scalar_lea.vmem %s3, %s174
      %s176 = smul.u32 32, %s14
      %v178 = vld [vmem:[%s169] sm:$0xff]
      %v179 = vld [vmem:[%s169 + $0x8] sm:$0xff]
      %v180 = vld [vmem:[%s169 + $0x10] sm:$0xff]
      %v181 = vld [vmem:[%s169 + $0x18] sm:$0xff]
      %v182 = vld [vmem:[%s169 + $0x20] sm:$0xff]
      %v183 = vld [vmem:[%s169 + $0x28] sm:$0xff]
      %v184 = vld [vmem:[%s169 + $0x30] sm:$0xff]
      %v185 = vld [vmem:[%s169 + $0x38] sm:$0xff]
      %v186 = vld [vmem:[%s169 + $0x40] sm:$0xff]
      %v187 = vld [vmem:[%s169 + $0x48] sm:$0xff]
      %v188 = vld [vmem:[%s169 + $0x50] sm:$0xff]
      %v189 = vld [vmem:[%s169 + $0x58] sm:$0xff]
      %v190 = vld [vmem:[%s169 + $0x60] sm:$0xff]
      %v191 = vld [vmem:[%s169 + $0x68] sm:$0xff]
      %v192 = vld [vmem:[%s169 + $0x70] sm:$0xff]
      %v193 = vld [vmem:[%s169 + $0x78] sm:$0xff]
      %v194 = vld [vmem:[%s169 + $0x80] sm:$0xff]
      %v195 = vld [vmem:[%s169 + $0x88] sm:$0xff]
      %v196 = vld [vmem:[%s169 + $0x90] sm:$0xff]
      %v197 = vld [vmem:[%s169 + $0x98] sm:$0xff]
      %v198 = vld [vmem:[%s169 + $0xa0] sm:$0xff]
      %v199 = vld [vmem:[%s169 + $0xa8] sm:$0xff]
      %v200 = vld [vmem:[%s169 + $0xb0] sm:$0xff]
      %v201 = vld [vmem:[%s169 + $0xb8] sm:$0xff]
      %v202 = vld [vmem:[%s169 + $0xc0] sm:$0xff]
      %v203 = vld [vmem:[%s169 + $0xc8] sm:$0xff]
      %v204 = vld [vmem:[%s169 + $0xd0] sm:$0xff]
      %v205 = vld [vmem:[%s169 + $0xd8] sm:$0xff]
      %v206 = vld [vmem:[%s169 + $0xe0] sm:$0xff]
      %v207 = vld [vmem:[%s169 + $0xe8] sm:$0xff]
      %v208 = vld [vmem:[%s169 + $0xf0] sm:$0xff]
      %v209 = vld [vmem:[%s169 + $0xf8] sm:$0xff]
      %v210 = vld [vmem:[%s1] sm:$0xf]
      %v211 = vld [vmem:[%s1 + $0x4] sm:$0xf]
      %v212 = vld [vmem:[%s1 + $0x8] sm:$0xf]
      %v213 = vld [vmem:[%s1 + $0xc] sm:$0xf]
      %v214 = vld [vmem:[%s1 + $0x10] sm:$0xf]
      %v215 = vld [vmem:[%s1 + $0x14] sm:$0xf]
      %v216 = vld [vmem:[%s1 + $0x18] sm:$0xf]
      %v217 = vld [vmem:[%s1 + $0x1c] sm:$0xf]
      %v218 = vld [vmem:[%s1 + $0x20] sm:$0xf]
      %v219 = vld [vmem:[%s1 + $0x24] sm:$0xf]
      %v220 = vld [vmem:[%s1 + $0x28] sm:$0xf]
      %v221 = vld [vmem:[%s1 + $0x2c] sm:$0xf]
      %v222 = vld [vmem:[%s1 + $0x30] sm:$0xf]
      %v223 = vld [vmem:[%s1 + $0x34] sm:$0xf]
      %v224 = vld [vmem:[%s1 + $0x38] sm:$0xf]
      %v225 = vld [vmem:[%s1 + $0x3c] sm:$0xf]
      %v226 = vld [vmem:[%s1 + $0x40] sm:$0xf]
      %v227 = vld [vmem:[%s1 + $0x44] sm:$0xf]
      %v228 = vld [vmem:[%s1 + $0x48] sm:$0xf]
      %v229 = vld [vmem:[%s1 + $0x4c] sm:$0xf]
      %v230 = vld [vmem:[%s1 + $0x50] sm:$0xf]
      %v231 = vld [vmem:[%s1 + $0x54] sm:$0xf]
      %v232 = vld [vmem:[%s1 + $0x58] sm:$0xf]
      %v233 = vld [vmem:[%s1 + $0x5c] sm:$0xf]
      %v234 = vld [vmem:[%s1 + $0x60] sm:$0xf]
      %v235 = vld [vmem:[%s1 + $0x64] sm:$0xf]
      %v236 = vld [vmem:[%s1 + $0x68] sm:$0xf]
      %v237 = vld [vmem:[%s1 + $0x6c] sm:$0xf]
      %v238 = vld [vmem:[%s1 + $0x70] sm:$0xf]
      %v239 = vld [vmem:[%s1 + $0x74] sm:$0xf]
      %v240 = vld [vmem:[%s1 + $0x78] sm:$0xf]
      %v241 = vld [vmem:[%s1 + $0x7c] sm:$0xf]
      %v242 = vld [vmem:[%s2] sm:$0x1]
      %v244 = vlaneseq
      %v245 = vshrl.u32 %v244, 7
      %v246 = vsub.s32 0, %v245
      %v247 = vrot.slane %v242, %v246
      %v281 = vunpack.c.l.b16 %v178
      %v282 = vunpack.c.h.b16 %v178
      %v283 = vunpack.c.l.b16 %v179
      %v284 = vunpack.c.h.b16 %v179
      %v285 = vunpack.c.l.b16 %v180
      %v286 = vunpack.c.h.b16 %v180
      %v287 = vunpack.c.l.b16 %v181
      %v288 = vunpack.c.h.b16 %v181
      %v289 = vunpack.c.l.b16 %v182
      %v290 = vunpack.c.h.b16 %v182
      %v291 = vunpack.c.l.b16 %v183
      %v292 = vunpack.c.h.b16 %v183
      %v293 = vunpack.c.l.b16 %v184
      %v294 = vunpack.c.h.b16 %v184
      %v295 = vunpack.c.l.b16 %v185
      %v296 = vunpack.c.h.b16 %v185
      %v297 = vunpack.c.l.b16 %v186
      %v298 = vunpack.c.h.b16 %v186
      %v299 = vunpack.c.l.b16 %v187
      %v300 = vunpack.c.h.b16 %v187
      %v301 = vunpack.c.l.b16 %v188
      %v302 = vunpack.c.h.b16 %v188
      %v303 = vunpack.c.l.b16 %v189
      %v304 = vunpack.c.h.b16 %v189
      %v305 = vunpack.c.l.b16 %v190
      %v306 = vunpack.c.h.b16 %v190
      %v307 = vunpack.c.l.b16 %v191
      %v308 = vunpack.c.h.b16 %v191
      %v309 = vunpack.c.l.b16 %v192
      %v310 = vunpack.c.h.b16 %v192
      %v311 = vunpack.c.l.b16 %v193
      %v312 = vunpack.c.h.b16 %v193
      %v313 = vunpack.c.l.b16 %v194
      %v314 = vunpack.c.h.b16 %v194
      %v315 = vunpack.c.l.b16 %v195
      %v316 = vunpack.c.h.b16 %v195
      %v317 = vunpack.c.l.b16 %v196
      %v318 = vunpack.c.h.b16 %v196
      %v319 = vunpack.c.l.b16 %v197
      %v320 = vunpack.c.h.b16 %v197
      %v321 = vunpack.c.l.b16 %v198
      %v322 = vunpack.c.h.b16 %v198
      %v323 = vunpack.c.l.b16 %v199
      %v324 = vunpack.c.h.b16 %v199
      %v325 = vunpack.c.l.b16 %v200
      %v326 = vunpack.c.h.b16 %v200
      %v327 = vunpack.c.l.b16 %v201
      %v328 = vunpack.c.h.b16 %v201
      %v329 = vunpack.c.l.b16 %v202
      %v330 = vunpack.c.h.b16 %v202
      %v331 = vunpack.c.l.b16 %v203
      %v332 = vunpack.c.h.b16 %v203
      %v333 = vunpack.c.l.b16 %v204
      %v334 = vunpack.c.h.b16 %v204
      %v335 = vunpack.c.l.b16 %v205
      %v336 = vunpack.c.h.b16 %v205
      %v337 = vunpack.c.l.b16 %v206
      %v338 = vunpack.c.h.b16 %v206
      %v339 = vunpack.c.l.b16 %v207
      %v340 = vunpack.c.h.b16 %v207
      %v341 = vunpack.c.l.b16 %v208
      %v342 = vunpack.c.h.b16 %v208
      %v343 = vunpack.c.l.b16 %v209
      %v344 = vunpack.c.h.b16 %v209
      %v345 = vpack.c.b16 %v283, %v281
      %v346 = vpack.c.b16 %v284, %v282
      %v347 = vpack.c.b16 %v287, %v285
      %v348 = vpack.c.b16 %v288, %v286
      %v349 = vpack.c.b16 %v291, %v289
      %v350 = vpack.c.b16 %v292, %v290
      %v351 = vpack.c.b16 %v295, %v293
      %v352 = vpack.c.b16 %v296, %v294
      %v353 = vpack.c.b16 %v299, %v297
      %v354 = vpack.c.b16 %v300, %v298
      %v355 = vpack.c.b16 %v303, %v301
      %v356 = vpack.c.b16 %v304, %v302
      %v357 = vpack.c.b16 %v307, %v305
      %v358 = vpack.c.b16 %v308, %v306
      %v359 = vpack.c.b16 %v311, %v309
      %v360 = vpack.c.b16 %v312, %v310
      %v361 = vpack.c.b16 %v315, %v313
      %v362 = vpack.c.b16 %v316, %v314
      %v363 = vpack.c.b16 %v319, %v317
      %v364 = vpack.c.b16 %v320, %v318
      %v365 = vpack.c.b16 %v323, %v321
      %v366 = vpack.c.b16 %v324, %v322
      %v367 = vpack.c.b16 %v327, %v325
      %v368 = vpack.c.b16 %v328, %v326
      %v369 = vpack.c.b16 %v331, %v329
      %v370 = vpack.c.b16 %v332, %v330
      %v371 = vpack.c.b16 %v335, %v333
      %v372 = vpack.c.b16 %v336, %v334
      %v373 = vpack.c.b16 %v339, %v337
      %v374 = vpack.c.b16 %v340, %v338
      %v375 = vpack.c.b16 %v343, %v341
      %v376 = vpack.c.b16 %v344, %v342
      %v441 = vunpack.c.l.b16 %v210
      %v442 = vunpack.c.l.b16 %v211
      %v443 = vunpack.c.l.b16 %v212
      %v444 = vunpack.c.l.b16 %v213
      %v445 = vunpack.c.l.b16 %v214
      %v446 = vunpack.c.l.b16 %v215
      %v447 = vunpack.c.l.b16 %v216
      %v448 = vunpack.c.l.b16 %v217
      %v449 = vunpack.c.l.b16 %v218
      %v450 = vunpack.c.l.b16 %v219
      %v451 = vunpack.c.l.b16 %v220
      %v452 = vunpack.c.l.b16 %v221
      %v453 = vunpack.c.l.b16 %v222
      %v454 = vunpack.c.l.b16 %v223
      %v455 = vunpack.c.l.b16 %v224
      %v456 = vunpack.c.l.b16 %v225
      %v457 = vunpack.c.l.b16 %v226
      %v458 = vunpack.c.l.b16 %v227
      %v459 = vunpack.c.l.b16 %v228
      %v460 = vunpack.c.l.b16 %v229
      %v461 = vunpack.c.l.b16 %v230
      %v462 = vunpack.c.l.b16 %v231
      %v463 = vunpack.c.l.b16 %v232
      %v464 = vunpack.c.l.b16 %v233
      %v465 = vunpack.c.l.b16 %v234
      %v466 = vunpack.c.l.b16 %v235
      %v467 = vunpack.c.l.b16 %v236
      %v468 = vunpack.c.l.b16 %v237
      %v469 = vunpack.c.l.b16 %v238
      %v470 = vunpack.c.l.b16 %v239
      %v471 = vunpack.c.l.b16 %v240
      %v472 = vunpack.c.l.b16 %v241
      %v473 = vpack.c.b16 %v442, %v441
      %v474 = vpack.c.b16 %v444, %v443
      %v475 = vpack.c.b16 %v446, %v445
      %v476 = vpack.c.b16 %v448, %v447
      %v477 = vpack.c.b16 %v450, %v449
      %v478 = vpack.c.b16 %v452, %v451
      %v479 = vpack.c.b16 %v454, %v453
      %v480 = vpack.c.b16 %v456, %v455
      %v481 = vpack.c.b16 %v458, %v457
      %v482 = vpack.c.b16 %v460, %v459
      %v483 = vpack.c.b16 %v462, %v461
      %v484 = vpack.c.b16 %v464, %v463
      %v485 = vpack.c.b16 %v466, %v465
      %v486 = vpack.c.b16 %v468, %v467
      %v487 = vpack.c.b16 %v470, %v469
      %v488 = vpack.c.b16 %v472, %v471
      %505 = vmatprep.subr.bf16.mxu0 0
      %506 = vmatpush1.bf16.msra.mxu0 %v473
      %507 = vmatprep.subr.bf16.mxu0 0
      %508 = vmatpush1.bf16.msra.mxu0 %v474
      %509 = vmatprep.subr.bf16.mxu0 0
      %510 = vmatpush1.bf16.msra.mxu0 %v475
      %511 = vmatprep.subr.bf16.mxu0 0
      %512 = vmatpush1.bf16.msra.mxu0 %v476
      %513 = vmatprep.subr.bf16.mxu0 0
      %514 = vmatpush1.bf16.msra.mxu0 %v477
      %515 = vmatprep.subr.bf16.mxu0 0
      %516 = vmatpush1.bf16.msra.mxu0 %v478
      %517 = vmatprep.subr.bf16.mxu0 0
      %518 = vmatpush1.bf16.msra.mxu0 %v479
      %519 = vmatprep.subr.bf16.mxu0 0
      %520 = vmatpush1.bf16.msra.mxu0 %v480
      %521 = vmatprep.subr.bf16.mxu0 0
      %522 = vmatpush1.bf16.msra.mxu0 %v481
      %523 = vmatprep.subr.bf16.mxu0 0
      %524 = vmatpush1.bf16.msra.mxu0 %v482
      %525 = vmatprep.subr.bf16.mxu0 0
      %526 = vmatpush1.bf16.msra.mxu0 %v483
      %527 = vmatprep.subr.bf16.mxu0 0
      %528 = vmatpush1.bf16.msra.mxu0 %v484
      %529 = vmatprep.subr.bf16.mxu0 0
      %530 = vmatpush1.bf16.msra.mxu0 %v485
      %531 = vmatprep.subr.bf16.mxu0 0
      %532 = vmatpush1.bf16.msra.mxu0 %v486
      %533 = vmatprep.subr.bf16.mxu0 0
      %534 = vmatpush1.bf16.msra.mxu0 %v487
      %535 = vmatprep.subr.bf16.mxu0 0
      %536 = vmatpush1.bf16.msra.mxu0 %v488
      %537 = vmatprep.mubr.bf16.mxu0 %v346
      %538 = vmatmul.mubr.bf16.gmra.mrb[0].mxu0 %v345
      %v539 = vpop.f32.mrb[0].mxu0
      %v540 = vadd.f32 %v247, %v539
      %v541 = vpop.f32.mrb[0].mxu0
      %v542 = vpop.f32.mrb[0].mxu0
      %v543 = vadd.f32 %v247, %v542
      %v544 = vpop.f32.mrb[0].mxu0
      %545 = vmatprep.mubr.bf16.mxu0 %v348
      %546 = vmatmul.mubr.bf16.gmra.mrb[0].mxu0 %v347
      %v547 = vpop.f32.mrb[0].mxu0
      %v548 = vadd.f32 %v247, %v547
      %v549 = vpop.f32.mrb[0].mxu0
      %v550 = vpop.f32.mrb[0].mxu0
      %v551 = vadd.f32 %v247, %v550
      %v552 = vpop.f32.mrb[0].mxu0
      %553 = vmatprep.mubr.bf16.mxu0 %v350
      %554 = vmatmul.mubr.bf16.gmra.mrb[0].mxu0 %v349
      %v555 = vpop.f32.mrb[0].mxu0
      %v556 = vadd.f32 %v247, %v555
      %v557 = vpop.f32.mrb[0].mxu0
      %v558 = vpop.f32.mrb[0].mxu0
      %v559 = vadd.f32 %v247, %v558
      %v560 = vpop.f32.mrb[0].mxu0
      %561 = vmatprep.mubr.bf16.mxu0 %v352
      %562 = vmatmul.mubr.bf16.gmra.mrb[0].mxu0 %v351
      %v563 = vpop.f32.mrb[0].mxu0
      %v564 = vadd.f32 %v247, %v563
      %v565 = vpop.f32.mrb[0].mxu0
      %v566 = vpop.f32.mrb[0].mxu0
      %v567 = vadd.f32 %v247, %v566
      %v568 = vpop.f32.mrb[0].mxu0
      %569 = vmatprep.mubr.bf16.mxu0 %v354
      %570 = vmatmul.mubr.bf16.gmra.mrb[0].mxu0 %v353
      %v571 = vpop.f32.mrb[0].mxu0
      %v572 = vadd.f32 %v247, %v571
      %v573 = vpop.f32.mrb[0].mxu0
      %v574 = vpop.f32.mrb[0].mxu0
      %v575 = vadd.f32 %v247, %v574
      %v576 = vpop.f32.mrb[0].mxu0
      %577 = vmatprep.mubr.bf16.mxu0 %v356
      %578 = vmatmul.mubr.bf16.gmra.mrb[0].mxu0 %v355
      %v579 = vpop.f32.mrb[0].mxu0
      %v580 = vadd.f32 %v247, %v579
      %v581 = vpop.f32.mrb[0].mxu0
      %v582 = vpop.f32.mrb[0].mxu0
      %v583 = vadd.f32 %v247, %v582
      %v584 = vpop.f32.mrb[0].mxu0
      %585 = vmatprep.mubr.bf16.mxu0 %v358
      %586 = vmatmul.mubr.bf16.gmra.mrb[0].mxu0 %v357
      %v587 = vpop.f32.mrb[0].mxu0
      %v588 = vadd.f32 %v247, %v587
      %v589 = vpop.f32.mrb[0].mxu0
      %v590 = vpop.f32.mrb[0].mxu0
      %v591 = vadd.f32 %v247, %v590
      %v592 = vpop.f32.mrb[0].mxu0
      %593 = vmatprep.mubr.bf16.mxu0 %v360
      %594 = vmatmul.mubr.bf16.gmra.mrb[0].mxu0 %v359
      %v595 = vpop.f32.mrb[0].mxu0
      %v596 = vadd.f32 %v247, %v595
      %v597 = vpop.f32.mrb[0].mxu0
      %v598 = vpop.f32.mrb[0].mxu0
      %v599 = vadd.f32 %v247, %v598
      %v600 = vpop.f32.mrb[0].mxu0
      %601 = vmatprep.mubr.bf16.mxu0 %v362
      %602 = vmatmul.mubr.bf16.gmra.mrb[0].mxu0 %v361
      %v603 = vpop.f32.mrb[0].mxu0
      %v604 = vadd.f32 %v247, %v603
      %v605 = vpop.f32.mrb[0].mxu0
      %v606 = vpop.f32.mrb[0].mxu0
      %v607 = vadd.f32 %v247, %v606
      %v608 = vpop.f32.mrb[0].mxu0
      %609 = vmatprep.mubr.bf16.mxu0 %v364
      %610 = vmatmul.mubr.bf16.gmra.mrb[0].mxu0 %v363
      %v611 = vpop.f32.mrb[0].mxu0
      %v612 = vadd.f32 %v247, %v611
      %v613 = vpop.f32.mrb[0].mxu0
      %v614 = vpop.f32.mrb[0].mxu0
      %v615 = vadd.f32 %v247, %v614
      %v616 = vpop.f32.mrb[0].mxu0
      %617 = vmatprep.mubr.bf16.mxu0 %v366
      %618 = vmatmul.mubr.bf16.gmra.mrb[0].mxu0 %v365
      %v619 = vpop.f32.mrb[0].mxu0
      %v620 = vadd.f32 %v247, %v619
      %v621 = vpop.f32.mrb[0].mxu0
      %v622 = vpop.f32.mrb[0].mxu0
      %v623 = vadd.f32 %v247, %v622
      %v624 = vpop.f32.mrb[0].mxu0
      %625 = vmatprep.mubr.bf16.mxu0 %v368
      %626 = vmatmul.mubr.bf16.gmra.mrb[0].mxu0 %v367
      %v627 = vpop.f32.mrb[0].mxu0
      %v628 = vadd.f32 %v247, %v627
      %v629 = vpop.f32.mrb[0].mxu0
      %v630 = vpop.f32.mrb[0].mxu0
      %v631 = vadd.f32 %v247, %v630
      %v632 = vpop.f32.mrb[0].mxu0
      %633 = vmatprep.mubr.bf16.mxu0 %v370
      %634 = vmatmul.mubr.bf16.gmra.mrb[0].mxu0 %v369
      %v635 = vpop.f32.mrb[0].mxu0
      %v636 = vadd.f32 %v247, %v635
      %v637 = vpop.f32.mrb[0].mxu0
      %v638 = vpop.f32.mrb[0].mxu0
      %v639 = vadd.f32 %v247, %v638
      %v640 = vpop.f32.mrb[0].mxu0
      %641 = vmatprep.mubr.bf16.mxu0 %v372
      %642 = vmatmul.mubr.bf16.gmra.mrb[0].mxu0 %v371
      %v643 = vpop.f32.mrb[0].mxu0
      %v644 = vadd.f32 %v247, %v643
      %v645 = vpop.f32.mrb[0].mxu0
      %v646 = vpop.f32.mrb[0].mxu0
      %v647 = vadd.f32 %v247, %v646
      %v648 = vpop.f32.mrb[0].mxu0
      %649 = vmatprep.mubr.bf16.mxu0 %v374
      %650 = vmatmul.mubr.bf16.gmra.mrb[0].mxu0 %v373
      %v651 = vpop.f32.mrb[0].mxu0
      %v652 = vadd.f32 %v247, %v651
      %v653 = vpop.f32.mrb[0].mxu0
      %v654 = vpop.f32.mrb[0].mxu0
      %v655 = vadd.f32 %v247, %v654
      %v656 = vpop.f32.mrb[0].mxu0
      %657 = vmatprep.mubr.bf16.mxu0 %v376
      %658 = vmatmul.mubr.bf16.gmra.mrb[0].mxu0 %v375
      %v659 = vpop.f32.mrb[0].mxu0
      %v660 = vadd.f32 %v247, %v659
      %v661 = vpop.f32.mrb[0].mxu0
      %v662 = vpop.f32.mrb[0].mxu0
      %v663 = vadd.f32 %v247, %v662
      %v664 = vpop.f32.mrb[0].mxu0
      %665 = vdwg.mxu0
      %v666 = vmax.f32 %v540, 0.0
      %v667 = vmax.f32 %v543, 0.0
      %v668 = vmax.f32 %v548, 0.0
      %v669 = vmax.f32 %v551, 0.0
      %v670 = vmax.f32 %v556, 0.0
      %v671 = vmax.f32 %v559, 0.0
      %v672 = vmax.f32 %v564, 0.0
      %v673 = vmax.f32 %v567, 0.0
      %v674 = vmax.f32 %v572, 0.0
      %v675 = vmax.f32 %v575, 0.0
      %v676 = vmax.f32 %v580, 0.0
      %v677 = vmax.f32 %v583, 0.0
      %v678 = vmax.f32 %v588, 0.0
      %v679 = vmax.f32 %v591, 0.0
      %v680 = vmax.f32 %v596, 0.0
      %v681 = vmax.f32 %v599, 0.0
      %v682 = vmax.f32 %v604, 0.0
      %v683 = vmax.f32 %v607, 0.0
      %v684 = vmax.f32 %v612, 0.0
      %v685 = vmax.f32 %v615, 0.0
      %v686 = vmax.f32 %v620, 0.0
      %v687 = vmax.f32 %v623, 0.0
      %v688 = vmax.f32 %v628, 0.0
      %v689 = vmax.f32 %v631, 0.0
      %v690 = vmax.f32 %v636, 0.0
      %v691 = vmax.f32 %v639, 0.0
      %v692 = vmax.f32 %v644, 0.0
      %v693 = vmax.f32 %v647, 0.0
      %v694 = vmax.f32 %v652, 0.0
      %v695 = vmax.f32 %v655, 0.0
      %v696 = vmax.f32 %v660, 0.0
      %v697 = vmax.f32 %v663, 0.0
      %v698 = vpack.c.bf16 %v667, %v666
      %v699 = vpack.c.bf16 %v669, %v668
      %v700 = vpack.c.bf16 %v671, %v670
      %v701 = vpack.c.bf16 %v673, %v672
      %v702 = vpack.c.bf16 %v675, %v674
      %v703 = vpack.c.bf16 %v677, %v676
      %v704 = vpack.c.bf16 %v679, %v678
      %v705 = vpack.c.bf16 %v681, %v680
      %v706 = vpack.c.bf16 %v683, %v682
      %v707 = vpack.c.bf16 %v685, %v684
      %v708 = vpack.c.bf16 %v687, %v686
      %v709 = vpack.c.bf16 %v689, %v688
      %v710 = vpack.c.bf16 %v691, %v690
      %v711 = vpack.c.bf16 %v693, %v692
      %v712 = vpack.c.bf16 %v695, %v694
      %v713 = vpack.c.bf16 %v697, %v696
      %v730 = vunpack.c.l.b16 %v698
      %v731 = vunpack.c.h.b16 %v698
      %v732 = vunpack.c.l.b16 %v699
      %v733 = vunpack.c.h.b16 %v699
      %v734 = vunpack.c.l.b16 %v700
      %v735 = vunpack.c.h.b16 %v700
      %v736 = vunpack.c.l.b16 %v701
      %v737 = vunpack.c.h.b16 %v701
      %v738 = vunpack.c.l.b16 %v702
      %v739 = vunpack.c.h.b16 %v702
      %v740 = vunpack.c.l.b16 %v703
      %v741 = vunpack.c.h.b16 %v703
      %v742 = vunpack.c.l.b16 %v704
      %v743 = vunpack.c.h.b16 %v704
      %v744 = vunpack.c.l.b16 %v705
      %v745 = vunpack.c.h.b16 %v705
      %v746 = vunpack.c.l.b16 %v706
      %v747 = vunpack.c.h.b16 %v706
      %v748 = vunpack.c.l.b16 %v707
      %v749 = vunpack.c.h.b16 %v707
      %v750 = vunpack.c.l.b16 %v708
      %v751 = vunpack.c.h.b16 %v708
      %v752 = vunpack.c.l.b16 %v709
      %v753 = vunpack.c.h.b16 %v709
      %v754 = vunpack.c.l.b16 %v710
      %v755 = vunpack.c.h.b16 %v710
      %v756 = vunpack.c.l.b16 %v711
      %v757 = vunpack.c.h.b16 %v711
      %v758 = vunpack.c.l.b16 %v712
      %v759 = vunpack.c.h.b16 %v712
      %v760 = vunpack.c.l.b16 %v713
      %v761 = vunpack.c.h.b16 %v713
      %v762 = vpack.c.b16 %v730, %v730
      %v763 = vpack.c.b16 %v731, %v731
      %v764 = vpack.c.b16 %v732, %v732
      %v765 = vpack.c.b16 %v733, %v733
      %v766 = vpack.c.b16 %v734, %v734
      %v767 = vpack.c.b16 %v735, %v735
      %v768 = vpack.c.b16 %v736, %v736
      %v769 = vpack.c.b16 %v737, %v737
      %v770 = vpack.c.b16 %v738, %v738
      %v771 = vpack.c.b16 %v739, %v739
      %v772 = vpack.c.b16 %v740, %v740
      %v773 = vpack.c.b16 %v741, %v741
      %v774 = vpack.c.b16 %v742, %v742
      %v775 = vpack.c.b16 %v743, %v743
      %v776 = vpack.c.b16 %v744, %v744
      %v777 = vpack.c.b16 %v745, %v745
      %v778 = vpack.c.b16 %v746, %v746
      %v779 = vpack.c.b16 %v747, %v747
      %v780 = vpack.c.b16 %v748, %v748
      %v781 = vpack.c.b16 %v749, %v749
      %v782 = vpack.c.b16 %v750, %v750
      %v783 = vpack.c.b16 %v751, %v751
      %v784 = vpack.c.b16 %v752, %v752
      %v785 = vpack.c.b16 %v753, %v753
      %v786 = vpack.c.b16 %v754, %v754
      %v787 = vpack.c.b16 %v755, %v755
      %v788 = vpack.c.b16 %v756, %v756
      %v789 = vpack.c.b16 %v757, %v757
      %v790 = vpack.c.b16 %v758, %v758
      %v791 = vpack.c.b16 %v759, %v759
      %v792 = vpack.c.b16 %v760, %v760
      %v793 = vpack.c.b16 %v761, %v761
      %826 = vst [vmem:[%s175] sm:$0xf] %v762
      %827 = vst [vmem:[%s175 + $0x4] sm:$0xf] %v763
      %828 = vst [vmem:[%s175 + $0x8] sm:$0xf] %v764
      %829 = vst [vmem:[%s175 + $0xc] sm:$0xf] %v765
      %830 = vst [vmem:[%s175 + $0x10] sm:$0xf] %v766
      %831 = vst [vmem:[%s175 + $0x14] sm:$0xf] %v767
      %832 = vst [vmem:[%s175 + $0x18] sm:$0xf] %v768
      %833 = vst [vmem:[%s175 + $0x1c] sm:$0xf] %v769
      %834 = vst [vmem:[%s175 + $0x20] sm:$0xf] %v770
      %835 = vst [vmem:[%s175 + $0x24] sm:$0xf] %v771
      %836 = vst [vmem:[%s175 + $0x28] sm:$0xf] %v772
      %837 = vst [vmem:[%s175 + $0x2c] sm:$0xf] %v773
      %838 = vst [vmem:[%s175 + $0x30] sm:$0xf] %v774
      %839 = vst [vmem:[%s175 + $0x34] sm:$0xf] %v775
      %840 = vst [vmem:[%s175 + $0x38] sm:$0xf] %v776
      %841 = vst [vmem:[%s175 + $0x3c] sm:$0xf] %v777
      %842 = vst [vmem:[%s175 + $0x40] sm:$0xf] %v778
      %843 = vst [vmem:[%s175 + $0x44] sm:$0xf] %v779
      %844 = vst [vmem:[%s175 + $0x48] sm:$0xf] %v780
      %845 = vst [vmem:[%s175 + $0x4c] sm:$0xf] %v781
      %846 = vst [vmem:[%s175 + $0x50] sm:$0xf] %v782
      %847 = vst [vmem:[%s175 + $0x54] sm:$0xf] %v783
      %848 = vst [vmem:[%s175 + $0x58] sm:$0xf] %v784
      %849 = vst [vmem:[%s175 + $0x5c] sm:$0xf] %v785
      %850 = vst [vmem:[%s175 + $0x60] sm:$0xf] %v786
      %851 = vst [vmem:[%s175 + $0x64] sm:$0xf] %v787
      %852 = vst [vmem:[%s175 + $0x68] sm:$0xf] %v788
      %853 = vst [vmem:[%s175 + $0x6c] sm:$0xf] %v789
      %854 = vst [vmem:[%s175 + $0x70] sm:$0xf] %v790
      %855 = vst [vmem:[%s175 + $0x74] sm:$0xf] %v791
      %856 = vst [vmem:[%s175 + $0x78] sm:$0xf] %v792
      %857 = vst [vmem:[%s175 + $0x7c] sm:$0xf] %v793
      %s858 = smul.u32 32, %s14
      %p859 = scmp.lt.s32.totalorder %s858, 127
      %s860 = scalar_select %p859, %s858, 127
      %s861 = smul.addr %s860, 4
      %s862 = scalar_lea.vmem %s3, %s861
      // Predicated region
      $region33: #{nature_cnn_forward.4} parent=31 // pred_check
        %p863 = pneg %p100
      $region34: #{nature_cnn_forward.4} parent=31 // pred_check_branch
        %865 = sbr.rel (%p863) target = $region36
      $region35: #{nature_cnn_forward.4} parent=31 // pred_region
        %s866 = smul.u32 32, %s14
      $region36: #{nature_cnn_forward.4} parent=31 // pred_fallthru
        _
    $region32: #{nature_cnn_forward.4} parent=5 // pred_fallthru
      _
    %p867 = scmp.le.s32.totalorder 2, %s9
    // Predicated region
    $region37: #{nature_cnn_forward.4} parent=5 // pred_check
      %p868 = pneg %p867
    $region38: #{nature_cnn_forward.4} parent=5 // pred_check_branch
      %870 = sbr.rel (%p868) target = $region40
    $region39: #{nature_cnn_forward.4} parent=5 // pred_region
      %s871 = ssub.s32 %s9, 2
      // Predicated region
      $region41: #{nature_cnn_forward.4} parent=39 // pred_check
        %p872 = pneg %p106
      $region42: #{nature_cnn_forward.4} parent=39 // pred_check_branch
        %874 = sbr.rel (%p872) target = $region44
      $region43: #{nature_cnn_forward.4} parent=39 // pred_region
        %s875 = smul.u32 32, %s15
        %p876 = scmp.lt.s32.totalorder %s875, 127
        %s877 = scalar_select %p876, %s875, 127
        %s878 = smul.addr %s877, 4
        %s879 = scalar_lea.vmem %s3, %s878
      $region44: #{nature_cnn_forward.4} parent=39 // pred_fallthru
        _
    $region40: #{nature_cnn_forward.4} parent=5 // pred_fallthru
      _
  $region6: #{nature_cnn_forward.4} parent=0 // loop_footer
    %s13 = sadd.s32 1, %s9
  $region7: #{nature_cnn_forward.4} parent=0 // loop_footer_branch
    %8 = sbr.rel target = $region3
  $region8: #{nature_cnn_forward.4} parent=0 // loop_exit
    _

// kernel: nature_cnn_forward.5
$region0: #{nature_cnn_forward.5}
  #allocation0 [shape = 'u32[]', space=smem, size = 0x4, offset = 0x4, fixed_abs, tag = 'smem constant byte address 0x4 - core index']
  #allocation1 [shape = 'u32[144,128]{1,0:T(1,128)}', space=vmem, size = 0x12000, scoped, tag = 'internal scratch']
  %s0 = inlined_call_operand.vmem [shape: bf16[168,512], index: 0, kind: input, shape index: {}]
  %s1 = inlined_call_operand.vmem [shape: bf16[512,128], index: 1, kind: input, shape index: {}]
  %s2 = inlined_call_operand.vmem [shape: f32[1,128], index: 2, kind: input, shape index: {}]
  %s3 = inlined_call_operand.vmem [shape: bf16[168,128], index: 3, kind: output, shape index: {}]
  %s4 = sld [smem:[#allocation0]]
  $region22: #{nature_cnn_forward.5} parent=0
    _
  %s6 = ssub.s32 1, %s4
  %s7 = scalar_select 0, %s6, %s4
  // Predicated region
  $region2: #{nature_cnn_forward.5} parent=0 // pred_check
    _
  $region3: #{nature_cnn_forward.5} parent=0 // pred_check_branch
    %9 = sbr.rel (0) target = $region5
  $region4: #{nature_cnn_forward.5} parent=0 // pred_region
    _
  $region5: #{nature_cnn_forward.5} parent=0 // pred_fallthru
    _
  // Predicated region
  $region6: #{nature_cnn_forward.5} parent=0 // pred_check
    _
  $region7: #{nature_cnn_forward.5} parent=0 // pred_check_branch
    %11 = sbr.rel (0) target = $region9
  $region8: #{nature_cnn_forward.5} parent=0 // pred_region
    _
  $region9: #{nature_cnn_forward.5} parent=0 // pred_fallthru
    _
  // Predicated region
  $region10: #{nature_cnn_forward.5} parent=0 // pred_check
    _
  $region11: #{nature_cnn_forward.5} parent=0 // pred_check_branch
    %13 = sbr.rel (0) target = $region13
  $region12: #{nature_cnn_forward.5} parent=0 // pred_region
    _
  $region13: #{nature_cnn_forward.5} parent=0 // pred_fallthru
    _
  %v15 = vld [vmem:[%s0] sm:$0xff]
  %v16 = vld [vmem:[%s0 + $0x8] sm:$0xff]
  %v17 = vld [vmem:[%s0 + $0x10] sm:$0xff]
  %v18 = vld [vmem:[%s0 + $0x18] sm:$0xff]
  %v19 = vld [vmem:[%s0 + $0x20] sm:$0xff]
  %v20 = vld [vmem:[%s0 + $0x28] sm:$0xff]
  %v21 = vld [vmem:[%s0 + $0x30] sm:$0xff]
  %v22 = vld [vmem:[%s0 + $0x38] sm:$0xff]
  %v23 = vld [vmem:[%s0 + $0x40] sm:$0xff]
  %v24 = vld [vmem:[%s0 + $0x48] sm:$0xff]
  %v25 = vld [vmem:[%s0 + $0x50] sm:$0xff]
  %v26 = vld [vmem:[%s0 + $0x58] sm:$0xff]
  %v27 = vld [vmem:[%s0 + $0x60] sm:$0xff]
  %v28 = vld [vmem:[%s0 + $0x68] sm:$0xff]
  %v29 = vld [vmem:[%s0 + $0x70] sm:$0xff]
  %v30 = vld [vmem:[%s0 + $0x78] sm:$0xff]
  %v31 = vld [vmem:[%s0 + $0x80] sm:$0xff]
  %v32 = vld [vmem:[%s0 + $0x88] sm:$0xff]
  %v33 = vld [vmem:[%s0 + $0x90] sm:$0xff]
  %v34 = vld [vmem:[%s0 + $0x98] sm:$0xff]
  %v35 = vld [vmem:[%s0 + $0xa0] sm:$0xff]
  %v36 = vld [vmem:[%s0 + $0xa8] sm:$0xff]
  %v37 = vld [vmem:[%s0 + $0xb0] sm:$0xff]
  %v38 = vld [vmem:[%s0 + $0xb8] sm:$0xff]
  %v39 = vld [vmem:[%s0 + $0xc0] sm:$0xff]
  %v40 = vld [vmem:[%s0 + $0xc8] sm:$0xff]
  %v41 = vld [vmem:[%s0 + $0xd0] sm:$0xff]
  %v42 = vld [vmem:[%s0 + $0xd8] sm:$0xff]
  %v43 = vld [vmem:[%s0 + $0xe0] sm:$0xff]
  %v44 = vld [vmem:[%s0 + $0xe8] sm:$0xff]
  %v45 = vld [vmem:[%s0 + $0xf0] sm:$0xff]
  %v46 = vld [vmem:[%s0 + $0xf8] sm:$0xff]
  %v47 = vld [vmem:[%s0 + $0x100] sm:$0xff]
  %v48 = vld [vmem:[%s0 + $0x108] sm:$0xff]
  %v49 = vld [vmem:[%s0 + $0x110] sm:$0xff]
  %v50 = vld [vmem:[%s0 + $0x118] sm:$0xff]
  %v51 = vld [vmem:[%s0 + $0x120] sm:$0xff]
  %v52 = vld [vmem:[%s0 + $0x128] sm:$0xff]
  %v53 = vld [vmem:[%s0 + $0x130] sm:$0xff]
  %v54 = vld [vmem:[%s0 + $0x138] sm:$0xff]
  %v55 = vld [vmem:[%s0 + $0x140] sm:$0xff]
  %v56 = vld [vmem:[%s0 + $0x148] sm:$0xff]
  %v57 = vld [vmem:[%s1] sm:$0xf]
  %v58 = vld [vmem:[%s1 + $0x4] sm:$0xf]
  %v59 = vld [vmem:[%s1 + $0x8] sm:$0xf]
  %v60 = vld [vmem:[%s1 + $0xc] sm:$0xf]
  %v61 = vld [vmem:[%s1 + $0x10] sm:$0xf]
  %v62 = vld [vmem:[%s1 + $0x14] sm:$0xf]
  %v63 = vld [vmem:[%s1 + $0x18] sm:$0xf]
  %v64 = vld [vmem:[%s1 + $0x1c] sm:$0xf]
  %v65 = vld [vmem:[%s1 + $0x20] sm:$0xf]
  %v66 = vld [vmem:[%s1 + $0x24] sm:$0xf]
  %v67 = vld [vmem:[%s1 + $0x28] sm:$0xf]
  %v68 = vld [vmem:[%s1 + $0x2c] sm:$0xf]
  %v69 = vld [vmem:[%s1 + $0x30] sm:$0xf]
  %v70 = vld [vmem:[%s1 + $0x34] sm:$0xf]
  %v71 = vld [vmem:[%s1 + $0x38] sm:$0xf]
  %v72 = vld [vmem:[%s1 + $0x3c] sm:$0xf]
  %v73 = vld [vmem:[%s1 + $0x40] sm:$0xf]
  %v74 = vld [vmem:[%s1 + $0x44] sm:$0xf]
  %v75 = vld [vmem:[%s1 + $0x48] sm:$0xf]
  %v76 = vld [vmem:[%s1 + $0x4c] sm:$0xf]
  %v77 = vld [vmem:[%s1 + $0x50] sm:$0xf]
  %v78 = vld [vmem:[%s1 + $0x54] sm:$0xf]
  %v79 = vld [vmem:[%s1 + $0x58] sm:$0xf]
  %v80 = vld [vmem:[%s1 + $0x5c] sm:$0xf]
  %v81 = vld [vmem:[%s1 + $0x60] sm:$0xf]
  %v82 = vld [vmem:[%s1 + $0x64] sm:$0xf]
  %v83 = vld [vmem:[%s1 + $0x68] sm:$0xf]
  %v84 = vld [vmem:[%s1 + $0x6c] sm:$0xf]
  %v85 = vld [vmem:[%s1 + $0x70] sm:$0xf]
  %v86 = vld [vmem:[%s1 + $0x74] sm:$0xf]
  %v87 = vld [vmem:[%s1 + $0x78] sm:$0xf]
  %v88 = vld [vmem:[%s1 + $0x7c] sm:$0xf]
  %v89 = vld [vmem:[%s1 + $0x80] sm:$0xf]
  %v90 = vld [vmem:[%s1 + $0x84] sm:$0xf]
  %v91 = vld [vmem:[%s1 + $0x88] sm:$0xf]
  %v92 = vld [vmem:[%s1 + $0x8c] sm:$0xf]
  %v93 = vld [vmem:[%s1 + $0x90] sm:$0xf]
  %v94 = vld [vmem:[%s1 + $0x94] sm:$0xf]
  %v95 = vld [vmem:[%s1 + $0x98] sm:$0xf]
  %v96 = vld [vmem:[%s1 + $0x9c] sm:$0xf]
  %v97 = vld [vmem:[%s1 + $0xa0] sm:$0xf]
  %v98 = vld [vmem:[%s1 + $0xa4] sm:$0xf]
  %v99 = vld [vmem:[%s1 + $0xa8] sm:$0xf]
  %v100 = vld [vmem:[%s1 + $0xac] sm:$0xf]
  %v101 = vld [vmem:[%s1 + $0xb0] sm:$0xf]
  %v102 = vld [vmem:[%s1 + $0xb4] sm:$0xf]
  %v103 = vld [vmem:[%s1 + $0xb8] sm:$0xf]
  %v104 = vld [vmem:[%s1 + $0xbc] sm:$0xf]
  %v105 = vld [vmem:[%s1 + $0xc0] sm:$0xf]
  %v106 = vld [vmem:[%s1 + $0xc4] sm:$0xf]
  %v107 = vld [vmem:[%s1 + $0xc8] sm:$0xf]
  %v108 = vld [vmem:[%s1 + $0xcc] sm:$0xf]
  %v109 = vld [vmem:[%s1 + $0xd0] sm:$0xf]
  %v110 = vld [vmem:[%s1 + $0xd4] sm:$0xf]
  %v111 = vld [vmem:[%s1 + $0xd8] sm:$0xf]
  %v112 = vld [vmem:[%s1 + $0xdc] sm:$0xf]
  %v113 = vld [vmem:[%s1 + $0xe0] sm:$0xf]
  %v114 = vld [vmem:[%s1 + $0xe4] sm:$0xf]
  %v115 = vld [vmem:[%s1 + $0xe8] sm:$0xf]
  %v116 = vld [vmem:[%s1 + $0xec] sm:$0xf]
  %v117 = vld [vmem:[%s1 + $0xf0] sm:$0xf]
  %v118 = vld [vmem:[%s1 + $0xf4] sm:$0xf]
  %v119 = vld [vmem:[%s1 + $0xf8] sm:$0xf]
  %v120 = vld [vmem:[%s1 + $0xfc] sm:$0xf]
  %v121 = vld [vmem:[%s2] sm:$0x1]
  %v123 = vlaneseq
  %v124 = vshrl.u32 %v123, 7
  %v125 = vsub.s32 0, %v124
  %v126 = vrot.slane %v121, %v125
  %v170 = vunpack.c.l.b16 %v15
  %v171 = vunpack.c.h.b16 %v15
  %v172 = vunpack.c.l.b16 %v16
  %v173 = vunpack.c.h.b16 %v16
  %v174 = vunpack.c.l.b16 %v17
  %v175 = vunpack.c.h.b16 %v17
  %v176 = vunpack.c.l.b16 %v18
  %v177 = vunpack.c.h.b16 %v18
  %v178 = vunpack.c.l.b16 %v19
  %v179 = vunpack.c.h.b16 %v19
  %v180 = vunpack.c.l.b16 %v20
  %v181 = vunpack.c.h.b16 %v20
  %v182 = vunpack.c.l.b16 %v21
  %v183 = vunpack.c.h.b16 %v21
  %v184 = vunpack.c.l.b16 %v22
  %v185 = vunpack.c.h.b16 %v22
  %v186 = vunpack.c.l.b16 %v23
  %v187 = vunpack.c.h.b16 %v23
  %v188 = vunpack.c.l.b16 %v24
  %v189 = vunpack.c.h.b16 %v24
  %v190 = vunpack.c.l.b16 %v25
  %v191 = vunpack.c.h.b16 %v25
  %v192 = vunpack.c.l.b16 %v26
  %v193 = vunpack.c.h.b16 %v26
  %v194 = vunpack.c.l.b16 %v27
  %v195 = vunpack.c.h.b16 %v27
  %v196 = vunpack.c.l.b16 %v28
  %v197 = vunpack.c.h.b16 %v28
  %v198 = vunpack.c.l.b16 %v29
  %v199 = vunpack.c.h.b16 %v29
  %v200 = vunpack.c.l.b16 %v30
  %v201 = vunpack.c.h.b16 %v30
  %v202 = vunpack.c.l.b16 %v31
  %v203 = vunpack.c.h.b16 %v31
  %v204 = vunpack.c.l.b16 %v32
  %v205 = vunpack.c.h.b16 %v32
  %v206 = vunpack.c.l.b16 %v33
  %v207 = vunpack.c.h.b16 %v33
  %v208 = vunpack.c.l.b16 %v34
  %v209 = vunpack.c.h.b16 %v34
  %v210 = vunpack.c.l.b16 %v35
  %v211 = vunpack.c.h.b16 %v35
  %v212 = vunpack.c.l.b16 %v36
  %v213 = vunpack.c.h.b16 %v36
  %v214 = vunpack.c.l.b16 %v37
  %v215 = vunpack.c.h.b16 %v37
  %v216 = vunpack.c.l.b16 %v38
  %v217 = vunpack.c.h.b16 %v38
  %v218 = vunpack.c.l.b16 %v39
  %v219 = vunpack.c.h.b16 %v39
  %v220 = vunpack.c.l.b16 %v40
  %v221 = vunpack.c.h.b16 %v40
  %v222 = vunpack.c.l.b16 %v41
  %v223 = vunpack.c.h.b16 %v41
  %v224 = vunpack.c.l.b16 %v42
  %v225 = vunpack.c.h.b16 %v42
  %v226 = vunpack.c.l.b16 %v43
  %v227 = vunpack.c.h.b16 %v43
  %v228 = vunpack.c.l.b16 %v44
  %v229 = vunpack.c.h.b16 %v44
  %v230 = vunpack.c.l.b16 %v45
  %v231 = vunpack.c.h.b16 %v45
  %v232 = vunpack.c.l.b16 %v46
  %v233 = vunpack.c.h.b16 %v46
  %v234 = vunpack.c.l.b16 %v47
  %v235 = vunpack.c.h.b16 %v47
  %v236 = vunpack.c.l.b16 %v48
  %v237 = vunpack.c.h.b16 %v48
  %v238 = vunpack.c.l.b16 %v49
  %v239 = vunpack.c.h.b16 %v49
  %v240 = vunpack.c.l.b16 %v50
  %v241 = vunpack.c.h.b16 %v50
  %v242 = vunpack.c.l.b16 %v51
  %v243 = vunpack.c.h.b16 %v51
  %v244 = vunpack.c.l.b16 %v52
  %v245 = vunpack.c.h.b16 %v52
  %v246 = vunpack.c.l.b16 %v53
  %v247 = vunpack.c.h.b16 %v53
  %v248 = vunpack.c.l.b16 %v54
  %v249 = vunpack.c.h.b16 %v54
  %v250 = vunpack.c.l.b16 %v55
  %v251 = vunpack.c.h.b16 %v55
  %v252 = vunpack.c.l.b16 %v56
  %v253 = vunpack.c.h.b16 %v56
  %v254 = vpack.c.b16 %v174, %v170
  %v255 = vpack.c.b16 %v175, %v171
  %v256 = vpack.c.b16 %v176, %v172
  %v257 = vpack.c.b16 %v177, %v173
  %v258 = vpack.c.b16 %v182, %v178
  %v259 = vpack.c.b16 %v183, %v179
  %v260 = vpack.c.b16 %v184, %v180
  %v261 = vpack.c.b16 %v185, %v181
  %v262 = vpack.c.b16 %v190, %v186
  %v263 = vpack.c.b16 %v191, %v187
  %v264 = vpack.c.b16 %v192, %v188
  %v265 = vpack.c.b16 %v193, %v189
  %v266 = vpack.c.b16 %v198, %v194
  %v267 = vpack.c.b16 %v199, %v195
  %v268 = vpack.c.b16 %v200, %v196
  %v269 = vpack.c.b16 %v201, %v197
  %v270 = vpack.c.b16 %v206, %v202
  %v271 = vpack.c.b16 %v207, %v203
  %v272 = vpack.c.b16 %v208, %v204
  %v273 = vpack.c.b16 %v209, %v205
  %v274 = vpack.c.b16 %v214, %v210
  %v275 = vpack.c.b16 %v215, %v211
  %v276 = vpack.c.b16 %v216, %v212
  %v277 = vpack.c.b16 %v217, %v213
  %v278 = vpack.c.b16 %v222, %v218
  %v279 = vpack.c.b16 %v223, %v219
  %v280 = vpack.c.b16 %v224, %v220
  %v281 = vpack.c.b16 %v225, %v221
  %v282 = vpack.c.b16 %v230, %v226
  %v283 = vpack.c.b16 %v231, %v227
  %v284 = vpack.c.b16 %v232, %v228
  %v285 = vpack.c.b16 %v233, %v229
  %v286 = vpack.c.b16 %v238, %v234
  %v287 = vpack.c.b16 %v239, %v235
  %v288 = vpack.c.b16 %v240, %v236
  %v289 = vpack.c.b16 %v241, %v237
  %v290 = vpack.c.b16 %v246, %v242
  %v291 = vpack.c.b16 %v247, %v243
  %v292 = vpack.c.b16 %v248, %v244
  %v293 = vpack.c.b16 %v249, %v245
  %v294 = vpack.c.b16 %v250, %v250
  %v295 = vpack.c.b16 %v251, %v251
  %v296 = vpack.c.b16 %v252, %v252
  %v297 = vpack.c.b16 %v253, %v253
  %v406 = vunpack.c.l.b16 %v57
  %v407 = vunpack.c.l.b16 %v58
  %v408 = vunpack.c.l.b16 %v59
  %v409 = vunpack.c.l.b16 %v60
  %v410 = vunpack.c.l.b16 %v61
  %v411 = vunpack.c.l.b16 %v62
  %v412 = vunpack.c.l.b16 %v63
  %v413 = vunpack.c.l.b16 %v64
  %v414 = vunpack.c.l.b16 %v65
  %v415 = vunpack.c.l.b16 %v66
  %v416 = vunpack.c.l.b16 %v67
  %v417 = vunpack.c.l.b16 %v68
  %v418 = vunpack.c.l.b16 %v69
  %v419 = vunpack.c.l.b16 %v70
  %v420 = vunpack.c.l.b16 %v71
  %v421 = vunpack.c.l.b16 %v72
  %v422 = vunpack.c.l.b16 %v73
  %v423 = vunpack.c.l.b16 %v74
  %v424 = vunpack.c.l.b16 %v75
  %v425 = vunpack.c.l.b16 %v76
  %v426 = vunpack.c.l.b16 %v77
  %v427 = vunpack.c.l.b16 %v78
  %v428 = vunpack.c.l.b16 %v79
  %v429 = vunpack.c.l.b16 %v80
  %v430 = vunpack.c.l.b16 %v81
  %v431 = vunpack.c.l.b16 %v82
  %v432 = vunpack.c.l.b16 %v83
  %v433 = vunpack.c.l.b16 %v84
  %v434 = vunpack.c.l.b16 %v85
  %v435 = vunpack.c.l.b16 %v86
  %v436 = vunpack.c.l.b16 %v87
  %v437 = vunpack.c.l.b16 %v88
  %v438 = vunpack.c.l.b16 %v89
  %v439 = vunpack.c.l.b16 %v90
  %v440 = vunpack.c.l.b16 %v91
  %v441 = vunpack.c.l.b16 %v92
  %v442 = vunpack.c.l.b16 %v93
  %v443 = vunpack.c.l.b16 %v94
  %v444 = vunpack.c.l.b16 %v95
  %v445 = vunpack.c.l.b16 %v96
  %v446 = vunpack.c.l.b16 %v97
  %v447 = vunpack.c.l.b16 %v98
  %v448 = vunpack.c.l.b16 %v99
  %v449 = vunpack.c.l.b16 %v100
  %v450 = vunpack.c.l.b16 %v101
  %v451 = vunpack.c.l.b16 %v102
  %v452 = vunpack.c.l.b16 %v103
  %v453 = vunpack.c.l.b16 %v104
  %v454 = vunpack.c.l.b16 %v105
  %v455 = vunpack.c.l.b16 %v106
  %v456 = vunpack.c.l.b16 %v107
  %v457 = vunpack.c.l.b16 %v108
  %v458 = vunpack.c.l.b16 %v109
  %v459 = vunpack.c.l.b16 %v110
  %v460 = vunpack.c.l.b16 %v111
  %v461 = vunpack.c.l.b16 %v112
  %v462 = vunpack.c.l.b16 %v113
  %v463 = vunpack.c.l.b16 %v114
  %v464 = vunpack.c.l.b16 %v115
  %v465 = vunpack.c.l.b16 %v116
  %v466 = vunpack.c.l.b16 %v117
  %v467 = vunpack.c.l.b16 %v118
  %v468 = vunpack.c.l.b16 %v119
  %v469 = vunpack.c.l.b16 %v120
  %v470 = vpack.c.b16 %v407, %v406
  %v471 = vpack.c.b16 %v409, %v408
  %v472 = vpack.c.b16 %v411, %v410
  %v473 = vpack.c.b16 %v413, %v412
  %v474 = vpack.c.b16 %v415, %v414
  %v475 = vpack.c.b16 %v417, %v416
  %v476 = vpack.c.b16 %v419, %v418
  %v477 = vpack.c.b16 %v421, %v420
  %v478 = vpack.c.b16 %v423, %v422
  %v479 = vpack.c.b16 %v425, %v424
  %v480 = vpack.c.b16 %v427, %v426
  %v481 = vpack.c.b16 %v429, %v428
  %v482 = vpack.c.b16 %v431, %v430
  %v483 = vpack.c.b16 %v433, %v432
  %v484 = vpack.c.b16 %v435, %v434
  %v485 = vpack.c.b16 %v437, %v436
  %v486 = vpack.c.b16 %v439, %v438
  %v487 = vpack.c.b16 %v441, %v440
  %v488 = vpack.c.b16 %v443, %v442
  %v489 = vpack.c.b16 %v445, %v444
  %v490 = vpack.c.b16 %v447, %v446
  %v491 = vpack.c.b16 %v449, %v448
  %v492 = vpack.c.b16 %v451, %v450
  %v493 = vpack.c.b16 %v453, %v452
  %v494 = vpack.c.b16 %v455, %v454
  %v495 = vpack.c.b16 %v457, %v456
  %v496 = vpack.c.b16 %v459, %v458
  %v497 = vpack.c.b16 %v461, %v460
  %v498 = vpack.c.b16 %v463, %v462
  %v499 = vpack.c.b16 %v465, %v464
  %v500 = vpack.c.b16 %v467, %v466
  %v501 = vpack.c.b16 %v469, %v468
  %534 = vmatprep.subr.bf16.mxu0 0
  %535 = vmatpush1.bf16.msra.mxu0 %v470
  %536 = vmatprep.subr.bf16.mxu0 0
  %537 = vmatpush1.bf16.msra.mxu0 %v471
  %538 = vmatprep.subr.bf16.mxu0 0
  %539 = vmatpush1.bf16.msra.mxu0 %v472
  %540 = vmatprep.subr.bf16.mxu0 0
  %541 = vmatpush1.bf16.msra.mxu0 %v473
  %542 = vmatprep.subr.bf16.mxu0 0
  %543 = vmatpush1.bf16.msra.mxu0 %v474
  %544 = vmatprep.subr.bf16.mxu0 0
  %545 = vmatpush1.bf16.msra.mxu0 %v475
  %546 = vmatprep.subr.bf16.mxu0 0
  %547 = vmatpush1.bf16.msra.mxu0 %v476
  %548 = vmatprep.subr.bf16.mxu0 0
  %549 = vmatpush1.bf16.msra.mxu0 %v477
  %550 = vmatprep.subr.bf16.mxu0 0
  %551 = vmatpush1.bf16.msra.mxu0 %v478
  %552 = vmatprep.subr.bf16.mxu0 0
  %553 = vmatpush1.bf16.msra.mxu0 %v479
  %554 = vmatprep.subr.bf16.mxu0 0
  %555 = vmatpush1.bf16.msra.mxu0 %v480
  %556 = vmatprep.subr.bf16.mxu0 0
  %557 = vmatpush1.bf16.msra.mxu0 %v481
  %558 = vmatprep.subr.bf16.mxu0 0
  %559 = vmatpush1.bf16.msra.mxu0 %v482
  %560 = vmatprep.subr.bf16.mxu0 0
  %561 = vmatpush1.bf16.msra.mxu0 %v483
  %562 = vmatprep.subr.bf16.mxu0 0
  %563 = vmatpush1.bf16.msra.mxu0 %v484
  %564 = vmatprep.subr.bf16.mxu0 0
  %565 = vmatpush1.bf16.msra.mxu0 %v485
  %566 = vmatprep.mubr.bf16.mxu0 %v255
  %567 = vmatmul.mubr.bf16.gmra.mrb[0].mxu0 %v254
  %v568 = vpop.f32.mrb[0].mxu0
  %v569 = vadd.f32 %v126, %v568
  %v570 = vpop.f32.mrb[0].mxu0
  %v571 = vpop.f32.mrb[0].mxu0
  %v572 = vadd.f32 %v126, %v571
  %v573 = vpop.f32.mrb[0].mxu0
  %574 = vmatprep.mubr.bf16.mxu0 %v259
  %575 = vmatmul.mubr.bf16.gmra.mrb[0].mxu0 %v258
  %v576 = vpop.f32.mrb[0].mxu0
  %v577 = vadd.f32 %v126, %v576
  %v578 = vpop.f32.mrb[0].mxu0
  %v579 = vpop.f32.mrb[0].mxu0
  %v580 = vadd.f32 %v126, %v579
  %v581 = vpop.f32.mrb[0].mxu0
  %582 = vmatprep.mubr.bf16.mxu0 %v263
  %583 = vmatmul.mubr.bf16.gmra.mrb[0].mxu0 %v262
  %v584 = vpop.f32.mrb[0].mxu0
  %v585 = vadd.f32 %v126, %v584
  %v586 = vpop.f32.mrb[0].mxu0
  %v587 = vpop.f32.mrb[0].mxu0
  %v588 = vadd.f32 %v126, %v587
  %v589 = vpop.f32.mrb[0].mxu0
  %590 = vmatprep.mubr.bf16.mxu0 %v267
  %591 = vmatmul.mubr.bf16.gmra.mrb[0].mxu0 %v266
  %v592 = vpop.f32.mrb[0].mxu0
  %v593 = vadd.f32 %v126, %v592
  %v594 = vpop.f32.mrb[0].mxu0
  %v595 = vpop.f32.mrb[0].mxu0
  %v596 = vadd.f32 %v126, %v595
  %v597 = vpop.f32.mrb[0].mxu0
  %598 = vmatprep.mubr.bf16.mxu0 %v271
  %599 = vmatmul.mubr.bf16.gmra.mrb[0].mxu0 %v270
  %v600 = vpop.f32.mrb[0].mxu0
  %v601 = vadd.f32 %v126, %v600
  %v602 = vpop.f32.mrb[0].mxu0
  %v603 = vpop.f32.mrb[0].mxu0
  %v604 = vadd.f32 %v126, %v603
  %v605 = vpop.f32.mrb[0].mxu0
  %606 = vmatprep.mubr.bf16.mxu0 %v275
  %607 = vmatmul.mubr.bf16.gmra.mrb[0].mxu0 %v274
  %v608 = vpop.f32.mrb[0].mxu0
  %v609 = vadd.f32 %v126, %v608
  %v610 = vpop.f32.mrb[0].mxu0
  %v611 = vpop.f32.mrb[0].mxu0
  %v612 = vadd.f32 %v126, %v611
  %v613 = vpop.f32.mrb[0].mxu0
  %614 = vmatprep.mubr.bf16.mxu0 %v279
  %615 = vmatmul.mubr.bf16.gmra.mrb[0].mxu0 %v278
  %v616 = vpop.f32.mrb[0].mxu0
  %v617 = vadd.f32 %v126, %v616
  %v618 = vpop.f32.mrb[0].mxu0
  %v619 = vpop.f32.mrb[0].mxu0
  %v620 = vadd.f32 %v126, %v619
  %v621 = vpop.f32.mrb[0].mxu0
  %622 = vmatprep.mubr.bf16.mxu0 %v283
  %623 = vmatmul.mubr.bf16.gmra.mrb[0].mxu0 %v282
  %v624 = vpop.f32.mrb[0].mxu0
  %v625 = vadd.f32 %v126, %v624
  %v626 = vpop.f32.mrb[0].mxu0
  %v627 = vpop.f32.mrb[0].mxu0
  %v628 = vadd.f32 %v126, %v627
  %v629 = vpop.f32.mrb[0].mxu0
  %630 = vmatprep.mubr.bf16.mxu0 %v287
  %631 = vmatmul.mubr.bf16.gmra.mrb[0].mxu0 %v286
  %v632 = vpop.f32.mrb[0].mxu0
  %v633 = vadd.f32 %v126, %v632
  %v634 = vpop.f32.mrb[0].mxu0
  %v635 = vpop.f32.mrb[0].mxu0
  %v636 = vadd.f32 %v126, %v635
  %v637 = vpop.f32.mrb[0].mxu0
  %638 = vmatprep.mubr.bf16.mxu0 %v291
  %639 = vmatmul.mubr.bf16.gmra.mrb[0].mxu0 %v290
  %v640 = vpop.f32.mrb[0].mxu0
  %v641 = vadd.f32 %v126, %v640
  %v642 = vpop.f32.mrb[0].mxu0
  %v643 = vpop.f32.mrb[0].mxu0
  %v644 = vadd.f32 %v126, %v643
  %v645 = vpop.f32.mrb[0].mxu0
  %646 = vmatprep.mubr.bf16.mxu0 %v295
  %647 = vmatmul.mubr.bf16.gmra.mrb[0].mxu0 %v294
  %v648 = vpop.f32.mrb[0].mxu0
  %v649 = vadd.f32 %v126, %v648
  %v650 = vpop.f32.mrb[0].mxu0
  %v651 = vpop.f32.mrb[0].mxu0
  %v652 = vpop.f32.mrb[0].mxu0
  %653 = vdwg.mxu0
  %654 = vmatprep.subr.bf16.mxu0 0
  %655 = vmatpush1.bf16.msra.mxu0 %v486
  %656 = vmatprep.subr.bf16.mxu0 0
  %657 = vmatpush1.bf16.msra.mxu0 %v487
  %658 = vmatprep.subr.bf16.mxu0 0
  %659 = vmatpush1.bf16.msra.mxu0 %v488
  %660 = vmatprep.subr.bf16.mxu0 0
  %661 = vmatpush1.bf16.msra.mxu0 %v489
  %662 = vmatprep.subr.bf16.mxu0 0
  %663 = vmatpush1.bf16.msra.mxu0 %v490
  %664 = vmatprep.subr.bf16.mxu0 0
  %665 = vmatpush1.bf16.msra.mxu0 %v491
  %666 = vmatprep.subr.bf16.mxu0 0
  %667 = vmatpush1.bf16.msra.mxu0 %v492
  %668 = vmatprep.subr.bf16.mxu0 0
  %669 = vmatpush1.bf16.msra.mxu0 %v493
  %670 = vmatprep.subr.bf16.mxu0 0
  %671 = vmatpush1.bf16.msra.mxu0 %v494
  %672 = vmatprep.subr.bf16.mxu0 0
  %673 = vmatpush1.bf16.msra.mxu0 %v495
  %674 = vmatprep.subr.bf16.mxu0 0
  %675 = vmatpush1.bf16.msra.mxu0 %v496
  %676 = vmatprep.subr.bf16.mxu0 0
  %677 = vmatpush1.bf16.msra.mxu0 %v497
  %678 = vmatprep.subr.bf16.mxu0 0
  %679 = vmatpush1.bf16.msra.mxu0 %v498
  %680 = vmatprep.subr.bf16.mxu0 0
  %681 = vmatpush1.bf16.msra.mxu0 %v499
  %682 = vmatprep.subr.bf16.mxu0 0
  %683 = vmatpush1.bf16.msra.mxu0 %v500
  %684 = vmatprep.subr.bf16.mxu0 0
  %685 = vmatpush1.bf16.msra.mxu0 %v501
  %686 = vmatprep.mubr.bf16.mxu0 %v257
  %687 = vmatmul.mubr.bf16.gmra.mrb[0].mxu0 %v256
  %v688 = vpop.f32.mrb[0].mxu0
  %v689 = vadd.f32 %v569, %v688
  %v690 = vpop.f32.mrb[0].mxu0
  %v691 = vpop.f32.mrb[0].mxu0
  %v692 = vadd.f32 %v572, %v691
  %v693 = vpop.f32.mrb[0].mxu0
  %694 = vmatprep.mubr.bf16.mxu0 %v261
  %695 = vmatmul.mubr.bf16.gmra.mrb[0].mxu0 %v260
  %v696 = vpop.f32.mrb[0].mxu0
  %v697 = vadd.f32 %v577, %v696
  %v698 = vpop.f32.mrb[0].mxu0
  %v699 = vpop.f32.mrb[0].mxu0
  %v700 = vadd.f32 %v580, %v699
  %v701 = vpop.f32.mrb[0].mxu0
  %702 = vmatprep.mubr.bf16.mxu0 %v265
  %703 = vmatmul.mubr.bf16.gmra.mrb[0].mxu0 %v264
  %v704 = vpop.f32.mrb[0].mxu0
  %v705 = vadd.f32 %v585, %v704
  %v706 = vpop.f32.mrb[0].mxu0
  %v707 = vpop.f32.mrb[0].mxu0
  %v708 = vadd.f32 %v588, %v707
  %v709 = vpop.f32.mrb[0].mxu0
  %710 = vmatprep.mubr.bf16.mxu0 %v269
  %711 = vmatmul.mubr.bf16.gmra.mrb[0].mxu0 %v268
  %v712 = vpop.f32.mrb[0].mxu0
  %v713 = vadd.f32 %v593, %v712
  %v714 = vpop.f32.mrb[0].mxu0
  %v715 = vpop.f32.mrb[0].mxu0
  %v716 = vadd.f32 %v596, %v715
  %v717 = vpop.f32.mrb[0].mxu0
  %718 = vmatprep.mubr.bf16.mxu0 %v273
  %719 = vmatmul.mubr.bf16.gmra.mrb[0].mxu0 %v272
  %v720 = vpop.f32.mrb[0].mxu0
  %v721 = vadd.f32 %v601, %v720
  %v722 = vpop.f32.mrb[0].mxu0
  %v723 = vpop.f32.mrb[0].mxu0
  %v724 = vadd.f32 %v604, %v723
  %v725 = vpop.f32.mrb[0].mxu0
  %726 = vmatprep.mubr.bf16.mxu0 %v277
  %727 = vmatmul.mubr.bf16.gmra.mrb[0].mxu0 %v276
  %v728 = vpop.f32.mrb[0].mxu0
  %v729 = vadd.f32 %v609, %v728
  %v730 = vpop.f32.mrb[0].mxu0
  %v731 = vpop.f32.mrb[0].mxu0
  %v732 = vadd.f32 %v612, %v731
  %v733 = vpop.f32.mrb[0].mxu0
  %734 = vmatprep.mubr.bf16.mxu0 %v281
  %735 = vmatmul.mubr.bf16.gmra.mrb[0].mxu0 %v280
  %v736 = vpop.f32.mrb[0].mxu0
  %v737 = vadd.f32 %v617, %v736
  %v738 = vpop.f32.mrb[0].mxu0
  %v739 = vpop.f32.mrb[0].mxu0
  %v740 = vadd.f32 %v620, %v739
  %v741 = vpop.f32.mrb[0].mxu0
  %742 = vmatprep.mubr.bf16.mxu0 %v285
  %743 = vmatmul.mubr.bf16.gmra.mrb[0].mxu0 %v284
  %v744 = vpop.f32.mrb[0].mxu0
  %v745 = vadd.f32 %v625, %v744
  %v746 = vpop.f32.mrb[0].mxu0
  %v747 = vpop.f32.mrb[0].mxu0
  %v748 = vadd.f32 %v628, %v747
  %v749 = vpop.f32.mrb[0].mxu0
  %750 = vmatprep.mubr.bf16.mxu0 %v289
  %751 = vmatmul.mubr.bf16.gmra.mrb[0].mxu0 %v288
  %v752 = vpop.f32.mrb[0].mxu0
  %v753 = vadd.f32 %v633, %v752
  %v754 = vpop.f32.mrb[0].mxu0
  %v755 = vpop.f32.mrb[0].mxu0
  %v756 = vadd.f32 %v636, %v755
  %v757 = vpop.f32.mrb[0].mxu0
  %758 = vmatprep.mubr.bf16.mxu0 %v293
  %759 = vmatmul.mubr.bf16.gmra.mrb[0].mxu0 %v292
  %v760 = vpop.f32.mrb[0].mxu0
  %v761 = vadd.f32 %v641, %v760
  %v762 = vpop.f32.mrb[0].mxu0
  %v763 = vpop.f32.mrb[0].mxu0
  %v764 = vadd.f32 %v644, %v763
  %v765 = vpop.f32.mrb[0].mxu0
  %766 = vmatprep.mubr.bf16.mxu0 %v297
  %767 = vmatmul.mubr.bf16.gmra.mrb[0].mxu0 %v296
  %v768 = vpop.f32.mrb[0].mxu0
  %v769 = vadd.f32 %v649, %v768
  %v770 = vpop.f32.mrb[0].mxu0
  %v771 = vpop.f32.mrb[0].mxu0
  %v772 = vpop.f32.mrb[0].mxu0
  %773 = vdwg.mxu0
  %v774 = vmax.f32 %v689, 0.0
  %v775 = vmax.f32 %v692, 0.0
  %v776 = vmax.f32 %v697, 0.0
  %v777 = vmax.f32 %v700, 0.0
  %v778 = vmax.f32 %v705, 0.0
  %v779 = vmax.f32 %v708, 0.0
  %v780 = vmax.f32 %v713, 0.0
  %v781 = vmax.f32 %v716, 0.0
  %v782 = vmax.f32 %v721, 0.0
  %v783 = vmax.f32 %v724, 0.0
  %v784 = vmax.f32 %v729, 0.0
  %v785 = vmax.f32 %v732, 0.0
  %v786 = vmax.f32 %v737, 0.0
  %v787 = vmax.f32 %v740, 0.0
  %v788 = vmax.f32 %v745, 0.0
  %v789 = vmax.f32 %v748, 0.0
  %v790 = vmax.f32 %v753, 0.0
  %v791 = vmax.f32 %v756, 0.0
  %v792 = vmax.f32 %v761, 0.0
  %v793 = vmax.f32 %v764, 0.0
  %v794 = vmax.f32 %v769, 0.0
  %v795 = vpack.c.bf16 %v775, %v774
  %v796 = vpack.c.bf16 %v777, %v776
  %v797 = vpack.c.bf16 %v779, %v778
  %v798 = vpack.c.bf16 %v781, %v780
  %v799 = vpack.c.bf16 %v783, %v782
  %v800 = vpack.c.bf16 %v785, %v784
  %v801 = vpack.c.bf16 %v787, %v786
  %v802 = vpack.c.bf16 %v789, %v788
  %v803 = vpack.c.bf16 %v791, %v790
  %v804 = vpack.c.bf16 %v793, %v792
  %v805 = vpack.c.bf16 %v794, %v794
  %v817 = vunpack.c.l.b16 %v795
  %v818 = vunpack.c.h.b16 %v795
  %v819 = vunpack.c.l.b16 %v796
  %v820 = vunpack.c.h.b16 %v796
  %v821 = vunpack.c.l.b16 %v797
  %v822 = vunpack.c.h.b16 %v797
  %v823 = vunpack.c.l.b16 %v798
  %v824 = vunpack.c.h.b16 %v798
  %v825 = vunpack.c.l.b16 %v799
  %v826 = vunpack.c.h.b16 %v799
  %v827 = vunpack.c.l.b16 %v800
  %v828 = vunpack.c.h.b16 %v800
  %v829 = vunpack.c.l.b16 %v801
  %v830 = vunpack.c.h.b16 %v801
  %v831 = vunpack.c.l.b16 %v802
  %v832 = vunpack.c.h.b16 %v802
  %v833 = vunpack.c.l.b16 %v803
  %v834 = vunpack.c.h.b16 %v803
  %v835 = vunpack.c.l.b16 %v804
  %v836 = vunpack.c.h.b16 %v804
  %v837 = vunpack.c.l.b16 %v805
  %v838 = vpack.c.b16 %v817, %v817
  %v839 = vpack.c.b16 %v818, %v818
  %v840 = vpack.c.b16 %v819, %v819
  %v841 = vpack.c.b16 %v820, %v820
  %v842 = vpack.c.b16 %v821, %v821
  %v843 = vpack.c.b16 %v822, %v822
  %v844 = vpack.c.b16 %v823, %v823
  %v845 = vpack.c.b16 %v824, %v824
  %v846 = vpack.c.b16 %v825, %v825
  %v847 = vpack.c.b16 %v826, %v826
  %v848 = vpack.c.b16 %v827, %v827
  %v849 = vpack.c.b16 %v828, %v828
  %v850 = vpack.c.b16 %v829, %v829
  %v851 = vpack.c.b16 %v830, %v830
  %v852 = vpack.c.b16 %v831, %v831
  %v853 = vpack.c.b16 %v832, %v832
  %v854 = vpack.c.b16 %v833, %v833
  %v855 = vpack.c.b16 %v834, %v834
  %v856 = vpack.c.b16 %v835, %v835
  %v857 = vpack.c.b16 %v836, %v836
  %v858 = vpack.c.b16 %v837, %v837
  %880 = vst [vmem:[%s3] sm:$0xf] %v838
  %881 = vst [vmem:[%s3 + $0x4] sm:$0xf] %v839
  %882 = vst [vmem:[%s3 + $0x8] sm:$0xf] %v840
  %883 = vst [vmem:[%s3 + $0xc] sm:$0xf] %v841
  %884 = vst [vmem:[%s3 + $0x10] sm:$0xf] %v842
  %885 = vst [vmem:[%s3 + $0x14] sm:$0xf] %v843
  %886 = vst [vmem:[%s3 + $0x18] sm:$0xf] %v844
  %887 = vst [vmem:[%s3 + $0x1c] sm:$0xf] %v845
  %888 = vst [vmem:[%s3 + $0x20] sm:$0xf] %v846
  %889 = vst [vmem:[%s3 + $0x24] sm:$0xf] %v847
  %890 = vst [vmem:[%s3 + $0x28] sm:$0xf] %v848
  %891 = vst [vmem:[%s3 + $0x2c] sm:$0xf] %v849
  %892 = vst [vmem:[%s3 + $0x30] sm:$0xf] %v850
  %893 = vst [vmem:[%s3 + $0x34] sm:$0xf] %v851
  %894 = vst [vmem:[%s3 + $0x38] sm:$0xf] %v852
  %895 = vst [vmem:[%s3 + $0x3c] sm:$0xf] %v853
  %896 = vst [vmem:[%s3 + $0x40] sm:$0xf] %v854
  %897 = vst [vmem:[%s3 + $0x44] sm:$0xf] %v855
  %898 = vst [vmem:[%s3 + $0x48] sm:$0xf] %v856
  %899 = vst [vmem:[%s3 + $0x4c] sm:$0xf] %v857
  %900 = vst [vmem:[%s3 + $0x50] sm:$0xf] %v858
  // Predicated region
  $region14: #{nature_cnn_forward.5} parent=0 // pred_check
    _
  $region15: #{nature_cnn_forward.5} parent=0 // pred_check_branch
    %902 = sbr.rel (0) target = $region17
  $region16: #{nature_cnn_forward.5} parent=0 // pred_region
    _
  $region17: #{nature_cnn_forward.5} parent=0 // pred_fallthru
    _
  // Predicated region
  $region18: #{nature_cnn_forward.5} parent=0 // pred_check
    _
  $region19: #{nature_cnn_forward.5} parent=0 // pred_check_branch
    %904 = sbr.rel (0) target = $region21
  $region20: #{nature_cnn_forward.5} parent=0 // pred_region
    _
  $region21: #{nature_cnn_forward.5} parent=0 // pred_fallthru
    _

// kernel: nature_cnn_forward.6
$region0: #{nature_cnn_forward.6}
  #allocation0 [shape = 'u32[]', space=smem, size = 0x4, offset = 0x4, fixed_abs, tag = 'smem constant byte address 0x4 - core index']
  #allocation1 [shape = 'u32[144,128]{1,0:T(1,128)}', space=vmem, size = 0x12000, scoped, tag = 'internal scratch']
  %s0 = inlined_call_operand.vmem [shape: bf16[104,576], index: 0, kind: input, shape index: {}]
  %s1 = inlined_call_operand.vmem [shape: bf16[576,128], index: 1, kind: input, shape index: {}]
  %s2 = inlined_call_operand.vmem [shape: f32[1,128], index: 2, kind: input, shape index: {}]
  %s3 = inlined_call_operand.vmem [shape: bf16[104,128], index: 3, kind: output, shape index: {}]
  %s4 = sld [smem:[#allocation0]]
  $region22: #{nature_cnn_forward.6} parent=0
    _
  %s6 = ssub.s32 1, %s4
  %s7 = scalar_select 0, %s6, %s4
  // Predicated region
  $region2: #{nature_cnn_forward.6} parent=0 // pred_check
    _
  $region3: #{nature_cnn_forward.6} parent=0 // pred_check_branch
    %9 = sbr.rel (0) target = $region5
  $region4: #{nature_cnn_forward.6} parent=0 // pred_region
    _
  $region5: #{nature_cnn_forward.6} parent=0 // pred_fallthru
    _
  // Predicated region
  $region6: #{nature_cnn_forward.6} parent=0 // pred_check
    _
  $region7: #{nature_cnn_forward.6} parent=0 // pred_check_branch
    %11 = sbr.rel (0) target = $region9
  $region8: #{nature_cnn_forward.6} parent=0 // pred_region
    _
  $region9: #{nature_cnn_forward.6} parent=0 // pred_fallthru
    _
  // Predicated region
  $region10: #{nature_cnn_forward.6} parent=0 // pred_check
    _
  $region11: #{nature_cnn_forward.6} parent=0 // pred_check_branch
    %13 = sbr.rel (0) target = $region13
  $region12: #{nature_cnn_forward.6} parent=0 // pred_region
    _
  $region13: #{nature_cnn_forward.6} parent=0 // pred_fallthru
    _
  %v15 = vld [vmem:[%s0] sm:$0xff]
  %v16 = vld [vmem:[%s0 + $0x8] sm:$0xff]
  %v17 = vld [vmem:[%s0 + $0x10] sm:$0xf]
  %v18 = vld [vmem:[%s0 + $0x14] sm:$0xff]
  %v19 = vld [vmem:[%s0 + $0x1c] sm:$0xff]
  %v20 = vld [vmem:[%s0 + $0x24] sm:$0xf]
  %v21 = vld [vmem:[%s0 + $0x28] sm:$0xff]
  %v22 = vld [vmem:[%s0 + $0x30] sm:$0xff]
  %v23 = vld [vmem:[%s0 + $0x38] sm:$0xf]
  %v24 = vld [vmem:[%s0 + $0x3c] sm:$0xff]
  %v25 = vld [vmem:[%s0 + $0x44] sm:$0xff]
  %v26 = vld [vmem:[%s0 + $0x4c] sm:$0xf]
  %v27 = vld [vmem:[%s0 + $0x50] sm:$0xff]
  %v28 = vld [vmem:[%s0 + $0x58] sm:$0xff]
  %v29 = vld [vmem:[%s0 + $0x60] sm:$0xf]
  %v30 = vld [vmem:[%s0 + $0x64] sm:$0xff]
  %v31 = vld [vmem:[%s0 + $0x6c] sm:$0xff]
  %v32 = vld [vmem:[%s0 + $0x74] sm:$0xf]
  %v33 = vld [vmem:[%s0 + $0x78] sm:$0xff]
  %v34 = vld [vmem:[%s0 + $0x80] sm:$0xff]
  %v35 = vld [vmem:[%s0 + $0x88] sm:$0xf]
  %v36 = vld [vmem:[%s0 + $0x8c] sm:$0xff]
  %v37 = vld [vmem:[%s0 + $0x94] sm:$0xff]
  %v38 = vld [vmem:[%s0 + $0x9c] sm:$0xf]
  %v39 = vld [vmem:[%s0 + $0xa0] sm:$0xff]
  %v40 = vld [vmem:[%s0 + $0xa8] sm:$0xff]
  %v41 = vld [vmem:[%s0 + $0xb0] sm:$0xf]
  %v42 = vld [vmem:[%s0 + $0xb4] sm:$0xff]
  %v43 = vld [vmem:[%s0 + $0xbc] sm:$0xff]
  %v44 = vld [vmem:[%s0 + $0xc4] sm:$0xf]
  %v45 = vld [vmem:[%s0 + $0xc8] sm:$0xff]
  %v46 = vld [vmem:[%s0 + $0xd0] sm:$0xff]
  %v47 = vld [vmem:[%s0 + $0xd8] sm:$0xf]
  %v48 = vld [vmem:[%s0 + $0xdc] sm:$0xff]
  %v49 = vld [vmem:[%s0 + $0xe4] sm:$0xff]
  %v50 = vld [vmem:[%s0 + $0xec] sm:$0xf]
  %v51 = vld [vmem:[%s0 + $0xf0] sm:$0xff]
  %v52 = vld [vmem:[%s0 + $0xf8] sm:$0xff]
  %v53 = vld [vmem:[%s0 + $0x100] sm:$0xf]
  %v54 = vld [vmem:[%s1] sm:$0xf]
  %v55 = vld [vmem:[%s1 + $0x4] sm:$0xf]
  %v56 = vld [vmem:[%s1 + $0x8] sm:$0xf]
  %v57 = vld [vmem:[%s1 + $0xc] sm:$0xf]
  %v58 = vld [vmem:[%s1 + $0x10] sm:$0xf]
  %v59 = vld [vmem:[%s1 + $0x14] sm:$0xf]
  %v60 = vld [vmem:[%s1 + $0x18] sm:$0xf]
  %v61 = vld [vmem:[%s1 + $0x1c] sm:$0xf]
  %v62 = vld [vmem:[%s1 + $0x20] sm:$0xf]
  %v63 = vld [vmem:[%s1 + $0x24] sm:$0xf]
  %v64 = vld [vmem:[%s1 + $0x28] sm:$0xf]
  %v65 = vld [vmem:[%s1 + $0x2c] sm:$0xf]
  %v66 = vld [vmem:[%s1 + $0x30] sm:$0xf]
  %v67 = vld [vmem:[%s1 + $0x34] sm:$0xf]
  %v68 = vld [vmem:[%s1 + $0x38] sm:$0xf]
  %v69 = vld [vmem:[%s1 + $0x3c] sm:$0xf]
  %v70 = vld [vmem:[%s1 + $0x40] sm:$0xf]
  %v71 = vld [vmem:[%s1 + $0x44] sm:$0xf]
  %v72 = vld [vmem:[%s1 + $0x48] sm:$0xf]
  %v73 = vld [vmem:[%s1 + $0x4c] sm:$0xf]
  %v74 = vld [vmem:[%s1 + $0x50] sm:$0xf]
  %v75 = vld [vmem:[%s1 + $0x54] sm:$0xf]
  %v76 = vld [vmem:[%s1 + $0x58] sm:$0xf]
  %v77 = vld [vmem:[%s1 + $0x5c] sm:$0xf]
  %v78 = vld [vmem:[%s1 + $0x60] sm:$0xf]
  %v79 = vld [vmem:[%s1 + $0x64] sm:$0xf]
  %v80 = vld [vmem:[%s1 + $0x68] sm:$0xf]
  %v81 = vld [vmem:[%s1 + $0x6c] sm:$0xf]
  %v82 = vld [vmem:[%s1 + $0x70] sm:$0xf]
  %v83 = vld [vmem:[%s1 + $0x74] sm:$0xf]
  %v84 = vld [vmem:[%s1 + $0x78] sm:$0xf]
  %v85 = vld [vmem:[%s1 + $0x7c] sm:$0xf]
  %v86 = vld [vmem:[%s1 + $0x80] sm:$0xf]
  %v87 = vld [vmem:[%s1 + $0x84] sm:$0xf]
  %v88 = vld [vmem:[%s1 + $0x88] sm:$0xf]
  %v89 = vld [vmem:[%s1 + $0x8c] sm:$0xf]
  %v90 = vld [vmem:[%s1 + $0x90] sm:$0xf]
  %v91 = vld [vmem:[%s1 + $0x94] sm:$0xf]
  %v92 = vld [vmem:[%s1 + $0x98] sm:$0xf]
  %v93 = vld [vmem:[%s1 + $0x9c] sm:$0xf]
  %v94 = vld [vmem:[%s1 + $0xa0] sm:$0xf]
  %v95 = vld [vmem:[%s1 + $0xa4] sm:$0xf]
  %v96 = vld [vmem:[%s1 + $0xa8] sm:$0xf]
  %v97 = vld [vmem:[%s1 + $0xac] sm:$0xf]
  %v98 = vld [vmem:[%s1 + $0xb0] sm:$0xf]
  %v99 = vld [vmem:[%s1 + $0xb4] sm:$0xf]
  %v100 = vld [vmem:[%s1 + $0xb8] sm:$0xf]
  %v101 = vld [vmem:[%s1 + $0xbc] sm:$0xf]
  %v102 = vld [vmem:[%s1 + $0xc0] sm:$0xf]
  %v103 = vld [vmem:[%s1 + $0xc4] sm:$0xf]
  %v104 = vld [vmem:[%s1 + $0xc8] sm:$0xf]
  %v105 = vld [vmem:[%s1 + $0xcc] sm:$0xf]
  %v106 = vld [vmem:[%s1 + $0xd0] sm:$0xf]
  %v107 = vld [vmem:[%s1 + $0xd4] sm:$0xf]
  %v108 = vld [vmem:[%s1 + $0xd8] sm:$0xf]
  %v109 = vld [vmem:[%s1 + $0xdc] sm:$0xf]
  %v110 = vld [vmem:[%s1 + $0xe0] sm:$0xf]
  %v111 = vld [vmem:[%s1 + $0xe4] sm:$0xf]
  %v112 = vld [vmem:[%s1 + $0xe8] sm:$0xf]
  %v113 = vld [vmem:[%s1 + $0xec] sm:$0xf]
  %v114 = vld [vmem:[%s1 + $0xf0] sm:$0xf]
  %v115 = vld [vmem:[%s1 + $0xf4] sm:$0xf]
  %v116 = vld [vmem:[%s1 + $0xf8] sm:$0xf]
  %v117 = vld [vmem:[%s1 + $0xfc] sm:$0xf]
  %v118 = vld [vmem:[%s1 + $0x100] sm:$0xf]
  %v119 = vld [vmem:[%s1 + $0x104] sm:$0xf]
  %v120 = vld [vmem:[%s1 + $0x108] sm:$0xf]
  %v121 = vld [vmem:[%s1 + $0x10c] sm:$0xf]
  %v122 = vld [vmem:[%s1 + $0x110] sm:$0xf]
  %v123 = vld [vmem:[%s1 + $0x114] sm:$0xf]
  %v124 = vld [vmem:[%s1 + $0x118] sm:$0xf]
  %v125 = vld [vmem:[%s1 + $0x11c] sm:$0xf]
  %v126 = vld [vmem:[%s2] sm:$0x1]
  %v128 = vlaneseq
  %v129 = vshrl.u32 %v128, 7
  %v130 = vsub.s32 0, %v129
  %v131 = vrot.slane %v126, %v130
  %v172 = vunpack.c.l.b16 %v15
  %v173 = vunpack.c.h.b16 %v15
  %v174 = vunpack.c.l.b16 %v16
  %v175 = vunpack.c.h.b16 %v16
  %v176 = vunpack.c.l.b16 %v17
  %v177 = vunpack.c.l.b16 %v18
  %v178 = vunpack.c.h.b16 %v18
  %v179 = vunpack.c.l.b16 %v19
  %v180 = vunpack.c.h.b16 %v19
  %v181 = vunpack.c.l.b16 %v20
  %v182 = vunpack.c.l.b16 %v21
  %v183 = vunpack.c.h.b16 %v21
  %v184 = vunpack.c.l.b16 %v22
  %v185 = vunpack.c.h.b16 %v22
  %v186 = vunpack.c.l.b16 %v23
  %v187 = vunpack.c.l.b16 %v24
  %v188 = vunpack.c.h.b16 %v24
  %v189 = vunpack.c.l.b16 %v25
  %v190 = vunpack.c.h.b16 %v25
  %v191 = vunpack.c.l.b16 %v26
  %v192 = vunpack.c.l.b16 %v27
  %v193 = vunpack.c.h.b16 %v27
  %v194 = vunpack.c.l.b16 %v28
  %v195 = vunpack.c.h.b16 %v28
  %v196 = vunpack.c.l.b16 %v29
  %v197 = vunpack.c.l.b16 %v30
  %v198 = vunpack.c.h.b16 %v30
  %v199 = vunpack.c.l.b16 %v31
  %v200 = vunpack.c.h.b16 %v31
  %v201 = vunpack.c.l.b16 %v32
  %v202 = vunpack.c.l.b16 %v33
  %v203 = vunpack.c.h.b16 %v33
  %v204 = vunpack.c.l.b16 %v34
  %v205 = vunpack.c.h.b16 %v34
  %v206 = vunpack.c.l.b16 %v35
  %v207 = vunpack.c.l.b16 %v36
  %v208 = vunpack.c.h.b16 %v36
  %v209 = vunpack.c.l.b16 %v37
  %v210 = vunpack.c.h.b16 %v37
  %v211 = vunpack.c.l.b16 %v38
  %v212 = vunpack.c.l.b16 %v39
  %v213 = vunpack.c.h.b16 %v39
  %v214 = vunpack.c.l.b16 %v40
  %v215 = vunpack.c.h.b16 %v40
  %v216 = vunpack.c.l.b16 %v41
  %v217 = vunpack.c.l.b16 %v42
  %v218 = vunpack.c.h.b16 %v42
  %v219 = vunpack.c.l.b16 %v43
  %v220 = vunpack.c.h.b16 %v43
  %v221 = vunpack.c.l.b16 %v44
  %v222 = vunpack.c.l.b16 %v45
  %v223 = vunpack.c.h.b16 %v45
  %v224 = vunpack.c.l.b16 %v46
  %v225 = vunpack.c.h.b16 %v46
  %v226 = vunpack.c.l.b16 %v47
  %v227 = vunpack.c.l.b16 %v48
  %v228 = vunpack.c.h.b16 %v48
  %v229 = vunpack.c.l.b16 %v49
  %v230 = vunpack.c.h.b16 %v49
  %v231 = vunpack.c.l.b16 %v50
  %v232 = vunpack.c.l.b16 %v51
  %v233 = vunpack.c.h.b16 %v51
  %v234 = vunpack.c.l.b16 %v52
  %v235 = vunpack.c.h.b16 %v52
  %v236 = vunpack.c.l.b16 %v53
  %v237 = vpack.c.b16 %v177, %v172
  %v238 = vpack.c.b16 %v178, %v173
  %v239 = vpack.c.b16 %v179, %v174
  %v240 = vpack.c.b16 %v180, %v175
  %v241 = vpack.c.b16 %v181, %v176
  %v242 = vpack.c.b16 %v187, %v182
  %v243 = vpack.c.b16 %v188, %v183
  %v244 = vpack.c.b16 %v189, %v184
  %v245 = vpack.c.b16 %v190, %v185
  %v246 = vpack.c.b16 %v191, %v186
  %v247 = vpack.c.b16 %v197, %v192
  %v248 = vpack.c.b16 %v198, %v193
  %v249 = vpack.c.b16 %v199, %v194
  %v250 = vpack.c.b16 %v200, %v195
  %v251 = vpack.c.b16 %v201, %v196
  %v252 = vpack.c.b16 %v207, %v202
  %v253 = vpack.c.b16 %v208, %v203
  %v254 = vpack.c.b16 %v209, %v204
  %v255 = vpack.c.b16 %v210, %v205
  %v256 = vpack.c.b16 %v211, %v206
  %v257 = vpack.c.b16 %v217, %v212
  %v258 = vpack.c.b16 %v218, %v213
  %v259 = vpack.c.b16 %v219, %v214
  %v260 = vpack.c.b16 %v220, %v215
  %v261 = vpack.c.b16 %v221, %v216
  %v262 = vpack.c.b16 %v227, %v222
  %v263 = vpack.c.b16 %v228, %v223
  %v264 = vpack.c.b16 %v229, %v224
  %v265 = vpack.c.b16 %v230, %v225
  %v266 = vpack.c.b16 %v231, %v226
  %v267 = vpack.c.b16 %v232, %v232
  %v268 = vpack.c.b16 %v233, %v233
  %v269 = vpack.c.b16 %v234, %v234
  %v270 = vpack.c.b16 %v235, %v235
  %v271 = vpack.c.b16 %v236, %v236
  %v372 = vunpack.c.l.b16 %v54
  %v373 = vunpack.c.l.b16 %v55
  %v374 = vunpack.c.l.b16 %v56
  %v375 = vunpack.c.l.b16 %v57
  %v376 = vunpack.c.l.b16 %v58
  %v377 = vunpack.c.l.b16 %v59
  %v378 = vunpack.c.l.b16 %v60
  %v379 = vunpack.c.l.b16 %v61
  %v380 = vunpack.c.l.b16 %v62
  %v381 = vunpack.c.l.b16 %v63
  %v382 = vunpack.c.l.b16 %v64
  %v383 = vunpack.c.l.b16 %v65
  %v384 = vunpack.c.l.b16 %v66
  %v385 = vunpack.c.l.b16 %v67
  %v386 = vunpack.c.l.b16 %v68
  %v387 = vunpack.c.l.b16 %v69
  %v388 = vunpack.c.l.b16 %v70
  %v389 = vunpack.c.l.b16 %v71
  %v390 = vunpack.c.l.b16 %v72
  %v391 = vunpack.c.l.b16 %v73
  %v392 = vunpack.c.l.b16 %v74
  %v393 = vunpack.c.l.b16 %v75
  %v394 = vunpack.c.l.b16 %v76
  %v395 = vunpack.c.l.b16 %v77
  %v396 = vunpack.c.l.b16 %v78
  %v397 = vunpack.c.l.b16 %v79
  %v398 = vunpack.c.l.b16 %v80
  %v399 = vunpack.c.l.b16 %v81
  %v400 = vunpack.c.l.b16 %v82
  %v401 = vunpack.c.l.b16 %v83
  %v402 = vunpack.c.l.b16 %v84
  %v403 = vunpack.c.l.b16 %v85
  %v404 = vunpack.c.l.b16 %v86
  %v405 = vunpack.c.l.b16 %v87
  %v406 = vunpack.c.l.b16 %v88
  %v407 = vunpack.c.l.b16 %v89
  %v408 = vunpack.c.l.b16 %v90
  %v409 = vunpack.c.l.b16 %v91
  %v410 = vunpack.c.l.b16 %v92
  %v411 = vunpack.c.l.b16 %v93
  %v412 = vunpack.c.l.b16 %v94
  %v413 = vunpack.c.l.b16 %v95
  %v414 = vunpack.c.l.b16 %v96
  %v415 = vunpack.c.l.b16 %v97
  %v416 = vunpack.c.l.b16 %v98
  %v417 = vunpack.c.l.b16 %v99
  %v418 = vunpack.c.l.b16 %v100
  %v419 = vunpack.c.l.b16 %v101
  %v420 = vunpack.c.l.b16 %v102
  %v421 = vunpack.c.l.b16 %v103
  %v422 = vunpack.c.l.b16 %v104
  %v423 = vunpack.c.l.b16 %v105
  %v424 = vunpack.c.l.b16 %v106
  %v425 = vunpack.c.l.b16 %v107
  %v426 = vunpack.c.l.b16 %v108
  %v427 = vunpack.c.l.b16 %v109
  %v428 = vunpack.c.l.b16 %v110
  %v429 = vunpack.c.l.b16 %v111
  %v430 = vunpack.c.l.b16 %v112
  %v431 = vunpack.c.l.b16 %v113
  %v432 = vunpack.c.l.b16 %v114
  %v433 = vunpack.c.l.b16 %v115
  %v434 = vunpack.c.l.b16 %v116
  %v435 = vunpack.c.l.b16 %v117
  %v436 = vunpack.c.l.b16 %v118
  %v437 = vunpack.c.l.b16 %v119
  %v438 = vunpack.c.l.b16 %v120
  %v439 = vunpack.c.l.b16 %v121
  %v440 = vunpack.c.l.b16 %v122
  %v441 = vunpack.c.l.b16 %v123
  %v442 = vunpack.c.l.b16 %v124
  %v443 = vunpack.c.l.b16 %v125
  %v444 = vpack.c.b16 %v373, %v372
  %v445 = vpack.c.b16 %v375, %v374
  %v446 = vpack.c.b16 %v377, %v376
  %v447 = vpack.c.b16 %v379, %v378
  %v448 = vpack.c.b16 %v381, %v380
  %v449 = vpack.c.b16 %v383, %v382
  %v450 = vpack.c.b16 %v385, %v384
  %v451 = vpack.c.b16 %v387, %v386
  %v452 = vpack.c.b16 %v389, %v388
  %v453 = vpack.c.b16 %v391, %v390
  %v454 = vpack.c.b16 %v393, %v392
  %v455 = vpack.c.b16 %v395, %v394
  %v456 = vpack.c.b16 %v397, %v396
  %v457 = vpack.c.b16 %v399, %v398
  %v458 = vpack.c.b16 %v401, %v400
  %v459 = vpack.c.b16 %v403, %v402
  %v460 = vpack.c.b16 %v405, %v404
  %v461 = vpack.c.b16 %v407, %v406
  %v462 = vpack.c.b16 %v409, %v408
  %v463 = vpack.c.b16 %v411, %v410
  %v464 = vpack.c.b16 %v413, %v412
  %v465 = vpack.c.b16 %v415, %v414
  %v466 = vpack.c.b16 %v417, %v416
  %v467 = vpack.c.b16 %v419, %v418
  %v468 = vpack.c.b16 %v421, %v420
  %v469 = vpack.c.b16 %v423, %v422
  %v470 = vpack.c.b16 %v425, %v424
  %v471 = vpack.c.b16 %v427, %v426
  %v472 = vpack.c.b16 %v429, %v428
  %v473 = vpack.c.b16 %v431, %v430
  %v474 = vpack.c.b16 %v433, %v432
  %v475 = vpack.c.b16 %v435, %v434
  %v476 = vpack.c.b16 %v437, %v436
  %v477 = vpack.c.b16 %v439, %v438
  %v478 = vpack.c.b16 %v441, %v440
  %v479 = vpack.c.b16 %v443, %v442
  %vm516 = vcmask 523264
  %v518 = vsel %vm516, %v241, 0
  %v521 = vsel %vm516, %v246, 0
  %v524 = vsel %vm516, %v251, 0
  %v527 = vsel %vm516, %v256, 0
  %v530 = vsel %vm516, %v261, 0
  %v533 = vsel %vm516, %v266, 0
  %v536 = vsel %vm516, %v271, 0
  %538 = vmatprep.subr.bf16.mxu0 0
  %539 = vmatpush1.bf16.msra.mxu0 %v444
  %540 = vmatprep.subr.bf16.mxu0 0
  %541 = vmatpush1.bf16.msra.mxu0 %v445
  %542 = vmatprep.subr.bf16.mxu0 0
  %543 = vmatpush1.bf16.msra.mxu0 %v446
  %544 = vmatprep.subr.bf16.mxu0 0
  %545 = vmatpush1.bf16.msra.mxu0 %v447
  %546 = vmatprep.subr.bf16.mxu0 0
  %547 = vmatpush1.bf16.msra.mxu0 %v448
  %548 = vmatprep.subr.bf16.mxu0 0
  %549 = vmatpush1.bf16.msra.mxu0 %v449
  %550 = vmatprep.subr.bf16.mxu0 0
  %551 = vmatpush1.bf16.msra.mxu0 %v450
  %552 = vmatprep.subr.bf16.mxu0 0
  %553 = vmatpush1.bf16.msra.mxu0 %v451
  %554 = vmatprep.subr.bf16.mxu0 0
  %555 = vmatpush1.bf16.msra.mxu0 %v452
  %556 = vmatprep.subr.bf16.mxu0 0
  %557 = vmatpush1.bf16.msra.mxu0 %v453
  %558 = vmatprep.subr.bf16.mxu0 0
  %559 = vmatpush1.bf16.msra.mxu0 %v454
  %560 = vmatprep.subr.bf16.mxu0 0
  %561 = vmatpush1.bf16.msra.mxu0 %v455
  %562 = vmatprep.subr.bf16.mxu0 0
  %563 = vmatpush1.bf16.msra.mxu0 %v456
  %564 = vmatprep.subr.bf16.mxu0 0
  %565 = vmatpush1.bf16.msra.mxu0 %v457
  %566 = vmatprep.subr.bf16.mxu0 0
  %567 = vmatpush1.bf16.msra.mxu0 %v458
  %568 = vmatprep.subr.bf16.mxu0 0
  %569 = vmatpush1.bf16.msra.mxu0 %v459
  %570 = vmatprep.mubr.bf16.mxu0 %v238
  %571 = vmatmul.mubr.bf16.gmra.mrb[0].mxu0 %v237
  %v572 = vpop.f32.mrb[0].mxu0
  %v573 = vadd.f32 %v131, %v572
  %v574 = vpop.f32.mrb[0].mxu0
  %v575 = vpop.f32.mrb[0].mxu0
  %v576 = vadd.f32 %v131, %v575
  %v577 = vpop.f32.mrb[0].mxu0
  %578 = vmatprep.mubr.bf16.mxu0 %v243
  %579 = vmatmul.mubr.bf16.gmra.mrb[0].mxu0 %v242
  %v580 = vpop.f32.mrb[0].mxu0
  %v581 = vadd.f32 %v131, %v580
  %v582 = vpop.f32.mrb[0].mxu0
  %v583 = vpop.f32.mrb[0].mxu0
  %v584 = vadd.f32 %v131, %v583
  %v585 = vpop.f32.mrb[0].mxu0
  %586 = vmatprep.mubr.bf16.mxu0 %v248
  %587 = vmatmul.mubr.bf16.gmra.mrb[0].mxu0 %v247
  %v588 = vpop.f32.mrb[0].mxu0
  %v589 = vadd.f32 %v131, %v588
  %v590 = vpop.f32.mrb[0].mxu0
  %v591 = vpop.f32.mrb[0].mxu0
  %v592 = vadd.f32 %v131, %v591
  %v593 = vpop.f32.mrb[0].mxu0
  %594 = vmatprep.mubr.bf16.mxu0 %v253
  %595 = vmatmul.mubr.bf16.gmra.mrb[0].mxu0 %v252
  %v596 = vpop.f32.mrb[0].mxu0
  %v597 = vadd.f32 %v131, %v596
  %v598 = vpop.f32.mrb[0].mxu0
  %v599 = vpop.f32.mrb[0].mxu0
  %v600 = vadd.f32 %v131, %v599
  %v601 = vpop.f32.mrb[0].mxu0
  %602 = vmatprep.mubr.bf16.mxu0 %v258
  %603 = vmatmul.mubr.bf16.gmra.mrb[0].mxu0 %v257
  %v604 = vpop.f32.mrb[0].mxu0
  %v605 = vadd.f32 %v131, %v604
  %v606 = vpop.f32.mrb[0].mxu0
  %v607 = vpop.f32.mrb[0].mxu0
  %v608 = vadd.f32 %v131, %v607
  %v609 = vpop.f32.mrb[0].mxu0
  %610 = vmatprep.mubr.bf16.mxu0 %v263
  %611 = vmatmul.mubr.bf16.gmra.mrb[0].mxu0 %v262
  %v612 = vpop.f32.mrb[0].mxu0
  %v613 = vadd.f32 %v131, %v612
  %v614 = vpop.f32.mrb[0].mxu0
  %v615 = vpop.f32.mrb[0].mxu0
  %v616 = vadd.f32 %v131, %v615
  %v617 = vpop.f32.mrb[0].mxu0
  %618 = vmatprep.mubr.bf16.mxu0 %v268
  %619 = vmatmul.mubr.bf16.gmra.mrb[0].mxu0 %v267
  %v620 = vpop.f32.mrb[0].mxu0
  %v621 = vadd.f32 %v131, %v620
  %v622 = vpop.f32.mrb[0].mxu0
  %v623 = vpop.f32.mrb[0].mxu0
  %v624 = vpop.f32.mrb[0].mxu0
  %625 = vdwg.mxu0
  %626 = vmatprep.subr.bf16.mxu0 0
  %627 = vmatpush1.bf16.msra.mxu0 %v460
  %628 = vmatprep.subr.bf16.mxu0 0
  %629 = vmatpush1.bf16.msra.mxu0 %v461
  %630 = vmatprep.subr.bf16.mxu0 0
  %631 = vmatpush1.bf16.msra.mxu0 %v462
  %632 = vmatprep.subr.bf16.mxu0 0
  %633 = vmatpush1.bf16.msra.mxu0 %v463
  %634 = vmatprep.subr.bf16.mxu0 0
  %635 = vmatpush1.bf16.msra.mxu0 %v464
  %636 = vmatprep.subr.bf16.mxu0 0
  %637 = vmatpush1.bf16.msra.mxu0 %v465
  %638 = vmatprep.subr.bf16.mxu0 0
  %639 = vmatpush1.bf16.msra.mxu0 %v466
  %640 = vmatprep.subr.bf16.mxu0 0
  %641 = vmatpush1.bf16.msra.mxu0 %v467
  %642 = vmatprep.subr.bf16.mxu0 0
  %643 = vmatpush1.bf16.msra.mxu0 %v468
  %644 = vmatprep.subr.bf16.mxu0 0
  %645 = vmatpush1.bf16.msra.mxu0 %v469
  %646 = vmatprep.subr.bf16.mxu0 0
  %647 = vmatpush1.bf16.msra.mxu0 %v470
  %648 = vmatprep.subr.bf16.mxu0 0
  %649 = vmatpush1.bf16.msra.mxu0 %v471
  %650 = vmatprep.subr.bf16.mxu0 0
  %651 = vmatpush1.bf16.msra.mxu0 %v472
  %652 = vmatprep.subr.bf16.mxu0 0
  %653 = vmatpush1.bf16.msra.mxu0 %v473
  %654 = vmatprep.subr.bf16.mxu0 0
  %655 = vmatpush1.bf16.msra.mxu0 %v474
  %656 = vmatprep.subr.bf16.mxu0 0
  %657 = vmatpush1.bf16.msra.mxu0 %v475
  %658 = vmatprep.mubr.bf16.mxu0 %v240
  %659 = vmatmul.mubr.bf16.gmra.mrb[0].mxu0 %v239
  %v660 = vpop.f32.mrb[0].mxu0
  %v661 = vadd.f32 %v573, %v660
  %v662 = vpop.f32.mrb[0].mxu0
  %v663 = vpop.f32.mrb[0].mxu0
  %v664 = vadd.f32 %v576, %v663
  %v665 = vpop.f32.mrb[0].mxu0
  %666 = vmatprep.mubr.bf16.mxu0 %v245
  %667 = vmatmul.mubr.bf16.gmra.mrb[0].mxu0 %v244
  %v668 = vpop.f32.mrb[0].mxu0
  %v669 = vadd.f32 %v581, %v668
  %v670 = vpop.f32.mrb[0].mxu0
  %v671 = vpop.f32.mrb[0].mxu0
  %v672 = vadd.f32 %v584, %v671
  %v673 = vpop.f32.mrb[0].mxu0
  %674 = vmatprep.mubr.bf16.mxu0 %v250
  %675 = vmatmul.mubr.bf16.gmra.mrb[0].mxu0 %v249
  %v676 = vpop.f32.mrb[0].mxu0
  %v677 = vadd.f32 %v589, %v676
  %v678 = vpop.f32.mrb[0].mxu0
  %v679 = vpop.f32.mrb[0].mxu0
  %v680 = vadd.f32 %v592, %v679
  %v681 = vpop.f32.mrb[0].mxu0
  %682 = vmatprep.mubr.bf16.mxu0 %v255
  %683 = vmatmul.mubr.bf16.gmra.mrb[0].mxu0 %v254
  %v684 = vpop.f32.mrb[0].mxu0
  %v685 = vadd.f32 %v597, %v684
  %v686 = vpop.f32.mrb[0].mxu0
  %v687 = vpop.f32.mrb[0].mxu0
  %v688 = vadd.f32 %v600, %v687
  %v689 = vpop.f32.mrb[0].mxu0
  %690 = vmatprep.mubr.bf16.mxu0 %v260
  %691 = vmatmul.mubr.bf16.gmra.mrb[0].mxu0 %v259
  %v692 = vpop.f32.mrb[0].mxu0
  %v693 = vadd.f32 %v605, %v692
  %v694 = vpop.f32.mrb[0].mxu0
  %v695 = vpop.f32.mrb[0].mxu0
  %v696 = vadd.f32 %v608, %v695
  %v697 = vpop.f32.mrb[0].mxu0
  %698 = vmatprep.mubr.bf16.mxu0 %v265
  %699 = vmatmul.mubr.bf16.gmra.mrb[0].mxu0 %v264
  %v700 = vpop.f32.mrb[0].mxu0
  %v701 = vadd.f32 %v613, %v700
  %v702 = vpop.f32.mrb[0].mxu0
  %v703 = vpop.f32.mrb[0].mxu0
  %v704 = vadd.f32 %v616, %v703
  %v705 = vpop.f32.mrb[0].mxu0
  %706 = vmatprep.mubr.bf16.mxu0 %v270
  %707 = vmatmul.mubr.bf16.gmra.mrb[0].mxu0 %v269
  %v708 = vpop.f32.mrb[0].mxu0
  %v709 = vadd.f32 %v621, %v708
  %v710 = vpop.f32.mrb[0].mxu0
  %v711 = vpop.f32.mrb[0].mxu0
  %v712 = vpop.f32.mrb[0].mxu0
  %713 = vdwg.mxu0
  %714 = vmatprep.subr.bf16.mxu0 0
  %715 = vmatpush1.bf16.msra.mxu0 %v476
  %716 = vmatprep.subr.bf16.mxu0 0
  %717 = vmatpush1.bf16.msra.mxu0 %v477
  %718 = vmatprep.subr.bf16.mxu0 0
  %719 = vmatpush1.bf16.msra.mxu0 %v478
  %720 = vmatprep.subr.bf16.mxu0 0
  %721 = vmatpush1.bf16.msra.mxu0 %v479
  %722 = vmatprep.subr.bf16.mxu0 0
  %723 = vmatpush1.bf16.msra.mxu0 0
  %724 = vmatprep.subr.bf16.mxu0 0
  %725 = vmatpush1.bf16.msra.mxu0 0
  %726 = vmatprep.subr.bf16.mxu0 0
  %727 = vmatpush1.bf16.msra.mxu0 0
  %728 = vmatprep.subr.bf16.mxu0 0
  %729 = vmatpush1.bf16.msra.mxu0 0
  %730 = vmatprep.subr.bf16.mxu0 0
  %731 = vmatpush1.bf16.msra.mxu0 0
  %732 = vmatprep.subr.bf16.mxu0 0
  %733 = vmatpush1.bf16.msra.mxu0 0
  %734 = vmatprep.subr.bf16.mxu0 0
  %735 = vmatpush1.bf16.msra.mxu0 0
  %736 = vmatprep.subr.bf16.mxu0 0
  %737 = vmatpush1.bf16.msra.mxu0 0
  %738 = vmatprep.subr.bf16.mxu0 0
  %739 = vmatpush1.bf16.msra.mxu0 0
  %740 = vmatprep.subr.bf16.mxu0 0
  %741 = vmatpush1.bf16.msra.mxu0 0
  %742 = vmatprep.subr.bf16.mxu0 0
  %743 = vmatpush1.bf16.msra.mxu0 0
  %744 = vmatprep.subr.bf16.mxu0 0
  %745 = vmatpush1.bf16.msra.mxu0 0
  %746 = vmatprep.mubr.bf16.mxu0 0
  %747 = vmatmul.mubr.bf16.gmra.mrb[0].mxu0 %v518
  %v748 = vpop.f32.mrb[0].mxu0
  %v749 = vadd.f32 %v661, %v748
  %v750 = vpop.f32.mrb[0].mxu0
  %v751 = vpop.f32.mrb[0].mxu0
  %v752 = vadd.f32 %v664, %v751
  %v753 = vpop.f32.mrb[0].mxu0
  %754 = vmatprep.mubr.bf16.mxu0 0
  %755 = vmatmul.mubr.bf16.gmra.mrb[0].mxu0 %v521
  %v756 = vpop.f32.mrb[0].mxu0
  %v757 = vadd.f32 %v669, %v756
  %v758 = vpop.f32.mrb[0].mxu0
  %v759 = vpop.f32.mrb[0].mxu0
  %v760 = vadd.f32 %v672, %v759
  %v761 = vpop.f32.mrb[0].mxu0
  %762 = vmatprep.mubr.bf16.mxu0 0
  %763 = vmatmul.mubr.bf16.gmra.mrb[0].mxu0 %v524
  %v764 = vpop.f32.mrb[0].mxu0
  %v765 = vadd.f32 %v677, %v764
  %v766 = vpop.f32.mrb[0].mxu0
  %v767 = vpop.f32.mrb[0].mxu0
  %v768 = vadd.f32 %v680, %v767
  %v769 = vpop.f32.mrb[0].mxu0
  %770 = vmatprep.mubr.bf16.mxu0 0
  %771 = vmatmul.mubr.bf16.gmra.mrb[0].mxu0 %v527
  %v772 = vpop.f32.mrb[0].mxu0
  %v773 = vadd.f32 %v685, %v772
  %v774 = vpop.f32.mrb[0].mxu0
  %v775 = vpop.f32.mrb[0].mxu0
  %v776 = vadd.f32 %v688, %v775
  %v777 = vpop.f32.mrb[0].mxu0
  %778 = vmatprep.mubr.bf16.mxu0 0
  %779 = vmatmul.mubr.bf16.gmra.mrb[0].mxu0 %v530
  %v780 = vpop.f32.mrb[0].mxu0
  %v781 = vadd.f32 %v693, %v780
  %v782 = vpop.f32.mrb[0].mxu0
  %v783 = vpop.f32.mrb[0].mxu0
  %v784 = vadd.f32 %v696, %v783
  %v785 = vpop.f32.mrb[0].mxu0
  %786 = vmatprep.mubr.bf16.mxu0 0
  %787 = vmatmul.mubr.bf16.gmra.mrb[0].mxu0 %v533
  %v788 = vpop.f32.mrb[0].mxu0
  %v789 = vadd.f32 %v701, %v788
  %v790 = vpop.f32.mrb[0].mxu0
  %v791 = vpop.f32.mrb[0].mxu0
  %v792 = vadd.f32 %v704, %v791
  %v793 = vpop.f32.mrb[0].mxu0
  %794 = vmatprep.mubr.bf16.mxu0 0
  %795 = vmatmul.mubr.bf16.gmra.mrb[0].mxu0 %v536
  %v796 = vpop.f32.mrb[0].mxu0
  %v797 = vadd.f32 %v709, %v796
  %v798 = vpop.f32.mrb[0].mxu0
  %v799 = vpop.f32.mrb[0].mxu0
  %v800 = vpop.f32.mrb[0].mxu0
  %801 = vdwg.mxu0
  %v802 = vmax.f32 %v749, 0.0
  %v803 = vmax.f32 %v752, 0.0
  %v804 = vmax.f32 %v757, 0.0
  %v805 = vmax.f32 %v760, 0.0
  %v806 = vmax.f32 %v765, 0.0
  %v807 = vmax.f32 %v768, 0.0
  %v808 = vmax.f32 %v773, 0.0
  %v809 = vmax.f32 %v776, 0.0
  %v810 = vmax.f32 %v781, 0.0
  %v811 = vmax.f32 %v784, 0.0
  %v812 = vmax.f32 %v789, 0.0
  %v813 = vmax.f32 %v792, 0.0
  %v814 = vmax.f32 %v797, 0.0
  %v815 = vpack.c.bf16 %v803, %v802
  %v816 = vpack.c.bf16 %v805, %v804
  %v817 = vpack.c.bf16 %v807, %v806
  %v818 = vpack.c.bf16 %v809, %v808
  %v819 = vpack.c.bf16 %v811, %v810
  %v820 = vpack.c.bf16 %v813, %v812
  %v821 = vpack.c.bf16 %v814, %v814
  %v829 = vunpack.c.l.b16 %v815
  %v830 = vunpack.c.h.b16 %v815
  %v831 = vunpack.c.l.b16 %v816
  %v832 = vunpack.c.h.b16 %v816
  %v833 = vunpack.c.l.b16 %v817
  %v834 = vunpack.c.h.b16 %v817
  %v835 = vunpack.c.l.b16 %v818
  %v836 = vunpack.c.h.b16 %v818
  %v837 = vunpack.c.l.b16 %v819
  %v838 = vunpack.c.h.b16 %v819
  %v839 = vunpack.c.l.b16 %v820
  %v840 = vunpack.c.h.b16 %v820
  %v841 = vunpack.c.l.b16 %v821
  %v842 = vpack.c.b16 %v829, %v829
  %v843 = vpack.c.b16 %v830, %v830
  %v844 = vpack.c.b16 %v831, %v831
  %v845 = vpack.c.b16 %v832, %v832
  %v846 = vpack.c.b16 %v833, %v833
  %v847 = vpack.c.b16 %v834, %v834
  %v848 = vpack.c.b16 %v835, %v835
  %v849 = vpack.c.b16 %v836, %v836
  %v850 = vpack.c.b16 %v837, %v837
  %v851 = vpack.c.b16 %v838, %v838
  %v852 = vpack.c.b16 %v839, %v839
  %v853 = vpack.c.b16 %v840, %v840
  %v854 = vpack.c.b16 %v841, %v841
  %868 = vst [vmem:[%s3] sm:$0xf] %v842
  %869 = vst [vmem:[%s3 + $0x4] sm:$0xf] %v843
  %870 = vst [vmem:[%s3 + $0x8] sm:$0xf] %v844
  %871 = vst [vmem:[%s3 + $0xc] sm:$0xf] %v845
  %872 = vst [vmem:[%s3 + $0x10] sm:$0xf] %v846
  %873 = vst [vmem:[%s3 + $0x14] sm:$0xf] %v847
  %874 = vst [vmem:[%s3 + $0x18] sm:$0xf] %v848
  %875 = vst [vmem:[%s3 + $0x1c] sm:$0xf] %v849
  %876 = vst [vmem:[%s3 + $0x20] sm:$0xf] %v850
  %877 = vst [vmem:[%s3 + $0x24] sm:$0xf] %v851
  %878 = vst [vmem:[%s3 + $0x28] sm:$0xf] %v852
  %879 = vst [vmem:[%s3 + $0x2c] sm:$0xf] %v853
  %880 = vst [vmem:[%s3 + $0x30] sm:$0xf] %v854
  // Predicated region
  $region14: #{nature_cnn_forward.6} parent=0 // pred_check
    _
  $region15: #{nature_cnn_forward.6} parent=0 // pred_check_branch
    %882 = sbr.rel (0) target = $region17
  $region16: #{nature_cnn_forward.6} parent=0 // pred_region
    _
  $region17: #{nature_cnn_forward.6} parent=0 // pred_fallthru
    _
  // Predicated region
  $region18: #{nature_cnn_forward.6} parent=0 // pred_check
    _
  $region19: #{nature_cnn_forward.6} parent=0 // pred_check_branch
    %884 = sbr.rel (0) target = $region21
  $region20: #{nature_cnn_forward.6} parent=0 // pred_region
    _
  $region21: #{nature_cnn_forward.6} parent=0 // pred_fallthru
    _

// kernel: nature_cnn_forward.7
$region0: #{nature_cnn_forward.7}
  #allocation0 [shape = 'u32[]', space=smem, size = 0x4, offset = 0x4, fixed_abs, tag = 'smem constant byte address 0x4 - core index']
  #allocation1 [shape = 'u32[144,128]{1,0:T(1,128)}', space=vmem, size = 0x12000, scoped, tag = 'internal scratch']
  %s0 = inlined_call_operand.vmem [shape: bf16[8,6272], index: 0, kind: input, shape index: {}]
  %s1 = inlined_call_operand.vmem [shape: bf16[6272,128], index: 1, kind: input, shape index: {}]
  %s2 = inlined_call_operand.vmem [shape: f32[1,128], index: 2, kind: input, shape index: {}]
  %s3 = inlined_call_operand.vmem [shape: f32[128,128], index: 3, kind: input, shape index: {}]
  %s4 = inlined_call_operand.vmem [shape: f32[1,128], index: 4, kind: input, shape index: {}]
  %s5 = inlined_call_operand.vmem [shape: f32[8,128], index: 5, kind: output, shape index: {}]
  %s6 = sld [smem:[#allocation0]]
  $region30: #{nature_cnn_forward.7} parent=0
    _
  %s8 = ssub.s32 1, %s6
  %s9 = scalar_select 0, %s8, %s6
  // Predicated region
  $region2: #{nature_cnn_forward.7} parent=0 // pred_check
    _
  $region3: #{nature_cnn_forward.7} parent=0 // pred_check_branch
    %11 = sbr.rel (0) target = $region5
  $region4: #{nature_cnn_forward.7} parent=0 // pred_region
    _
  $region5: #{nature_cnn_forward.7} parent=0 // pred_fallthru
    _
  // Predicated region
  $region6: #{nature_cnn_forward.7} parent=0 // pred_check
    _
  $region7: #{nature_cnn_forward.7} parent=0 // pred_check_branch
    %13 = sbr.rel (0) target = $region9
  $region8: #{nature_cnn_forward.7} parent=0 // pred_region
    _
  $region9: #{nature_cnn_forward.7} parent=0 // pred_fallthru
    _
  // Predicated region
  $region10: #{nature_cnn_forward.7} parent=0 // pred_check
    _
  $region11: #{nature_cnn_forward.7} parent=0 // pred_check_branch
    %15 = sbr.rel (0) target = $region13
  $region12: #{nature_cnn_forward.7} parent=0 // pred_region
    _
  $region13: #{nature_cnn_forward.7} parent=0 // pred_fallthru
    _
  // Predicated region
  $region14: #{nature_cnn_forward.7} parent=0 // pred_check
    _
  $region15: #{nature_cnn_forward.7} parent=0 // pred_check_branch
    %17 = sbr.rel (0) target = $region17
  $region16: #{nature_cnn_forward.7} parent=0 // pred_region
    _
  $region17: #{nature_cnn_forward.7} parent=0 // pred_fallthru
    _
  // Predicated region
  $region18: #{nature_cnn_forward.7} parent=0 // pred_check
    _
  $region19: #{nature_cnn_forward.7} parent=0 // pred_check_branch
    %19 = sbr.rel (0) target = $region21
  $region20: #{nature_cnn_forward.7} parent=0 // pred_region
    _
  $region21: #{nature_cnn_forward.7} parent=0 // pred_fallthru
    _
  %v21 = vld [vmem:[%s0] sm:$0xff]
  %v22 = vld [vmem:[%s0 + $0x8] sm:$0xff]
  %v23 = vld [vmem:[%s0 + $0x10] sm:$0xff]
  %v24 = vld [vmem:[%s0 + $0x18] sm:$0xff]
  %v25 = vld [vmem:[%s0 + $0x20] sm:$0xff]
  %v26 = vld [vmem:[%s0 + $0x28] sm:$0xff]
  %v27 = vld [vmem:[%s0 + $0x30] sm:$0xff]
  %v28 = vld [vmem:[%s0 + $0x38] sm:$0xff]
  %v29 = vld [vmem:[%s0 + $0x40] sm:$0xff]
  %v30 = vld [vmem:[%s0 + $0x48] sm:$0xff]
  %v31 = vld [vmem:[%s0 + $0x50] sm:$0xff]
  %v32 = vld [vmem:[%s0 + $0x58] sm:$0xff]
  %v33 = vld [vmem:[%s0 + $0x60] sm:$0xff]
  %v34 = vld [vmem:[%s0 + $0x68] sm:$0xff]
  %v35 = vld [vmem:[%s0 + $0x70] sm:$0xff]
  %v36 = vld [vmem:[%s0 + $0x78] sm:$0xff]
  %v37 = vld [vmem:[%s0 + $0x80] sm:$0xff]
  %v38 = vld [vmem:[%s0 + $0x88] sm:$0xff]
  %v39 = vld [vmem:[%s0 + $0x90] sm:$0xff]
  %v40 = vld [vmem:[%s0 + $0x98] sm:$0xff]
  %v41 = vld [vmem:[%s0 + $0xa0] sm:$0xff]
  %v42 = vld [vmem:[%s0 + $0xa8] sm:$0xff]
  %v43 = vld [vmem:[%s0 + $0xb0] sm:$0xff]
  %v44 = vld [vmem:[%s0 + $0xb8] sm:$0xff]
  %v45 = vld [vmem:[%s0 + $0xc0] sm:$0xf]
  %v46 = vld [vmem:[%s1] sm:$0xf]
  %v47 = vld [vmem:[%s1 + $0x4] sm:$0xf]
  %v48 = vld [vmem:[%s1 + $0x8] sm:$0xf]
  %v49 = vld [vmem:[%s1 + $0xc] sm:$0xf]
  %v50 = vld [vmem:[%s1 + $0x10] sm:$0xf]
  %v51 = vld [vmem:[%s1 + $0x14] sm:$0xf]
  %v52 = vld [vmem:[%s1 + $0x18] sm:$0xf]
  %v53 = vld [vmem:[%s1 + $0x1c] sm:$0xf]
  %v54 = vld [vmem:[%s1 + $0x20] sm:$0xf]
  %v55 = vld [vmem:[%s1 + $0x24] sm:$0xf]
  %v56 = vld [vmem:[%s1 + $0x28] sm:$0xf]
  %v57 = vld [vmem:[%s1 + $0x2c] sm:$0xf]
  %v58 = vld [vmem:[%s1 + $0x30] sm:$0xf]
  %v59 = vld [vmem:[%s1 + $0x34] sm:$0xf]
  %v60 = vld [vmem:[%s1 + $0x38] sm:$0xf]
  %v61 = vld [vmem:[%s1 + $0x3c] sm:$0xf]
  %v62 = vld [vmem:[%s1 + $0x40] sm:$0xf]
  %v63 = vld [vmem:[%s1 + $0x44] sm:$0xf]
  %v64 = vld [vmem:[%s1 + $0x48] sm:$0xf]
  %v65 = vld [vmem:[%s1 + $0x4c] sm:$0xf]
  %v66 = vld [vmem:[%s1 + $0x50] sm:$0xf]
  %v67 = vld [vmem:[%s1 + $0x54] sm:$0xf]
  %v68 = vld [vmem:[%s1 + $0x58] sm:$0xf]
  %v69 = vld [vmem:[%s1 + $0x5c] sm:$0xf]
  %v70 = vld [vmem:[%s1 + $0x60] sm:$0xf]
  %v71 = vld [vmem:[%s1 + $0x64] sm:$0xf]
  %v72 = vld [vmem:[%s1 + $0x68] sm:$0xf]
  %v73 = vld [vmem:[%s1 + $0x6c] sm:$0xf]
  %v74 = vld [vmem:[%s1 + $0x70] sm:$0xf]
  %v75 = vld [vmem:[%s1 + $0x74] sm:$0xf]
  %v76 = vld [vmem:[%s1 + $0x78] sm:$0xf]
  %v77 = vld [vmem:[%s1 + $0x7c] sm:$0xf]
  %v78 = vld [vmem:[%s1 + $0x80] sm:$0xf]
  %v79 = vld [vmem:[%s1 + $0x84] sm:$0xf]
  %v80 = vld [vmem:[%s1 + $0x88] sm:$0xf]
  %v81 = vld [vmem:[%s1 + $0x8c] sm:$0xf]
  %v82 = vld [vmem:[%s1 + $0x90] sm:$0xf]
  %v83 = vld [vmem:[%s1 + $0x94] sm:$0xf]
  %v84 = vld [vmem:[%s1 + $0x98] sm:$0xf]
  %v85 = vld [vmem:[%s1 + $0x9c] sm:$0xf]
  %v86 = vld [vmem:[%s1 + $0xa0] sm:$0xf]
  %v87 = vld [vmem:[%s1 + $0xa4] sm:$0xf]
  %v88 = vld [vmem:[%s1 + $0xa8] sm:$0xf]
  %v89 = vld [vmem:[%s1 + $0xac] sm:$0xf]
  %v90 = vld [vmem:[%s1 + $0xb0] sm:$0xf]
  %v91 = vld [vmem:[%s1 + $0xb4] sm:$0xf]
  %v92 = vld [vmem:[%s1 + $0xb8] sm:$0xf]
  %v93 = vld [vmem:[%s1 + $0xbc] sm:$0xf]
  %v94 = vld [vmem:[%s1 + $0xc0] sm:$0xf]
  %v95 = vld [vmem:[%s1 + $0xc4] sm:$0xf]
  %v96 = vld [vmem:[%s1 + $0xc8] sm:$0xf]
  %v97 = vld [vmem:[%s1 + $0xcc] sm:$0xf]
  %v98 = vld [vmem:[%s1 + $0xd0] sm:$0xf]
  %v99 = vld [vmem:[%s1 + $0xd4] sm:$0xf]
  %v100 = vld [vmem:[%s1 + $0xd8] sm:$0xf]
  %v101 = vld [vmem:[%s1 + $0xdc] sm:$0xf]
  %v102 = vld [vmem:[%s1 + $0xe0] sm:$0xf]
  %v103 = vld [vmem:[%s1 + $0xe4] sm:$0xf]
  %v104 = vld [vmem:[%s1 + $0xe8] sm:$0xf]
  %v105 = vld [vmem:[%s1 + $0xec] sm:$0xf]
  %v106 = vld [vmem:[%s1 + $0xf0] sm:$0xf]
  %v107 = vld [vmem:[%s1 + $0xf4] sm:$0xf]
  %v108 = vld [vmem:[%s1 + $0xf8] sm:$0xf]
  %v109 = vld [vmem:[%s1 + $0xfc] sm:$0xf]
  %v110 = vld [vmem:[%s1 + $0x100] sm:$0xf]
  %v111 = vld [vmem:[%s1 + $0x104] sm:$0xf]
  %v112 = vld [vmem:[%s1 + $0x108] sm:$0xf]
  %v113 = vld [vmem:[%s1 + $0x10c] sm:$0xf]
  %v114 = vld [vmem:[%s1 + $0x110] sm:$0xf]
  %v115 = vld [vmem:[%s1 + $0x114] sm:$0xf]
  %v116 = vld [vmem:[%s1 + $0x118] sm:$0xf]
  %v117 = vld [vmem:[%s1 + $0x11c] sm:$0xf]
  %v118 = vld [vmem:[%s1 + $0x120] sm:$0xf]
  %v119 = vld [vmem:[%s1 + $0x124] sm:$0xf]
  %v120 = vld [vmem:[%s1 + $0x128] sm:$0xf]
  %v121 = vld [vmem:[%s1 + $0x12c] sm:$0xf]
  %v122 = vld [vmem:[%s1 + $0x130] sm:$0xf]
  %v123 = vld [vmem:[%s1 + $0x134] sm:$0xf]
  %v124 = vld [vmem:[%s1 + $0x138] sm:$0xf]
  %v125 = vld [vmem:[%s1 + $0x13c] sm:$0xf]
  %v126 = vld [vmem:[%s1 + $0x140] sm:$0xf]
  %v127 = vld [vmem:[%s1 + $0x144] sm:$0xf]
  %v128 = vld [vmem:[%s1 + $0x148] sm:$0xf]
  %v129 = vld [vmem:[%s1 + $0x14c] sm:$0xf]
  %v130 = vld [vmem:[%s1 + $0x150] sm:$0xf]
  %v131 = vld [vmem:[%s1 + $0x154] sm:$0xf]
  %v132 = vld [vmem:[%s1 + $0x158] sm:$0xf]
  %v133 = vld [vmem:[%s1 + $0x15c] sm:$0xf]
  %v134 = vld [vmem:[%s1 + $0x160] sm:$0xf]
  %v135 = vld [vmem:[%s1 + $0x164] sm:$0xf]
  %v136 = vld [vmem:[%s1 + $0x168] sm:$0xf]
  %v137 = vld [vmem:[%s1 + $0x16c] sm:$0xf]
  %v138 = vld [vmem:[%s1 + $0x170] sm:$0xf]
  %v139 = vld [vmem:[%s1 + $0x174] sm:$0xf]
  %v140 = vld [vmem:[%s1 + $0x178] sm:$0xf]
  %v141 = vld [vmem:[%s1 + $0x17c] sm:$0xf]
  %v142 = vld [vmem:[%s1 + $0x180] sm:$0xf]
  %v143 = vld [vmem:[%s1 + $0x184] sm:$0xf]
  %v144 = vld [vmem:[%s1 + $0x188] sm:$0xf]
  %v145 = vld [vmem:[%s1 + $0x18c] sm:$0xf]
  %v146 = vld [vmem:[%s1 + $0x190] sm:$0xf]
  %v147 = vld [vmem:[%s1 + $0x194] sm:$0xf]
  %v148 = vld [vmem:[%s1 + $0x198] sm:$0xf]
  %v149 = vld [vmem:[%s1 + $0x19c] sm:$0xf]
  %v150 = vld [vmem:[%s1 + $0x1a0] sm:$0xf]
  %v151 = vld [vmem:[%s1 + $0x1a4] sm:$0xf]
  %v152 = vld [vmem:[%s1 + $0x1a8] sm:$0xf]
  %v153 = vld [vmem:[%s1 + $0x1ac] sm:$0xf]
  %v154 = vld [vmem:[%s1 + $0x1b0] sm:$0xf]
  %v155 = vld [vmem:[%s1 + $0x1b4] sm:$0xf]
  %v156 = vld [vmem:[%s1 + $0x1b8] sm:$0xf]
  %v157 = vld [vmem:[%s1 + $0x1bc] sm:$0xf]
  %v158 = vld [vmem:[%s1 + $0x1c0] sm:$0xf]
  %v159 = vld [vmem:[%s1 + $0x1c4] sm:$0xf]
  %v160 = vld [vmem:[%s1 + $0x1c8] sm:$0xf]
  %v161 = vld [vmem:[%s1 + $0x1cc] sm:$0xf]
  %v162 = vld [vmem:[%s1 + $0x1d0] sm:$0xf]
  %v163 = vld [vmem:[%s1 + $0x1d4] sm:$0xf]
  %v164 = vld [vmem:[%s1 + $0x1d8] sm:$0xf]
  %v165 = vld [vmem:[%s1 + $0x1dc] sm:$0xf]
  %v166 = vld [vmem:[%s1 + $0x1e0] sm:$0xf]
  %v167 = vld [vmem:[%s1 + $0x1e4] sm:$0xf]
  %v168 = vld [vmem:[%s1 + $0x1e8] sm:$0xf]
  %v169 = vld [vmem:[%s1 + $0x1ec] sm:$0xf]
  %v170 = vld [vmem:[%s1 + $0x1f0] sm:$0xf]
  %v171 = vld [vmem:[%s1 + $0x1f4] sm:$0xf]
  %v172 = vld [vmem:[%s1 + $0x1f8] sm:$0xf]
  %v173 = vld [vmem:[%s1 + $0x1fc] sm:$0xf]
  %v174 = vld [vmem:[%s1 + $0x200] sm:$0xf]
  %v175 = vld [vmem:[%s1 + $0x204] sm:$0xf]
  %v176 = vld [vmem:[%s1 + $0x208] sm:$0xf]
  %v177 = vld [vmem:[%s1 + $0x20c] sm:$0xf]
  %v178 = vld [vmem:[%s1 + $0x210] sm:$0xf]
  %v179 = vld [vmem:[%s1 + $0x214] sm:$0xf]
  %v180 = vld [vmem:[%s1 + $0x218] sm:$0xf]
  %v181 = vld [vmem:[%s1 + $0x21c] sm:$0xf]
  %v182 = vld [vmem:[%s1 + $0x220] sm:$0xf]
  %v183 = vld [vmem:[%s1 + $0x224] sm:$0xf]
  %v184 = vld [vmem:[%s1 + $0x228] sm:$0xf]
  %v185 = vld [vmem:[%s1 + $0x22c] sm:$0xf]
  %v186 = vld [vmem:[%s1 + $0x230] sm:$0xf]
  %v187 = vld [vmem:[%s1 + $0x234] sm:$0xf]
  %v188 = vld [vmem:[%s1 + $0x238] sm:$0xf]
  %v189 = vld [vmem:[%s1 + $0x23c] sm:$0xf]
  %v190 = vld [vmem:[%s1 + $0x240] sm:$0xf]
  %v191 = vld [vmem:[%s1 + $0x244] sm:$0xf]
  %v192 = vld [vmem:[%s1 + $0x248] sm:$0xf]
  %v193 = vld [vmem:[%s1 + $0x24c] sm:$0xf]
  %v194 = vld [vmem:[%s1 + $0x250] sm:$0xf]
  %v195 = vld [vmem:[%s1 + $0x254] sm:$0xf]
  %v196 = vld [vmem:[%s1 + $0x258] sm:$0xf]
  %v197 = vld [vmem:[%s1 + $0x25c] sm:$0xf]
  %v198 = vld [vmem:[%s1 + $0x260] sm:$0xf]
  %v199 = vld [vmem:[%s1 + $0x264] sm:$0xf]
  %v200 = vld [vmem:[%s1 + $0x268] sm:$0xf]
  %v201 = vld [vmem:[%s1 + $0x26c] sm:$0xf]
  %v202 = vld [vmem:[%s1 + $0x270] sm:$0xf]
  %v203 = vld [vmem:[%s1 + $0x274] sm:$0xf]
  %v204 = vld [vmem:[%s1 + $0x278] sm:$0xf]
  %v205 = vld [vmem:[%s1 + $0x27c] sm:$0xf]
  %v206 = vld [vmem:[%s1 + $0x280] sm:$0xf]
  %v207 = vld [vmem:[%s1 + $0x284] sm:$0xf]
  %v208 = vld [vmem:[%s1 + $0x288] sm:$0xf]
  %v209 = vld [vmem:[%s1 + $0x28c] sm:$0xf]
  %v210 = vld [vmem:[%s1 + $0x290] sm:$0xf]
  %v211 = vld [vmem:[%s1 + $0x294] sm:$0xf]
  %v212 = vld [vmem:[%s1 + $0x298] sm:$0xf]
  %v213 = vld [vmem:[%s1 + $0x29c] sm:$0xf]
  %v214 = vld [vmem:[%s1 + $0x2a0] sm:$0xf]
  %v215 = vld [vmem:[%s1 + $0x2a4] sm:$0xf]
  %v216 = vld [vmem:[%s1 + $0x2a8] sm:$0xf]
  %v217 = vld [vmem:[%s1 + $0x2ac] sm:$0xf]
  %v218 = vld [vmem:[%s1 + $0x2b0] sm:$0xf]
  %v219 = vld [vmem:[%s1 + $0x2b4] sm:$0xf]
  %v220 = vld [vmem:[%s1 + $0x2b8] sm:$0xf]
  %v221 = vld [vmem:[%s1 + $0x2bc] sm:$0xf]
  %v222 = vld [vmem:[%s1 + $0x2c0] sm:$0xf]
  %v223 = vld [vmem:[%s1 + $0x2c4] sm:$0xf]
  %v224 = vld [vmem:[%s1 + $0x2c8] sm:$0xf]
  %v225 = vld [vmem:[%s1 + $0x2cc] sm:$0xf]
  %v226 = vld [vmem:[%s1 + $0x2d0] sm:$0xf]
  %v227 = vld [vmem:[%s1 + $0x2d4] sm:$0xf]
  %v228 = vld [vmem:[%s1 + $0x2d8] sm:$0xf]
  %v229 = vld [vmem:[%s1 + $0x2dc] sm:$0xf]
  %v230 = vld [vmem:[%s1 + $0x2e0] sm:$0xf]
  %v231 = vld [vmem:[%s1 + $0x2e4] sm:$0xf]
  %v232 = vld [vmem:[%s1 + $0x2e8] sm:$0xf]
  %v233 = vld [vmem:[%s1 + $0x2ec] sm:$0xf]
  %v234 = vld [vmem:[%s1 + $0x2f0] sm:$0xf]
  %v235 = vld [vmem:[%s1 + $0x2f4] sm:$0xf]
  %v236 = vld [vmem:[%s1 + $0x2f8] sm:$0xf]
  %v237 = vld [vmem:[%s1 + $0x2fc] sm:$0xf]
  %v238 = vld [vmem:[%s1 + $0x300] sm:$0xf]
  %v239 = vld [vmem:[%s1 + $0x304] sm:$0xf]
  %v240 = vld [vmem:[%s1 + $0x308] sm:$0xf]
  %v241 = vld [vmem:[%s1 + $0x30c] sm:$0xf]
  %v242 = vld [vmem:[%s1 + $0x310] sm:$0xf]
  %v243 = vld [vmem:[%s1 + $0x314] sm:$0xf]
  %v244 = vld [vmem:[%s1 + $0x318] sm:$0xf]
  %v245 = vld [vmem:[%s1 + $0x31c] sm:$0xf]
  %v246 = vld [vmem:[%s1 + $0x320] sm:$0xf]
  %v247 = vld [vmem:[%s1 + $0x324] sm:$0xf]
  %v248 = vld [vmem:[%s1 + $0x328] sm:$0xf]
  %v249 = vld [vmem:[%s1 + $0x32c] sm:$0xf]
  %v250 = vld [vmem:[%s1 + $0x330] sm:$0xf]
  %v251 = vld [vmem:[%s1 + $0x334] sm:$0xf]
  %v252 = vld [vmem:[%s1 + $0x338] sm:$0xf]
  %v253 = vld [vmem:[%s1 + $0x33c] sm:$0xf]
  %v254 = vld [vmem:[%s1 + $0x340] sm:$0xf]
  %v255 = vld [vmem:[%s1 + $0x344] sm:$0xf]
  %v256 = vld [vmem:[%s1 + $0x348] sm:$0xf]
  %v257 = vld [vmem:[%s1 + $0x34c] sm:$0xf]
  %v258 = vld [vmem:[%s1 + $0x350] sm:$0xf]
  %v259 = vld [vmem:[%s1 + $0x354] sm:$0xf]
  %v260 = vld [vmem:[%s1 + $0x358] sm:$0xf]
  %v261 = vld [vmem:[%s1 + $0x35c] sm:$0xf]
  %v262 = vld [vmem:[%s1 + $0x360] sm:$0xf]
  %v263 = vld [vmem:[%s1 + $0x364] sm:$0xf]
  %v264 = vld [vmem:[%s1 + $0x368] sm:$0xf]
  %v265 = vld [vmem:[%s1 + $0x36c] sm:$0xf]
  %v266 = vld [vmem:[%s1 + $0x370] sm:$0xf]
  %v267 = vld [vmem:[%s1 + $0x374] sm:$0xf]
  %v268 = vld [vmem:[%s1 + $0x378] sm:$0xf]
  %v269 = vld [vmem:[%s1 + $0x37c] sm:$0xf]
  %v270 = vld [vmem:[%s1 + $0x380] sm:$0xf]
  %v271 = vld [vmem:[%s1 + $0x384] sm:$0xf]
  %v272 = vld [vmem:[%s1 + $0x388] sm:$0xf]
  %v273 = vld [vmem:[%s1 + $0x38c] sm:$0xf]
  %v274 = vld [vmem:[%s1 + $0x390] sm:$0xf]
  %v275 = vld [vmem:[%s1 + $0x394] sm:$0xf]
  %v276 = vld [vmem:[%s1 + $0x398] sm:$0xf]
  %v277 = vld [vmem:[%s1 + $0x39c] sm:$0xf]
  %v278 = vld [vmem:[%s1 + $0x3a0] sm:$0xf]
  %v279 = vld [vmem:[%s1 + $0x3a4] sm:$0xf]
  %v280 = vld [vmem:[%s1 + $0x3a8] sm:$0xf]
  %v281 = vld [vmem:[%s1 + $0x3ac] sm:$0xf]
  %v282 = vld [vmem:[%s1 + $0x3b0] sm:$0xf]
  %v283 = vld [vmem:[%s1 + $0x3b4] sm:$0xf]
  %v284 = vld [vmem:[%s1 + $0x3b8] sm:$0xf]
  %v285 = vld [vmem:[%s1 + $0x3bc] sm:$0xf]
  %v286 = vld [vmem:[%s1 + $0x3c0] sm:$0xf]
  %v287 = vld [vmem:[%s1 + $0x3c4] sm:$0xf]
  %v288 = vld [vmem:[%s1 + $0x3c8] sm:$0xf]
  %v289 = vld [vmem:[%s1 + $0x3cc] sm:$0xf]
  %v290 = vld [vmem:[%s1 + $0x3d0] sm:$0xf]
  %v291 = vld [vmem:[%s1 + $0x3d4] sm:$0xf]
  %v292 = vld [vmem:[%s1 + $0x3d8] sm:$0xf]
  %v293 = vld [vmem:[%s1 + $0x3dc] sm:$0xf]
  %v294 = vld [vmem:[%s1 + $0x3e0] sm:$0xf]
  %v295 = vld [vmem:[%s1 + $0x3e4] sm:$0xf]
  %v296 = vld [vmem:[%s1 + $0x3e8] sm:$0xf]
  %v297 = vld [vmem:[%s1 + $0x3ec] sm:$0xf]
  %v298 = vld [vmem:[%s1 + $0x3f0] sm:$0xf]
  %v299 = vld [vmem:[%s1 + $0x3f4] sm:$0xf]
  %v300 = vld [vmem:[%s1 + $0x3f8] sm:$0xf]
  %v301 = vld [vmem:[%s1 + $0x3fc] sm:$0xf]
  %v302 = vld [vmem:[%s1 + $0x400] sm:$0xf]
  %v303 = vld [vmem:[%s1 + $0x404] sm:$0xf]
  %v304 = vld [vmem:[%s1 + $0x408] sm:$0xf]
  %v305 = vld [vmem:[%s1 + $0x40c] sm:$0xf]
  %v306 = vld [vmem:[%s1 + $0x410] sm:$0xf]
  %v307 = vld [vmem:[%s1 + $0x414] sm:$0xf]
  %v308 = vld [vmem:[%s1 + $0x418] sm:$0xf]
  %v309 = vld [vmem:[%s1 + $0x41c] sm:$0xf]
  %v310 = vld [vmem:[%s1 + $0x420] sm:$0xf]
  %v311 = vld [vmem:[%s1 + $0x424] sm:$0xf]
  %v312 = vld [vmem:[%s1 + $0x428] sm:$0xf]
  %v313 = vld [vmem:[%s1 + $0x42c] sm:$0xf]
  %v314 = vld [vmem:[%s1 + $0x430] sm:$0xf]
  %v315 = vld [vmem:[%s1 + $0x434] sm:$0xf]
  %v316 = vld [vmem:[%s1 + $0x438] sm:$0xf]
  %v317 = vld [vmem:[%s1 + $0x43c] sm:$0xf]
  %v318 = vld [vmem:[%s1 + $0x440] sm:$0xf]
  %v319 = vld [vmem:[%s1 + $0x444] sm:$0xf]
  %v320 = vld [vmem:[%s1 + $0x448] sm:$0xf]
  %v321 = vld [vmem:[%s1 + $0x44c] sm:$0xf]
  %v322 = vld [vmem:[%s1 + $0x450] sm:$0xf]
  %v323 = vld [vmem:[%s1 + $0x454] sm:$0xf]
  %v324 = vld [vmem:[%s1 + $0x458] sm:$0xf]
  %v325 = vld [vmem:[%s1 + $0x45c] sm:$0xf]
  %v326 = vld [vmem:[%s1 + $0x460] sm:$0xf]
  %v327 = vld [vmem:[%s1 + $0x464] sm:$0xf]
  %v328 = vld [vmem:[%s1 + $0x468] sm:$0xf]
  %v329 = vld [vmem:[%s1 + $0x46c] sm:$0xf]
  %v330 = vld [vmem:[%s1 + $0x470] sm:$0xf]
  %v331 = vld [vmem:[%s1 + $0x474] sm:$0xf]
  %v332 = vld [vmem:[%s1 + $0x478] sm:$0xf]
  %v333 = vld [vmem:[%s1 + $0x47c] sm:$0xf]
  %v334 = vld [vmem:[%s1 + $0x480] sm:$0xf]
  %v335 = vld [vmem:[%s1 + $0x484] sm:$0xf]
  %v336 = vld [vmem:[%s1 + $0x488] sm:$0xf]
  %v337 = vld [vmem:[%s1 + $0x48c] sm:$0xf]
  %v338 = vld [vmem:[%s1 + $0x490] sm:$0xf]
  %v339 = vld [vmem:[%s1 + $0x494] sm:$0xf]
  %v340 = vld [vmem:[%s1 + $0x498] sm:$0xf]
  %v341 = vld [vmem:[%s1 + $0x49c] sm:$0xf]
  %v342 = vld [vmem:[%s1 + $0x4a0] sm:$0xf]
  %v343 = vld [vmem:[%s1 + $0x4a4] sm:$0xf]
  %v344 = vld [vmem:[%s1 + $0x4a8] sm:$0xf]
  %v345 = vld [vmem:[%s1 + $0x4ac] sm:$0xf]
  %v346 = vld [vmem:[%s1 + $0x4b0] sm:$0xf]
  %v347 = vld [vmem:[%s1 + $0x4b4] sm:$0xf]
  %v348 = vld [vmem:[%s1 + $0x4b8] sm:$0xf]
  %v349 = vld [vmem:[%s1 + $0x4bc] sm:$0xf]
  %v350 = vld [vmem:[%s1 + $0x4c0] sm:$0xf]
  %v351 = vld [vmem:[%s1 + $0x4c4] sm:$0xf]
  %v352 = vld [vmem:[%s1 + $0x4c8] sm:$0xf]
  %v353 = vld [vmem:[%s1 + $0x4cc] sm:$0xf]
  %v354 = vld [vmem:[%s1 + $0x4d0] sm:$0xf]
  %v355 = vld [vmem:[%s1 + $0x4d4] sm:$0xf]
  %v356 = vld [vmem:[%s1 + $0x4d8] sm:$0xf]
  %v357 = vld [vmem:[%s1 + $0x4dc] sm:$0xf]
  %v358 = vld [vmem:[%s1 + $0x4e0] sm:$0xf]
  %v359 = vld [vmem:[%s1 + $0x4e4] sm:$0xf]
  %v360 = vld [vmem:[%s1 + $0x4e8] sm:$0xf]
  %v361 = vld [vmem:[%s1 + $0x4ec] sm:$0xf]
  %v362 = vld [vmem:[%s1 + $0x4f0] sm:$0xf]
  %v363 = vld [vmem:[%s1 + $0x4f4] sm:$0xf]
  %v364 = vld [vmem:[%s1 + $0x4f8] sm:$0xf]
  %v365 = vld [vmem:[%s1 + $0x4fc] sm:$0xf]
  %v366 = vld [vmem:[%s1 + $0x500] sm:$0xf]
  %v367 = vld [vmem:[%s1 + $0x504] sm:$0xf]
  %v368 = vld [vmem:[%s1 + $0x508] sm:$0xf]
  %v369 = vld [vmem:[%s1 + $0x50c] sm:$0xf]
  %v370 = vld [vmem:[%s1 + $0x510] sm:$0xf]
  %v371 = vld [vmem:[%s1 + $0x514] sm:$0xf]
  %v372 = vld [vmem:[%s1 + $0x518] sm:$0xf]
  %v373 = vld [vmem:[%s1 + $0x51c] sm:$0xf]
  %v374 = vld [vmem:[%s1 + $0x520] sm:$0xf]
  %v375 = vld [vmem:[%s1 + $0x524] sm:$0xf]
  %v376 = vld [vmem:[%s1 + $0x528] sm:$0xf]
  %v377 = vld [vmem:[%s1 + $0x52c] sm:$0xf]
  %v378 = vld [vmem:[%s1 + $0x530] sm:$0xf]
  %v379 = vld [vmem:[%s1 + $0x534] sm:$0xf]
  %v380 = vld [vmem:[%s1 + $0x538] sm:$0xf]
  %v381 = vld [vmem:[%s1 + $0x53c] sm:$0xf]
  %v382 = vld [vmem:[%s1 + $0x540] sm:$0xf]
  %v383 = vld [vmem:[%s1 + $0x544] sm:$0xf]
  %v384 = vld [vmem:[%s1 + $0x548] sm:$0xf]
  %v385 = vld [vmem:[%s1 + $0x54c] sm:$0xf]
  %v386 = vld [vmem:[%s1 + $0x550] sm:$0xf]
  %v387 = vld [vmem:[%s1 + $0x554] sm:$0xf]
  %v388 = vld [vmem:[%s1 + $0x558] sm:$0xf]
  %v389 = vld [vmem:[%s1 + $0x55c] sm:$0xf]
  %v390 = vld [vmem:[%s1 + $0x560] sm:$0xf]
  %v391 = vld [vmem:[%s1 + $0x564] sm:$0xf]
  %v392 = vld [vmem:[%s1 + $0x568] sm:$0xf]
  %v393 = vld [vmem:[%s1 + $0x56c] sm:$0xf]
  %v394 = vld [vmem:[%s1 + $0x570] sm:$0xf]
  %v395 = vld [vmem:[%s1 + $0x574] sm:$0xf]
  %v396 = vld [vmem:[%s1 + $0x578] sm:$0xf]
  %v397 = vld [vmem:[%s1 + $0x57c] sm:$0xf]
  %v398 = vld [vmem:[%s1 + $0x580] sm:$0xf]
  %v399 = vld [vmem:[%s1 + $0x584] sm:$0xf]
  %v400 = vld [vmem:[%s1 + $0x588] sm:$0xf]
  %v401 = vld [vmem:[%s1 + $0x58c] sm:$0xf]
  %v402 = vld [vmem:[%s1 + $0x590] sm:$0xf]
  %v403 = vld [vmem:[%s1 + $0x594] sm:$0xf]
  %v404 = vld [vmem:[%s1 + $0x598] sm:$0xf]
  %v405 = vld [vmem:[%s1 + $0x59c] sm:$0xf]
  %v406 = vld [vmem:[%s1 + $0x5a0] sm:$0xf]
  %v407 = vld [vmem:[%s1 + $0x5a4] sm:$0xf]
  %v408 = vld [vmem:[%s1 + $0x5a8] sm:$0xf]
  %v409 = vld [vmem:[%s1 + $0x5ac] sm:$0xf]
  %v410 = vld [vmem:[%s1 + $0x5b0] sm:$0xf]
  %v411 = vld [vmem:[%s1 + $0x5b4] sm:$0xf]
  %v412 = vld [vmem:[%s1 + $0x5b8] sm:$0xf]
  %v413 = vld [vmem:[%s1 + $0x5bc] sm:$0xf]
  %v414 = vld [vmem:[%s1 + $0x5c0] sm:$0xf]
  %v415 = vld [vmem:[%s1 + $0x5c4] sm:$0xf]
  %v416 = vld [vmem:[%s1 + $0x5c8] sm:$0xf]
  %v417 = vld [vmem:[%s1 + $0x5cc] sm:$0xf]
  %v418 = vld [vmem:[%s1 + $0x5d0] sm:$0xf]
  %v419 = vld [vmem:[%s1 + $0x5d4] sm:$0xf]
  %v420 = vld [vmem:[%s1 + $0x5d8] sm:$0xf]
  %v421 = vld [vmem:[%s1 + $0x5dc] sm:$0xf]
  %v422 = vld [vmem:[%s1 + $0x5e0] sm:$0xf]
  %v423 = vld [vmem:[%s1 + $0x5e4] sm:$0xf]
  %v424 = vld [vmem:[%s1 + $0x5e8] sm:$0xf]
  %v425 = vld [vmem:[%s1 + $0x5ec] sm:$0xf]
  %v426 = vld [vmem:[%s1 + $0x5f0] sm:$0xf]
  %v427 = vld [vmem:[%s1 + $0x5f4] sm:$0xf]
  %v428 = vld [vmem:[%s1 + $0x5f8] sm:$0xf]
  %v429 = vld [vmem:[%s1 + $0x5fc] sm:$0xf]
  %v430 = vld [vmem:[%s1 + $0x600] sm:$0xf]
  %v431 = vld [vmem:[%s1 + $0x604] sm:$0xf]
  %v432 = vld [vmem:[%s1 + $0x608] sm:$0xf]
  %v433 = vld [vmem:[%s1 + $0x60c] sm:$0xf]
  %v434 = vld [vmem:[%s1 + $0x610] sm:$0xf]
  %v435 = vld [vmem:[%s1 + $0x614] sm:$0xf]
  %v436 = vld [vmem:[%s1 + $0x618] sm:$0xf]
  %v437 = vld [vmem:[%s1 + $0x61c] sm:$0xf]
  %v438 = vld [vmem:[%s1 + $0x620] sm:$0xf]
  %v439 = vld [vmem:[%s1 + $0x624] sm:$0xf]
  %v440 = vld [vmem:[%s1 + $0x628] sm:$0xf]
  %v441 = vld [vmem:[%s1 + $0x62c] sm:$0xf]
  %v442 = vld [vmem:[%s1 + $0x630] sm:$0xf]
  %v443 = vld [vmem:[%s1 + $0x634] sm:$0xf]
  %v444 = vld [vmem:[%s1 + $0x638] sm:$0xf]
  %v445 = vld [vmem:[%s1 + $0x63c] sm:$0xf]
  %v446 = vld [vmem:[%s1 + $0x640] sm:$0xf]
  %v447 = vld [vmem:[%s1 + $0x644] sm:$0xf]
  %v448 = vld [vmem:[%s1 + $0x648] sm:$0xf]
  %v449 = vld [vmem:[%s1 + $0x64c] sm:$0xf]
  %v450 = vld [vmem:[%s1 + $0x650] sm:$0xf]
  %v451 = vld [vmem:[%s1 + $0x654] sm:$0xf]
  %v452 = vld [vmem:[%s1 + $0x658] sm:$0xf]
  %v453 = vld [vmem:[%s1 + $0x65c] sm:$0xf]
  %v454 = vld [vmem:[%s1 + $0x660] sm:$0xf]
  %v455 = vld [vmem:[%s1 + $0x664] sm:$0xf]
  %v456 = vld [vmem:[%s1 + $0x668] sm:$0xf]
  %v457 = vld [vmem:[%s1 + $0x66c] sm:$0xf]
  %v458 = vld [vmem:[%s1 + $0x670] sm:$0xf]
  %v459 = vld [vmem:[%s1 + $0x674] sm:$0xf]
  %v460 = vld [vmem:[%s1 + $0x678] sm:$0xf]
  %v461 = vld [vmem:[%s1 + $0x67c] sm:$0xf]
  %v462 = vld [vmem:[%s1 + $0x680] sm:$0xf]
  %v463 = vld [vmem:[%s1 + $0x684] sm:$0xf]
  %v464 = vld [vmem:[%s1 + $0x688] sm:$0xf]
  %v465 = vld [vmem:[%s1 + $0x68c] sm:$0xf]
  %v466 = vld [vmem:[%s1 + $0x690] sm:$0xf]
  %v467 = vld [vmem:[%s1 + $0x694] sm:$0xf]
  %v468 = vld [vmem:[%s1 + $0x698] sm:$0xf]
  %v469 = vld [vmem:[%s1 + $0x69c] sm:$0xf]
  %v470 = vld [vmem:[%s1 + $0x6a0] sm:$0xf]
  %v471 = vld [vmem:[%s1 + $0x6a4] sm:$0xf]
  %v472 = vld [vmem:[%s1 + $0x6a8] sm:$0xf]
  %v473 = vld [vmem:[%s1 + $0x6ac] sm:$0xf]
  %v474 = vld [vmem:[%s1 + $0x6b0] sm:$0xf]
  %v475 = vld [vmem:[%s1 + $0x6b4] sm:$0xf]
  %v476 = vld [vmem:[%s1 + $0x6b8] sm:$0xf]
  %v477 = vld [vmem:[%s1 + $0x6bc] sm:$0xf]
  %v478 = vld [vmem:[%s1 + $0x6c0] sm:$0xf]
  %v479 = vld [vmem:[%s1 + $0x6c4] sm:$0xf]
  %v480 = vld [vmem:[%s1 + $0x6c8] sm:$0xf]
  %v481 = vld [vmem:[%s1 + $0x6cc] sm:$0xf]
  %v482 = vld [vmem:[%s1 + $0x6d0] sm:$0xf]
  %v483 = vld [vmem:[%s1 + $0x6d4] sm:$0xf]
  %v484 = vld [vmem:[%s1 + $0x6d8] sm:$0xf]
  %v485 = vld [vmem:[%s1 + $0x6dc] sm:$0xf]
  %v486 = vld [vmem:[%s1 + $0x6e0] sm:$0xf]
  %v487 = vld [vmem:[%s1 + $0x6e4] sm:$0xf]
  %v488 = vld [vmem:[%s1 + $0x6e8] sm:$0xf]
  %v489 = vld [vmem:[%s1 + $0x6ec] sm:$0xf]
  %v490 = vld [vmem:[%s1 + $0x6f0] sm:$0xf]
  %v491 = vld [vmem:[%s1 + $0x6f4] sm:$0xf]
  %v492 = vld [vmem:[%s1 + $0x6f8] sm:$0xf]
  %v493 = vld [vmem:[%s1 + $0x6fc] sm:$0xf]
  %v494 = vld [vmem:[%s1 + $0x700] sm:$0xf]
  %v495 = vld [vmem:[%s1 + $0x704] sm:$0xf]
  %v496 = vld [vmem:[%s1 + $0x708] sm:$0xf]
  %v497 = vld [vmem:[%s1 + $0x70c] sm:$0xf]
  %v498 = vld [vmem:[%s1 + $0x710] sm:$0xf]
  %v499 = vld [vmem:[%s1 + $0x714] sm:$0xf]
  %v500 = vld [vmem:[%s1 + $0x718] sm:$0xf]
  %v501 = vld [vmem:[%s1 + $0x71c] sm:$0xf]
  %v502 = vld [vmem:[%s1 + $0x720] sm:$0xf]
  %v503 = vld [vmem:[%s1 + $0x724] sm:$0xf]
  %v504 = vld [vmem:[%s1 + $0x728] sm:$0xf]
  %v505 = vld [vmem:[%s1 + $0x72c] sm:$0xf]
  %v506 = vld [vmem:[%s1 + $0x730] sm:$0xf]
  %v507 = vld [vmem:[%s1 + $0x734] sm:$0xf]
  %v508 = vld [vmem:[%s1 + $0x738] sm:$0xf]
  %v509 = vld [vmem:[%s1 + $0x73c] sm:$0xf]
  %v510 = vld [vmem:[%s1 + $0x740] sm:$0xf]
  %v511 = vld [vmem:[%s1 + $0x744] sm:$0xf]
  %v512 = vld [vmem:[%s1 + $0x748] sm:$0xf]
  %v513 = vld [vmem:[%s1 + $0x74c] sm:$0xf]
  %v514 = vld [vmem:[%s1 + $0x750] sm:$0xf]
  %v515 = vld [vmem:[%s1 + $0x754] sm:$0xf]
  %v516 = vld [vmem:[%s1 + $0x758] sm:$0xf]
  %v517 = vld [vmem:[%s1 + $0x75c] sm:$0xf]
  %v518 = vld [vmem:[%s1 + $0x760] sm:$0xf]
  %v519 = vld [vmem:[%s1 + $0x764] sm:$0xf]
  %v520 = vld [vmem:[%s1 + $0x768] sm:$0xf]
  %v521 = vld [vmem:[%s1 + $0x76c] sm:$0xf]
  %v522 = vld [vmem:[%s1 + $0x770] sm:$0xf]
  %v523 = vld [vmem:[%s1 + $0x774] sm:$0xf]
  %v524 = vld [vmem:[%s1 + $0x778] sm:$0xf]
  %v525 = vld [vmem:[%s1 + $0x77c] sm:$0xf]
  %v526 = vld [vmem:[%s1 + $0x780] sm:$0xf]
  %v527 = vld [vmem:[%s1 + $0x784] sm:$0xf]
  %v528 = vld [vmem:[%s1 + $0x788] sm:$0xf]
  %v529 = vld [vmem:[%s1 + $0x78c] sm:$0xf]
  %v530 = vld [vmem:[%s1 + $0x790] sm:$0xf]
  %v531 = vld [vmem:[%s1 + $0x794] sm:$0xf]
  %v532 = vld [vmem:[%s1 + $0x798] sm:$0xf]
  %v533 = vld [vmem:[%s1 + $0x79c] sm:$0xf]
  %v534 = vld [vmem:[%s1 + $0x7a0] sm:$0xf]
  %v535 = vld [vmem:[%s1 + $0x7a4] sm:$0xf]
  %v536 = vld [vmem:[%s1 + $0x7a8] sm:$0xf]
  %v537 = vld [vmem:[%s1 + $0x7ac] sm:$0xf]
  %v538 = vld [vmem:[%s1 + $0x7b0] sm:$0xf]
  %v539 = vld [vmem:[%s1 + $0x7b4] sm:$0xf]
  %v540 = vld [vmem:[%s1 + $0x7b8] sm:$0xf]
  %v541 = vld [vmem:[%s1 + $0x7bc] sm:$0xf]
  %v542 = vld [vmem:[%s1 + $0x7c0] sm:$0xf]
  %v543 = vld [vmem:[%s1 + $0x7c4] sm:$0xf]
  %v544 = vld [vmem:[%s1 + $0x7c8] sm:$0xf]
  %v545 = vld [vmem:[%s1 + $0x7cc] sm:$0xf]
  %v546 = vld [vmem:[%s1 + $0x7d0] sm:$0xf]
  %v547 = vld [vmem:[%s1 + $0x7d4] sm:$0xf]
  %v548 = vld [vmem:[%s1 + $0x7d8] sm:$0xf]
  %v549 = vld [vmem:[%s1 + $0x7dc] sm:$0xf]
  %v550 = vld [vmem:[%s1 + $0x7e0] sm:$0xf]
  %v551 = vld [vmem:[%s1 + $0x7e4] sm:$0xf]
  %v552 = vld [vmem:[%s1 + $0x7e8] sm:$0xf]
  %v553 = vld [vmem:[%s1 + $0x7ec] sm:$0xf]
  %v554 = vld [vmem:[%s1 + $0x7f0] sm:$0xf]
  %v555 = vld [vmem:[%s1 + $0x7f4] sm:$0xf]
  %v556 = vld [vmem:[%s1 + $0x7f8] sm:$0xf]
  %v557 = vld [vmem:[%s1 + $0x7fc] sm:$0xf]
  %v558 = vld [vmem:[%s1 + $0x800] sm:$0xf]
  %v559 = vld [vmem:[%s1 + $0x804] sm:$0xf]
  %v560 = vld [vmem:[%s1 + $0x808] sm:$0xf]
  %v561 = vld [vmem:[%s1 + $0x80c] sm:$0xf]
  %v562 = vld [vmem:[%s1 + $0x810] sm:$0xf]
  %v563 = vld [vmem:[%s1 + $0x814] sm:$0xf]
  %v564 = vld [vmem:[%s1 + $0x818] sm:$0xf]
  %v565 = vld [vmem:[%s1 + $0x81c] sm:$0xf]
  %v566 = vld [vmem:[%s1 + $0x820] sm:$0xf]
  %v567 = vld [vmem:[%s1 + $0x824] sm:$0xf]
  %v568 = vld [vmem:[%s1 + $0x828] sm:$0xf]
  %v569 = vld [vmem:[%s1 + $0x82c] sm:$0xf]
  %v570 = vld [vmem:[%s1 + $0x830] sm:$0xf]
  %v571 = vld [vmem:[%s1 + $0x834] sm:$0xf]
  %v572 = vld [vmem:[%s1 + $0x838] sm:$0xf]
  %v573 = vld [vmem:[%s1 + $0x83c] sm:$0xf]
  %v574 = vld [vmem:[%s1 + $0x840] sm:$0xf]
  %v575 = vld [vmem:[%s1 + $0x844] sm:$0xf]
  %v576 = vld [vmem:[%s1 + $0x848] sm:$0xf]
  %v577 = vld [vmem:[%s1 + $0x84c] sm:$0xf]
  %v578 = vld [vmem:[%s1 + $0x850] sm:$0xf]
  %v579 = vld [vmem:[%s1 + $0x854] sm:$0xf]
  %v580 = vld [vmem:[%s1 + $0x858] sm:$0xf]
  %v581 = vld [vmem:[%s1 + $0x85c] sm:$0xf]
  %v582 = vld [vmem:[%s1 + $0x860] sm:$0xf]
  %v583 = vld [vmem:[%s1 + $0x864] sm:$0xf]
  %v584 = vld [vmem:[%s1 + $0x868] sm:$0xf]
  %v585 = vld [vmem:[%s1 + $0x86c] sm:$0xf]
  %v586 = vld [vmem:[%s1 + $0x870] sm:$0xf]
  %v587 = vld [vmem:[%s1 + $0x874] sm:$0xf]
  %v588 = vld [vmem:[%s1 + $0x878] sm:$0xf]
  %v589 = vld [vmem:[%s1 + $0x87c] sm:$0xf]
  %v590 = vld [vmem:[%s1 + $0x880] sm:$0xf]
  %v591 = vld [vmem:[%s1 + $0x884] sm:$0xf]
  %v592 = vld [vmem:[%s1 + $0x888] sm:$0xf]
  %v593 = vld [vmem:[%s1 + $0x88c] sm:$0xf]
  %v594 = vld [vmem:[%s1 + $0x890] sm:$0xf]
  %v595 = vld [vmem:[%s1 + $0x894] sm:$0xf]
  %v596 = vld [vmem:[%s1 + $0x898] sm:$0xf]
  %v597 = vld [vmem:[%s1 + $0x89c] sm:$0xf]
  %v598 = vld [vmem:[%s1 + $0x8a0] sm:$0xf]
  %v599 = vld [vmem:[%s1 + $0x8a4] sm:$0xf]
  %v600 = vld [vmem:[%s1 + $0x8a8] sm:$0xf]
  %v601 = vld [vmem:[%s1 + $0x8ac] sm:$0xf]
  %v602 = vld [vmem:[%s1 + $0x8b0] sm:$0xf]
  %v603 = vld [vmem:[%s1 + $0x8b4] sm:$0xf]
  %v604 = vld [vmem:[%s1 + $0x8b8] sm:$0xf]
  %v605 = vld [vmem:[%s1 + $0x8bc] sm:$0xf]
  %v606 = vld [vmem:[%s1 + $0x8c0] sm:$0xf]
  %v607 = vld [vmem:[%s1 + $0x8c4] sm:$0xf]
  %v608 = vld [vmem:[%s1 + $0x8c8] sm:$0xf]
  %v609 = vld [vmem:[%s1 + $0x8cc] sm:$0xf]
  %v610 = vld [vmem:[%s1 + $0x8d0] sm:$0xf]
  %v611 = vld [vmem:[%s1 + $0x8d4] sm:$0xf]
  %v612 = vld [vmem:[%s1 + $0x8d8] sm:$0xf]
  %v613 = vld [vmem:[%s1 + $0x8dc] sm:$0xf]
  %v614 = vld [vmem:[%s1 + $0x8e0] sm:$0xf]
  %v615 = vld [vmem:[%s1 + $0x8e4] sm:$0xf]
  %v616 = vld [vmem:[%s1 + $0x8e8] sm:$0xf]
  %v617 = vld [vmem:[%s1 + $0x8ec] sm:$0xf]
  %v618 = vld [vmem:[%s1 + $0x8f0] sm:$0xf]
  %v619 = vld [vmem:[%s1 + $0x8f4] sm:$0xf]
  %v620 = vld [vmem:[%s1 + $0x8f8] sm:$0xf]
  %v621 = vld [vmem:[%s1 + $0x8fc] sm:$0xf]
  %v622 = vld [vmem:[%s1 + $0x900] sm:$0xf]
  %v623 = vld [vmem:[%s1 + $0x904] sm:$0xf]
  %v624 = vld [vmem:[%s1 + $0x908] sm:$0xf]
  %v625 = vld [vmem:[%s1 + $0x90c] sm:$0xf]
  %v626 = vld [vmem:[%s1 + $0x910] sm:$0xf]
  %v627 = vld [vmem:[%s1 + $0x914] sm:$0xf]
  %v628 = vld [vmem:[%s1 + $0x918] sm:$0xf]
  %v629 = vld [vmem:[%s1 + $0x91c] sm:$0xf]
  %v630 = vld [vmem:[%s1 + $0x920] sm:$0xf]
  %v631 = vld [vmem:[%s1 + $0x924] sm:$0xf]
  %v632 = vld [vmem:[%s1 + $0x928] sm:$0xf]
  %v633 = vld [vmem:[%s1 + $0x92c] sm:$0xf]
  %v634 = vld [vmem:[%s1 + $0x930] sm:$0xf]
  %v635 = vld [vmem:[%s1 + $0x934] sm:$0xf]
  %v636 = vld [vmem:[%s1 + $0x938] sm:$0xf]
  %v637 = vld [vmem:[%s1 + $0x93c] sm:$0xf]
  %v638 = vld [vmem:[%s1 + $0x940] sm:$0xf]
  %v639 = vld [vmem:[%s1 + $0x944] sm:$0xf]
  %v640 = vld [vmem:[%s1 + $0x948] sm:$0xf]
  %v641 = vld [vmem:[%s1 + $0x94c] sm:$0xf]
  %v642 = vld [vmem:[%s1 + $0x950] sm:$0xf]
  %v643 = vld [vmem:[%s1 + $0x954] sm:$0xf]
  %v644 = vld [vmem:[%s1 + $0x958] sm:$0xf]
  %v645 = vld [vmem:[%s1 + $0x95c] sm:$0xf]
  %v646 = vld [vmem:[%s1 + $0x960] sm:$0xf]
  %v647 = vld [vmem:[%s1 + $0x964] sm:$0xf]
  %v648 = vld [vmem:[%s1 + $0x968] sm:$0xf]
  %v649 = vld [vmem:[%s1 + $0x96c] sm:$0xf]
  %v650 = vld [vmem:[%s1 + $0x970] sm:$0xf]
  %v651 = vld [vmem:[%s1 + $0x974] sm:$0xf]
  %v652 = vld [vmem:[%s1 + $0x978] sm:$0xf]
  %v653 = vld [vmem:[%s1 + $0x97c] sm:$0xf]
  %v654 = vld [vmem:[%s1 + $0x980] sm:$0xf]
  %v655 = vld [vmem:[%s1 + $0x984] sm:$0xf]
  %v656 = vld [vmem:[%s1 + $0x988] sm:$0xf]
  %v657 = vld [vmem:[%s1 + $0x98c] sm:$0xf]
  %v658 = vld [vmem:[%s1 + $0x990] sm:$0xf]
  %v659 = vld [vmem:[%s1 + $0x994] sm:$0xf]
  %v660 = vld [vmem:[%s1 + $0x998] sm:$0xf]
  %v661 = vld [vmem:[%s1 + $0x99c] sm:$0xf]
  %v662 = vld [vmem:[%s1 + $0x9a0] sm:$0xf]
  %v663 = vld [vmem:[%s1 + $0x9a4] sm:$0xf]
  %v664 = vld [vmem:[%s1 + $0x9a8] sm:$0xf]
  %v665 = vld [vmem:[%s1 + $0x9ac] sm:$0xf]
  %v666 = vld [vmem:[%s1 + $0x9b0] sm:$0xf]
  %v667 = vld [vmem:[%s1 + $0x9b4] sm:$0xf]
  %v668 = vld [vmem:[%s1 + $0x9b8] sm:$0xf]
  %v669 = vld [vmem:[%s1 + $0x9bc] sm:$0xf]
  %v670 = vld [vmem:[%s1 + $0x9c0] sm:$0xf]
  %v671 = vld [vmem:[%s1 + $0x9c4] sm:$0xf]
  %v672 = vld [vmem:[%s1 + $0x9c8] sm:$0xf]
  %v673 = vld [vmem:[%s1 + $0x9cc] sm:$0xf]
  %v674 = vld [vmem:[%s1 + $0x9d0] sm:$0xf]
  %v675 = vld [vmem:[%s1 + $0x9d4] sm:$0xf]
  %v676 = vld [vmem:[%s1 + $0x9d8] sm:$0xf]
  %v677 = vld [vmem:[%s1 + $0x9dc] sm:$0xf]
  %v678 = vld [vmem:[%s1 + $0x9e0] sm:$0xf]
  %v679 = vld [vmem:[%s1 + $0x9e4] sm:$0xf]
  %v680 = vld [vmem:[%s1 + $0x9e8] sm:$0xf]
  %v681 = vld [vmem:[%s1 + $0x9ec] sm:$0xf]
  %v682 = vld [vmem:[%s1 + $0x9f0] sm:$0xf]
  %v683 = vld [vmem:[%s1 + $0x9f4] sm:$0xf]
  %v684 = vld [vmem:[%s1 + $0x9f8] sm:$0xf]
  %v685 = vld [vmem:[%s1 + $0x9fc] sm:$0xf]
  %v686 = vld [vmem:[%s1 + $0xa00] sm:$0xf]
  %v687 = vld [vmem:[%s1 + $0xa04] sm:$0xf]
  %v688 = vld [vmem:[%s1 + $0xa08] sm:$0xf]
  %v689 = vld [vmem:[%s1 + $0xa0c] sm:$0xf]
  %v690 = vld [vmem:[%s1 + $0xa10] sm:$0xf]
  %v691 = vld [vmem:[%s1 + $0xa14] sm:$0xf]
  %v692 = vld [vmem:[%s1 + $0xa18] sm:$0xf]
  %v693 = vld [vmem:[%s1 + $0xa1c] sm:$0xf]
  %v694 = vld [vmem:[%s1 + $0xa20] sm:$0xf]
  %v695 = vld [vmem:[%s1 + $0xa24] sm:$0xf]
  %v696 = vld [vmem:[%s1 + $0xa28] sm:$0xf]
  %v697 = vld [vmem:[%s1 + $0xa2c] sm:$0xf]
  %v698 = vld [vmem:[%s1 + $0xa30] sm:$0xf]
  %v699 = vld [vmem:[%s1 + $0xa34] sm:$0xf]
  %v700 = vld [vmem:[%s1 + $0xa38] sm:$0xf]
  %v701 = vld [vmem:[%s1 + $0xa3c] sm:$0xf]
  %v702 = vld [vmem:[%s1 + $0xa40] sm:$0xf]
  %v703 = vld [vmem:[%s1 + $0xa44] sm:$0xf]
  %v704 = vld [vmem:[%s1 + $0xa48] sm:$0xf]
  %v705 = vld [vmem:[%s1 + $0xa4c] sm:$0xf]
  %v706 = vld [vmem:[%s1 + $0xa50] sm:$0xf]
  %v707 = vld [vmem:[%s1 + $0xa54] sm:$0xf]
  %v708 = vld [vmem:[%s1 + $0xa58] sm:$0xf]
  %v709 = vld [vmem:[%s1 + $0xa5c] sm:$0xf]
  %v710 = vld [vmem:[%s1 + $0xa60] sm:$0xf]
  %v711 = vld [vmem:[%s1 + $0xa64] sm:$0xf]
  %v712 = vld [vmem:[%s1 + $0xa68] sm:$0xf]
  %v713 = vld [vmem:[%s1 + $0xa6c] sm:$0xf]
  %v714 = vld [vmem:[%s1 + $0xa70] sm:$0xf]
  %v715 = vld [vmem:[%s1 + $0xa74] sm:$0xf]
  %v716 = vld [vmem:[%s1 + $0xa78] sm:$0xf]
  %v717 = vld [vmem:[%s1 + $0xa7c] sm:$0xf]
  %v718 = vld [vmem:[%s1 + $0xa80] sm:$0xf]
  %v719 = vld [vmem:[%s1 + $0xa84] sm:$0xf]
  %v720 = vld [vmem:[%s1 + $0xa88] sm:$0xf]
  %v721 = vld [vmem:[%s1 + $0xa8c] sm:$0xf]
  %v722 = vld [vmem:[%s1 + $0xa90] sm:$0xf]
  %v723 = vld [vmem:[%s1 + $0xa94] sm:$0xf]
  %v724 = vld [vmem:[%s1 + $0xa98] sm:$0xf]
  %v725 = vld [vmem:[%s1 + $0xa9c] sm:$0xf]
  %v726 = vld [vmem:[%s1 + $0xaa0] sm:$0xf]
  %v727 = vld [vmem:[%s1 + $0xaa4] sm:$0xf]
  %v728 = vld [vmem:[%s1 + $0xaa8] sm:$0xf]
  %v729 = vld [vmem:[%s1 + $0xaac] sm:$0xf]
  %v730 = vld [vmem:[%s1 + $0xab0] sm:$0xf]
  %v731 = vld [vmem:[%s1 + $0xab4] sm:$0xf]
  %v732 = vld [vmem:[%s1 + $0xab8] sm:$0xf]
  %v733 = vld [vmem:[%s1 + $0xabc] sm:$0xf]
  %v734 = vld [vmem:[%s1 + $0xac0] sm:$0xf]
  %v735 = vld [vmem:[%s1 + $0xac4] sm:$0xf]
  %v736 = vld [vmem:[%s1 + $0xac8] sm:$0xf]
  %v737 = vld [vmem:[%s1 + $0xacc] sm:$0xf]
  %v738 = vld [vmem:[%s1 + $0xad0] sm:$0xf]
  %v739 = vld [vmem:[%s1 + $0xad4] sm:$0xf]
  %v740 = vld [vmem:[%s1 + $0xad8] sm:$0xf]
  %v741 = vld [vmem:[%s1 + $0xadc] sm:$0xf]
  %v742 = vld [vmem:[%s1 + $0xae0] sm:$0xf]
  %v743 = vld [vmem:[%s1 + $0xae4] sm:$0xf]
  %v744 = vld [vmem:[%s1 + $0xae8] sm:$0xf]
  %v745 = vld [vmem:[%s1 + $0xaec] sm:$0xf]
  %v746 = vld [vmem:[%s1 + $0xaf0] sm:$0xf]
  %v747 = vld [vmem:[%s1 + $0xaf4] sm:$0xf]
  %v748 = vld [vmem:[%s1 + $0xaf8] sm:$0xf]
  %v749 = vld [vmem:[%s1 + $0xafc] sm:$0xf]
  %v750 = vld [vmem:[%s1 + $0xb00] sm:$0xf]
  %v751 = vld [vmem:[%s1 + $0xb04] sm:$0xf]
  %v752 = vld [vmem:[%s1 + $0xb08] sm:$0xf]
  %v753 = vld [vmem:[%s1 + $0xb0c] sm:$0xf]
  %v754 = vld [vmem:[%s1 + $0xb10] sm:$0xf]
  %v755 = vld [vmem:[%s1 + $0xb14] sm:$0xf]
  %v756 = vld [vmem:[%s1 + $0xb18] sm:$0xf]
  %v757 = vld [vmem:[%s1 + $0xb1c] sm:$0xf]
  %v758 = vld [vmem:[%s1 + $0xb20] sm:$0xf]
  %v759 = vld [vmem:[%s1 + $0xb24] sm:$0xf]
  %v760 = vld [vmem:[%s1 + $0xb28] sm:$0xf]
  %v761 = vld [vmem:[%s1 + $0xb2c] sm:$0xf]
  %v762 = vld [vmem:[%s1 + $0xb30] sm:$0xf]
  %v763 = vld [vmem:[%s1 + $0xb34] sm:$0xf]
  %v764 = vld [vmem:[%s1 + $0xb38] sm:$0xf]
  %v765 = vld [vmem:[%s1 + $0xb3c] sm:$0xf]
  %v766 = vld [vmem:[%s1 + $0xb40] sm:$0xf]
  %v767 = vld [vmem:[%s1 + $0xb44] sm:$0xf]
  %v768 = vld [vmem:[%s1 + $0xb48] sm:$0xf]
  %v769 = vld [vmem:[%s1 + $0xb4c] sm:$0xf]
  %v770 = vld [vmem:[%s1 + $0xb50] sm:$0xf]
  %v771 = vld [vmem:[%s1 + $0xb54] sm:$0xf]
  %v772 = vld [vmem:[%s1 + $0xb58] sm:$0xf]
  %v773 = vld [vmem:[%s1 + $0xb5c] sm:$0xf]
  %v774 = vld [vmem:[%s1 + $0xb60] sm:$0xf]
  %v775 = vld [vmem:[%s1 + $0xb64] sm:$0xf]
  %v776 = vld [vmem:[%s1 + $0xb68] sm:$0xf]
  %v777 = vld [vmem:[%s1 + $0xb6c] sm:$0xf]
  %v778 = vld [vmem:[%s1 + $0xb70] sm:$0xf]
  %v779 = vld [vmem:[%s1 + $0xb74] sm:$0xf]
  %v780 = vld [vmem:[%s1 + $0xb78] sm:$0xf]
  %v781 = vld [vmem:[%s1 + $0xb7c] sm:$0xf]
  %v782 = vld [vmem:[%s1 + $0xb80] sm:$0xf]
  %v783 = vld [vmem:[%s1 + $0xb84] sm:$0xf]
  %v784 = vld [vmem:[%s1 + $0xb88] sm:$0xf]
  %v785 = vld [vmem:[%s1 + $0xb8c] sm:$0xf]
  %v786 = vld [vmem:[%s1 + $0xb90] sm:$0xf]
  %v787 = vld [vmem:[%s1 + $0xb94] sm:$0xf]
  %v788 = vld [vmem:[%s1 + $0xb98] sm:$0xf]
  %v789 = vld [vmem:[%s1 + $0xb9c] sm:$0xf]
  %v790 = vld [vmem:[%s1 + $0xba0] sm:$0xf]
  %v791 = vld [vmem:[%s1 + $0xba4] sm:$0xf]
  %v792 = vld [vmem:[%s1 + $0xba8] sm:$0xf]
  %v793 = vld [vmem:[%s1 + $0xbac] sm:$0xf]
  %v794 = vld [vmem:[%s1 + $0xbb0] sm:$0xf]
  %v795 = vld [vmem:[%s1 + $0xbb4] sm:$0xf]
  %v796 = vld [vmem:[%s1 + $0xbb8] sm:$0xf]
  %v797 = vld [vmem:[%s1 + $0xbbc] sm:$0xf]
  %v798 = vld [vmem:[%s1 + $0xbc0] sm:$0xf]
  %v799 = vld [vmem:[%s1 + $0xbc4] sm:$0xf]
  %v800 = vld [vmem:[%s1 + $0xbc8] sm:$0xf]
  %v801 = vld [vmem:[%s1 + $0xbcc] sm:$0xf]
  %v802 = vld [vmem:[%s1 + $0xbd0] sm:$0xf]
  %v803 = vld [vmem:[%s1 + $0xbd4] sm:$0xf]
  %v804 = vld [vmem:[%s1 + $0xbd8] sm:$0xf]
  %v805 = vld [vmem:[%s1 + $0xbdc] sm:$0xf]
  %v806 = vld [vmem:[%s1 + $0xbe0] sm:$0xf]
  %v807 = vld [vmem:[%s1 + $0xbe4] sm:$0xf]
  %v808 = vld [vmem:[%s1 + $0xbe8] sm:$0xf]
  %v809 = vld [vmem:[%s1 + $0xbec] sm:$0xf]
  %v810 = vld [vmem:[%s1 + $0xbf0] sm:$0xf]
  %v811 = vld [vmem:[%s1 + $0xbf4] sm:$0xf]
  %v812 = vld [vmem:[%s1 + $0xbf8] sm:$0xf]
  %v813 = vld [vmem:[%s1 + $0xbfc] sm:$0xf]
  %v814 = vld [vmem:[%s1 + $0xc00] sm:$0xf]
  %v815 = vld [vmem:[%s1 + $0xc04] sm:$0xf]
  %v816 = vld [vmem:[%s1 + $0xc08] sm:$0xf]
  %v817 = vld [vmem:[%s1 + $0xc0c] sm:$0xf]
  %v818 = vld [vmem:[%s1 + $0xc10] sm:$0xf]
  %v819 = vld [vmem:[%s1 + $0xc14] sm:$0xf]
  %v820 = vld [vmem:[%s1 + $0xc18] sm:$0xf]
  %v821 = vld [vmem:[%s1 + $0xc1c] sm:$0xf]
  %v822 = vld [vmem:[%s1 + $0xc20] sm:$0xf]
  %v823 = vld [vmem:[%s1 + $0xc24] sm:$0xf]
  %v824 = vld [vmem:[%s1 + $0xc28] sm:$0xf]
  %v825 = vld [vmem:[%s1 + $0xc2c] sm:$0xf]
  %v826 = vld [vmem:[%s1 + $0xc30] sm:$0xf]
  %v827 = vld [vmem:[%s1 + $0xc34] sm:$0xf]
  %v828 = vld [vmem:[%s1 + $0xc38] sm:$0xf]
  %v829 = vld [vmem:[%s1 + $0xc3c] sm:$0xf]
  %v830 = vld [vmem:[%s2] sm:$0x1]
  %v832 = vlaneseq
  %v833 = vshrl.u32 %v832, 7
  %v834 = vsub.s32 0, %v833
  %v835 = vrot.slane %v830, %v834
  %v862 = vunpack.c.l.b16 %v21
  %v863 = vunpack.c.h.b16 %v21
  %v864 = vunpack.c.l.b16 %v22
  %v865 = vunpack.c.h.b16 %v22
  %v866 = vunpack.c.l.b16 %v23
  %v867 = vunpack.c.h.b16 %v23
  %v868 = vunpack.c.l.b16 %v24
  %v869 = vunpack.c.h.b16 %v24
  %v870 = vunpack.c.l.b16 %v25
  %v871 = vunpack.c.h.b16 %v25
  %v872 = vunpack.c.l.b16 %v26
  %v873 = vunpack.c.h.b16 %v26
  %v874 = vunpack.c.l.b16 %v27
  %v875 = vunpack.c.h.b16 %v27
  %v876 = vunpack.c.l.b16 %v28
  %v877 = vunpack.c.h.b16 %v28
  %v878 = vunpack.c.l.b16 %v29
  %v879 = vunpack.c.h.b16 %v29
  %v880 = vunpack.c.l.b16 %v30
  %v881 = vunpack.c.h.b16 %v30
  %v882 = vunpack.c.l.b16 %v31
  %v883 = vunpack.c.h.b16 %v31
  %v884 = vunpack.c.l.b16 %v32
  %v885 = vunpack.c.h.b16 %v32
  %v886 = vunpack.c.l.b16 %v33
  %v887 = vunpack.c.h.b16 %v33
  %v888 = vunpack.c.l.b16 %v34
  %v889 = vunpack.c.h.b16 %v34
  %v890 = vunpack.c.l.b16 %v35
  %v891 = vunpack.c.h.b16 %v35
  %v892 = vunpack.c.l.b16 %v36
  %v893 = vunpack.c.h.b16 %v36
  %v894 = vunpack.c.l.b16 %v37
  %v895 = vunpack.c.h.b16 %v37
  %v896 = vunpack.c.l.b16 %v38
  %v897 = vunpack.c.h.b16 %v38
  %v898 = vunpack.c.l.b16 %v39
  %v899 = vunpack.c.h.b16 %v39
  %v900 = vunpack.c.l.b16 %v40
  %v901 = vunpack.c.h.b16 %v40
  %v902 = vunpack.c.l.b16 %v41
  %v903 = vunpack.c.h.b16 %v41
  %v904 = vunpack.c.l.b16 %v42
  %v905 = vunpack.c.h.b16 %v42
  %v906 = vunpack.c.l.b16 %v43
  %v907 = vunpack.c.h.b16 %v43
  %v908 = vunpack.c.l.b16 %v44
  %v909 = vunpack.c.h.b16 %v44
  %v910 = vunpack.c.l.b16 %v45
  %v911 = vpack.c.b16 %v862, %v862
  %v912 = vpack.c.b16 %v863, %v863
  %v913 = vpack.c.b16 %v864, %v864
  %v914 = vpack.c.b16 %v865, %v865
  %v915 = vpack.c.b16 %v866, %v866
  %v916 = vpack.c.b16 %v867, %v867
  %v917 = vpack.c.b16 %v868, %v868
  %v918 = vpack.c.b16 %v869, %v869
  %v919 = vpack.c.b16 %v870, %v870
  %v920 = vpack.c.b16 %v871, %v871
  %v921 = vpack.c.b16 %v872, %v872
  %v922 = vpack.c.b16 %v873, %v873
  %v923 = vpack.c.b16 %v874, %v874
  %v924 = vpack.c.b16 %v875, %v875
  %v925 = vpack.c.b16 %v876, %v876
  %v926 = vpack.c.b16 %v877, %v877
  %v927 = vpack.c.b16 %v878, %v878
  %v928 = vpack.c.b16 %v879, %v879
  %v929 = vpack.c.b16 %v880, %v880
  %v930 = vpack.c.b16 %v881, %v881
  %v931 = vpack.c.b16 %v882, %v882
  %v932 = vpack.c.b16 %v883, %v883
  %v933 = vpack.c.b16 %v884, %v884
  %v934 = vpack.c.b16 %v885, %v885
  %v935 = vpack.c.b16 %v886, %v886
  %v936 = vpack.c.b16 %v887, %v887
  %v937 = vpack.c.b16 %v888, %v888
  %v938 = vpack.c.b16 %v889, %v889
  %v939 = vpack.c.b16 %v890, %v890
  %v940 = vpack.c.b16 %v891, %v891
  %v941 = vpack.c.b16 %v892, %v892
  %v942 = vpack.c.b16 %v893, %v893
  %v943 = vpack.c.b16 %v894, %v894
  %v944 = vpack.c.b16 %v895, %v895
  %v945 = vpack.c.b16 %v896, %v896
  %v946 = vpack.c.b16 %v897, %v897
  %v947 = vpack.c.b16 %v898, %v898
  %v948 = vpack.c.b16 %v899, %v899
  %v949 = vpack.c.b16 %v900, %v900
  %v950 = vpack.c.b16 %v901, %v901
  %v951 = vpack.c.b16 %v902, %v902
  %v952 = vpack.c.b16 %v903, %v903
  %v953 = vpack.c.b16 %v904, %v904
  %v954 = vpack.c.b16 %v905, %v905
  %v955 = vpack.c.b16 %v906, %v906
  %v956 = vpack.c.b16 %v907, %v907
  %v957 = vpack.c.b16 %v908, %v908
  %v958 = vpack.c.b16 %v909, %v909
  %v959 = vpack.c.b16 %v910, %v910
  %v1793 = vunpack.c.l.b16 %v46
  %v1794 = vunpack.c.l.b16 %v47
  %v1795 = vunpack.c.l.b16 %v48
  %v1796 = vunpack.c.l.b16 %v49
  %v1797 = vunpack.c.l.b16 %v50
  %v1798 = vunpack.c.l.b16 %v51
  %v1799 = vunpack.c.l.b16 %v52
  %v1800 = vunpack.c.l.b16 %v53
  %v1801 = vunpack.c.l.b16 %v54
  %v1802 = vunpack.c.l.b16 %v55
  %v1803 = vunpack.c.l.b16 %v56
  %v1804 = vunpack.c.l.b16 %v57
  %v1805 = vunpack.c.l.b16 %v58
  %v1806 = vunpack.c.l.b16 %v59
  %v1807 = vunpack.c.l.b16 %v60
  %v1808 = vunpack.c.l.b16 %v61
  %v1809 = vunpack.c.l.b16 %v62
  %v1810 = vunpack.c.l.b16 %v63
  %v1811 = vunpack.c.l.b16 %v64
  %v1812 = vunpack.c.l.b16 %v65
  %v1813 = vunpack.c.l.b16 %v66
  %v1814 = vunpack.c.l.b16 %v67
  %v1815 = vunpack.c.l.b16 %v68
  %v1816 = vunpack.c.l.b16 %v69
  %v1817 = vunpack.c.l.b16 %v70
  %v1818 = vunpack.c.l.b16 %v71
  %v1819 = vunpack.c.l.b16 %v72
  %v1820 = vunpack.c.l.b16 %v73
  %v1821 = vunpack.c.l.b16 %v74
  %v1822 = vunpack.c.l.b16 %v75
  %v1823 = vunpack.c.l.b16 %v76
  %v1824 = vunpack.c.l.b16 %v77
  %v1825 = vunpack.c.l.b16 %v78
  %v1826 = vunpack.c.l.b16 %v79
  %v1827 = vunpack.c.l.b16 %v80
  %v1828 = vunpack.c.l.b16 %v81
  %v1829 = vunpack.c.l.b16 %v82
  %v1830 = vunpack.c.l.b16 %v83
  %v1831 = vunpack.c.l.b16 %v84
  %v1832 = vunpack.c.l.b16 %v85
  %v1833 = vunpack.c.l.b16 %v86
  %v1834 = vunpack.c.l.b16 %v87
  %v1835 = vunpack.c.l.b16 %v88
  %v1836 = vunpack.c.l.b16 %v89
  %v1837 = vunpack.c.l.b16 %v90
  %v1838 = vunpack.c.l.b16 %v91
  %v1839 = vunpack.c.l.b16 %v92
  %v1840 = vunpack.c.l.b16 %v93
  %v1841 = vunpack.c.l.b16 %v94
  %v1842 = vunpack.c.l.b16 %v95
  %v1843 = vunpack.c.l.b16 %v96
  %v1844 = vunpack.c.l.b16 %v97
  %v1845 = vunpack.c.l.b16 %v98
  %v1846 = vunpack.c.l.b16 %v99
  %v1847 = vunpack.c.l.b16 %v100
  %v1848 = vunpack.c.l.b16 %v101
  %v1849 = vunpack.c.l.b16 %v102
  %v1850 = vunpack.c.l.b16 %v103
  %v1851 = vunpack.c.l.b16 %v104
  %v1852 = vunpack.c.l.b16 %v105
  %v1853 = vunpack.c.l.b16 %v106
  %v1854 = vunpack.c.l.b16 %v107
  %v1855 = vunpack.c.l.b16 %v108
  %v1856 = vunpack.c.l.b16 %v109
  %v1857 = vunpack.c.l.b16 %v110
  %v1858 = vunpack.c.l.b16 %v111
  %v1859 = vunpack.c.l.b16 %v112
  %v1860 = vunpack.c.l.b16 %v113
  %v1861 = vunpack.c.l.b16 %v114
  %v1862 = vunpack.c.l.b16 %v115
  %v1863 = vunpack.c.l.b16 %v116
  %v1864 = vunpack.c.l.b16 %v117
  %v1865 = vunpack.c.l.b16 %v118
  %v1866 = vunpack.c.l.b16 %v119
  %v1867 = vunpack.c.l.b16 %v120
  %v1868 = vunpack.c.l.b16 %v121
  %v1869 = vunpack.c.l.b16 %v122
  %v1870 = vunpack.c.l.b16 %v123
  %v1871 = vunpack.c.l.b16 %v124
  %v1872 = vunpack.c.l.b16 %v125
  %v1873 = vunpack.c.l.b16 %v126
  %v1874 = vunpack.c.l.b16 %v127
  %v1875 = vunpack.c.l.b16 %v128
  %v1876 = vunpack.c.l.b16 %v129
  %v1877 = vunpack.c.l.b16 %v130
  %v1878 = vunpack.c.l.b16 %v131
  %v1879 = vunpack.c.l.b16 %v132
  %v1880 = vunpack.c.l.b16 %v133
  %v1881 = vunpack.c.l.b16 %v134
  %v1882 = vunpack.c.l.b16 %v135
  %v1883 = vunpack.c.l.b16 %v136
  %v1884 = vunpack.c.l.b16 %v137
  %v1885 = vunpack.c.l.b16 %v138
  %v1886 = vunpack.c.l.b16 %v139
  %v1887 = vunpack.c.l.b16 %v140
  %v1888 = vunpack.c.l.b16 %v141
  %v1889 = vunpack.c.l.b16 %v142
  %v1890 = vunpack.c.l.b16 %v143
  %v1891 = vunpack.c.l.b16 %v144
  %v1892 = vunpack.c.l.b16 %v145
  %v1893 = vunpack.c.l.b16 %v146
  %v1894 = vunpack.c.l.b16 %v147
  %v1895 = vunpack.c.l.b16 %v148
  %v1896 = vunpack.c.l.b16 %v149
  %v1897 = vunpack.c.l.b16 %v150
  %v1898 = vunpack.c.l.b16 %v151
  %v1899 = vunpack.c.l.b16 %v152
  %v1900 = vunpack.c.l.b16 %v153
  %v1901 = vunpack.c.l.b16 %v154
  %v1902 = vunpack.c.l.b16 %v155
  %v1903 = vunpack.c.l.b16 %v156
  %v1904 = vunpack.c.l.b16 %v157
  %v1905 = vunpack.c.l.b16 %v158
  %v1906 = vunpack.c.l.b16 %v159
  %v1907 = vunpack.c.l.b16 %v160
  %v1908 = vunpack.c.l.b16 %v161
  %v1909 = vunpack.c.l.b16 %v162
  %v1910 = vunpack.c.l.b16 %v163
  %v1911 = vunpack.c.l.b16 %v164
  %v1912 = vunpack.c.l.b16 %v165
  %v1913 = vunpack.c.l.b16 %v166
  %v1914 = vunpack.c.l.b16 %v167
  %v1915 = vunpack.c.l.b16 %v168
  %v1916 = vunpack.c.l.b16 %v169
  %v1917 = vunpack.c.l.b16 %v170
  %v1918 = vunpack.c.l.b16 %v171
  %v1919 = vunpack.c.l.b16 %v172
  %v1920 = vunpack.c.l.b16 %v173
  %v1921 = vunpack.c.l.b16 %v174
  %v1922 = vunpack.c.l.b16 %v175
  %v1923 = vunpack.c.l.b16 %v176
  %v1924 = vunpack.c.l.b16 %v177
  %v1925 = vunpack.c.l.b16 %v178
  %v1926 = vunpack.c.l.b16 %v179
  %v1927 = vunpack.c.l.b16 %v180
  %v1928 = vunpack.c.l.b16 %v181
  %v1929 = vunpack.c.l.b16 %v182
  %v1930 = vunpack.c.l.b16 %v183
  %v1931 = vunpack.c.l.b16 %v184
  %v1932 = vunpack.c.l.b16 %v185
  %v1933 = vunpack.c.l.b16 %v186
  %v1934 = vunpack.c.l.b16 %v187
  %v1935 = vunpack.c.l.b16 %v188
  %v1936 = vunpack.c.l.b16 %v189
  %v1937 = vunpack.c.l.b16 %v190
  %v1938 = vunpack.c.l.b16 %v191
  %v1939 = vunpack.c.l.b16 %v192
  %v1940 = vunpack.c.l.b16 %v193
  %v1941 = vunpack.c.l.b16 %v194
  %v1942 = vunpack.c.l.b16 %v195
  %v1943 = vunpack.c.l.b16 %v196
  %v1944 = vunpack.c.l.b16 %v197
  %v1945 = vunpack.c.l.b16 %v198
  %v1946 = vunpack.c.l.b16 %v199
  %v1947 = vunpack.c.l.b16 %v200
  %v1948 = vunpack.c.l.b16 %v201
  %v1949 = vunpack.c.l.b16 %v202
  %v1950 = vunpack.c.l.b16 %v203
  %v1951 = vunpack.c.l.b16 %v204
  %v1952 = vunpack.c.l.b16 %v205
  %v1953 = vunpack.c.l.b16 %v206
  %v1954 = vunpack.c.l.b16 %v207
  %v1955 = vunpack.c.l.b16 %v208
  %v1956 = vunpack.c.l.b16 %v209
  %v1957 = vunpack.c.l.b16 %v210
  %v1958 = vunpack.c.l.b16 %v211
  %v1959 = vunpack.c.l.b16 %v212
  %v1960 = vunpack.c.l.b16 %v213
  %v1961 = vunpack.c.l.b16 %v214
  %v1962 = vunpack.c.l.b16 %v215
  %v1963 = vunpack.c.l.b16 %v216
  %v1964 = vunpack.c.l.b16 %v217
  %v1965 = vunpack.c.l.b16 %v218
  %v1966 = vunpack.c.l.b16 %v219
  %v1967 = vunpack.c.l.b16 %v220
  %v1968 = vunpack.c.l.b16 %v221
  %v1969 = vunpack.c.l.b16 %v222
  %v1970 = vunpack.c.l.b16 %v223
  %v1971 = vunpack.c.l.b16 %v224
  %v1972 = vunpack.c.l.b16 %v225
  %v1973 = vunpack.c.l.b16 %v226
  %v1974 = vunpack.c.l.b16 %v227
  %v1975 = vunpack.c.l.b16 %v228
  %v1976 = vunpack.c.l.b16 %v229
  %v1977 = vunpack.c.l.b16 %v230
  %v1978 = vunpack.c.l.b16 %v231
  %v1979 = vunpack.c.l.b16 %v232
  %v1980 = vunpack.c.l.b16 %v233
  %v1981 = vunpack.c.l.b16 %v234
  %v1982 = vunpack.c.l.b16 %v235
  %v1983 = vunpack.c.l.b16 %v236
  %v1984 = vunpack.c.l.b16 %v237
  %v1985 = vunpack.c.l.b16 %v238
  %v1986 = vunpack.c.l.b16 %v239
  %v1987 = vunpack.c.l.b16 %v240
  %v1988 = vunpack.c.l.b16 %v241
  %v1989 = vunpack.c.l.b16 %v242
  %v1990 = vunpack.c.l.b16 %v243
  %v1991 = vunpack.c.l.b16 %v244
  %v1992 = vunpack.c.l.b16 %v245
  %v1993 = vunpack.c.l.b16 %v246
  %v1994 = vunpack.c.l.b16 %v247
  %v1995 = vunpack.c.l.b16 %v248
  %v1996 = vunpack.c.l.b16 %v249
  %v1997 = vunpack.c.l.b16 %v250
  %v1998 = vunpack.c.l.b16 %v251
  %v1999 = vunpack.c.l.b16 %v252
  %v2000 = vunpack.c.l.b16 %v253
  %v2001 = vunpack.c.l.b16 %v254
  %v2002 = vunpack.c.l.b16 %v255
  %v2003 = vunpack.c.l.b16 %v256
  %v2004 = vunpack.c.l.b16 %v257
  %v2005 = vunpack.c.l.b16 %v258
  %v2006 = vunpack.c.l.b16 %v259
  %v2007 = vunpack.c.l.b16 %v260
  %v2008 = vunpack.c.l.b16 %v261
  %v2009 = vunpack.c.l.b16 %v262
  %v2010 = vunpack.c.l.b16 %v263
  %v2011 = vunpack.c.l.b16 %v264
  %v2012 = vunpack.c.l.b16 %v265
  %v2013 = vunpack.c.l.b16 %v266
  %v2014 = vunpack.c.l.b16 %v267
  %v2015 = vunpack.c.l.b16 %v268
  %v2016 = vunpack.c.l.b16 %v269
  %v2017 = vunpack.c.l.b16 %v270
  %v2018 = vunpack.c.l.b16 %v271
  %v2019 = vunpack.c.l.b16 %v272
  %v2020 = vunpack.c.l.b16 %v273
  %v2021 = vunpack.c.l.b16 %v274
  %v2022 = vunpack.c.l.b16 %v275
  %v2023 = vunpack.c.l.b16 %v276
  %v2024 = vunpack.c.l.b16 %v277
  %v2025 = vunpack.c.l.b16 %v278
  %v2026 = vunpack.c.l.b16 %v279
  %v2027 = vunpack.c.l.b16 %v280
  %v2028 = vunpack.c.l.b16 %v281
  %v2029 = vunpack.c.l.b16 %v282
  %v2030 = vunpack.c.l.b16 %v283
  %v2031 = vunpack.c.l.b16 %v284
  %v2032 = vunpack.c.l.b16 %v285
  %v2033 = vunpack.c.l.b16 %v286
  %v2034 = vunpack.c.l.b16 %v287
  %v2035 = vunpack.c.l.b16 %v288
  %v2036 = vunpack.c.l.b16 %v289
  %v2037 = vunpack.c.l.b16 %v290
  %v2038 = vunpack.c.l.b16 %v291
  %v2039 = vunpack.c.l.b16 %v292
  %v2040 = vunpack.c.l.b16 %v293
  %v2041 = vunpack.c.l.b16 %v294
  %v2042 = vunpack.c.l.b16 %v295
  %v2043 = vunpack.c.l.b16 %v296
  %v2044 = vunpack.c.l.b16 %v297
  %v2045 = vunpack.c.l.b16 %v298
  %v2046 = vunpack.c.l.b16 %v299
  %v2047 = vunpack.c.l.b16 %v300
  %v2048 = vunpack.c.l.b16 %v301
  %v2049 = vunpack.c.l.b16 %v302
  %v2050 = vunpack.c.l.b16 %v303
  %v2051 = vunpack.c.l.b16 %v304
  %v2052 = vunpack.c.l.b16 %v305
  %v2053 = vunpack.c.l.b16 %v306
  %v2054 = vunpack.c.l.b16 %v307
  %v2055 = vunpack.c.l.b16 %v308
  %v2056 = vunpack.c.l.b16 %v309
  %v2057 = vunpack.c.l.b16 %v310
  %v2058 = vunpack.c.l.b16 %v311
  %v2059 = vunpack.c.l.b16 %v312
  %v2060 = vunpack.c.l.b16 %v313
  %v2061 = vunpack.c.l.b16 %v314
  %v2062 = vunpack.c.l.b16 %v315
  %v2063 = vunpack.c.l.b16 %v316
  %v2064 = vunpack.c.l.b16 %v317
  %v2065 = vunpack.c.l.b16 %v318
  %v2066 = vunpack.c.l.b16 %v319
  %v2067 = vunpack.c.l.b16 %v320
  %v2068 = vunpack.c.l.b16 %v321
  %v2069 = vunpack.c.l.b16 %v322
  %v2070 = vunpack.c.l.b16 %v323
  %v2071 = vunpack.c.l.b16 %v324
  %v2072 = vunpack.c.l.b16 %v325
  %v2073 = vunpack.c.l.b16 %v326
  %v2074 = vunpack.c.l.b16 %v327
  %v2075 = vunpack.c.l.b16 %v328
  %v2076 = vunpack.c.l.b16 %v329
  %v2077 = vunpack.c.l.b16 %v330
  %v2078 = vunpack.c.l.b16 %v331
  %v2079 = vunpack.c.l.b16 %v332
  %v2080 = vunpack.c.l.b16 %v333
  %v2081 = vunpack.c.l.b16 %v334
  %v2082 = vunpack.c.l.b16 %v335
  %v2083 = vunpack.c.l.b16 %v336
  %v2084 = vunpack.c.l.b16 %v337
  %v2085 = vunpack.c.l.b16 %v338
  %v2086 = vunpack.c.l.b16 %v339
  %v2087 = vunpack.c.l.b16 %v340
  %v2088 = vunpack.c.l.b16 %v341
  %v2089 = vunpack.c.l.b16 %v342
  %v2090 = vunpack.c.l.b16 %v343
  %v2091 = vunpack.c.l.b16 %v344
  %v2092 = vunpack.c.l.b16 %v345
  %v2093 = vunpack.c.l.b16 %v346
  %v2094 = vunpack.c.l.b16 %v347
  %v2095 = vunpack.c.l.b16 %v348
  %v2096 = vunpack.c.l.b16 %v349
  %v2097 = vunpack.c.l.b16 %v350
  %v2098 = vunpack.c.l.b16 %v351
  %v2099 = vunpack.c.l.b16 %v352
  %v2100 = vunpack.c.l.b16 %v353
  %v2101 = vunpack.c.l.b16 %v354
  %v2102 = vunpack.c.l.b16 %v355
  %v2103 = vunpack.c.l.b16 %v356
  %v2104 = vunpack.c.l.b16 %v357
  %v2105 = vunpack.c.l.b16 %v358
  %v2106 = vunpack.c.l.b16 %v359
  %v2107 = vunpack.c.l.b16 %v360
  %v2108 = vunpack.c.l.b16 %v361
  %v2109 = vunpack.c.l.b16 %v362
  %v2110 = vunpack.c.l.b16 %v363
  %v2111 = vunpack.c.l.b16 %v364
  %v2112 = vunpack.c.l.b16 %v365
  %v2113 = vunpack.c.l.b16 %v366
  %v2114 = vunpack.c.l.b16 %v367
  %v2115 = vunpack.c.l.b16 %v368
  %v2116 = vunpack.c.l.b16 %v369
  %v2117 = vunpack.c.l.b16 %v370
  %v2118 = vunpack.c.l.b16 %v371
  %v2119 = vunpack.c.l.b16 %v372
  %v2120 = vunpack.c.l.b16 %v373
  %v2121 = vunpack.c.l.b16 %v374
  %v2122 = vunpack.c.l.b16 %v375
  %v2123 = vunpack.c.l.b16 %v376
  %v2124 = vunpack.c.l.b16 %v377
  %v2125 = vunpack.c.l.b16 %v378
  %v2126 = vunpack.c.l.b16 %v379
  %v2127 = vunpack.c.l.b16 %v380
  %v2128 = vunpack.c.l.b16 %v381
  %v2129 = vunpack.c.l.b16 %v382
  %v2130 = vunpack.c.l.b16 %v383
  %v2131 = vunpack.c.l.b16 %v384
  %v2132 = vunpack.c.l.b16 %v385
  %v2133 = vunpack.c.l.b16 %v386
  %v2134 = vunpack.c.l.b16 %v387
  %v2135 = vunpack.c.l.b16 %v388
  %v2136 = vunpack.c.l.b16 %v389
  %v2137 = vunpack.c.l.b16 %v390
  %v2138 = vunpack.c.l.b16 %v391
  %v2139 = vunpack.c.l.b16 %v392
  %v2140 = vunpack.c.l.b16 %v393
  %v2141 = vunpack.c.l.b16 %v394
  %v2142 = vunpack.c.l.b16 %v395
  %v2143 = vunpack.c.l.b16 %v396
  %v2144 = vunpack.c.l.b16 %v397
  %v2145 = vunpack.c.l.b16 %v398
  %v2146 = vunpack.c.l.b16 %v399
  %v2147 = vunpack.c.l.b16 %v400
  %v2148 = vunpack.c.l.b16 %v401
  %v2149 = vunpack.c.l.b16 %v402
  %v2150 = vunpack.c.l.b16 %v403
  %v2151 = vunpack.c.l.b16 %v404
  %v2152 = vunpack.c.l.b16 %v405
  %v2153 = vunpack.c.l.b16 %v406
  %v2154 = vunpack.c.l.b16 %v407
  %v2155 = vunpack.c.l.b16 %v408
  %v2156 = vunpack.c.l.b16 %v409
  %v2157 = vunpack.c.l.b16 %v410
  %v2158 = vunpack.c.l.b16 %v411
  %v2159 = vunpack.c.l.b16 %v412
  %v2160 = vunpack.c.l.b16 %v413
  %v2161 = vunpack.c.l.b16 %v414
  %v2162 = vunpack.c.l.b16 %v415
  %v2163 = vunpack.c.l.b16 %v416
  %v2164 = vunpack.c.l.b16 %v417
  %v2165 = vunpack.c.l.b16 %v418
  %v2166 = vunpack.c.l.b16 %v419
  %v2167 = vunpack.c.l.b16 %v420
  %v2168 = vunpack.c.l.b16 %v421
  %v2169 = vunpack.c.l.b16 %v422
  %v2170 = vunpack.c.l.b16 %v423
  %v2171 = vunpack.c.l.b16 %v424
  %v2172 = vunpack.c.l.b16 %v425
  %v2173 = vunpack.c.l.b16 %v426
  %v2174 = vunpack.c.l.b16 %v427
  %v2175 = vunpack.c.l.b16 %v428
  %v2176 = vunpack.c.l.b16 %v429
  %v2177 = vunpack.c.l.b16 %v430
  %v2178 = vunpack.c.l.b16 %v431
  %v2179 = vunpack.c.l.b16 %v432
  %v2180 = vunpack.c.l.b16 %v433
  %v2181 = vunpack.c.l.b16 %v434
  %v2182 = vunpack.c.l.b16 %v435
  %v2183 = vunpack.c.l.b16 %v436
  %v2184 = vunpack.c.l.b16 %v437
  %v2185 = vunpack.c.l.b16 %v438
  %v2186 = vunpack.c.l.b16 %v439
  %v2187 = vunpack.c.l.b16 %v440
  %v2188 = vunpack.c.l.b16 %v441
  %v2189 = vunpack.c.l.b16 %v442
  %v2190 = vunpack.c.l.b16 %v443
  %v2191 = vunpack.c.l.b16 %v444
  %v2192 = vunpack.c.l.b16 %v445
  %v2193 = vunpack.c.l.b16 %v446
  %v2194 = vunpack.c.l.b16 %v447
  %v2195 = vunpack.c.l.b16 %v448
  %v2196 = vunpack.c.l.b16 %v449
  %v2197 = vunpack.c.l.b16 %v450
  %v2198 = vunpack.c.l.b16 %v451
  %v2199 = vunpack.c.l.b16 %v452
  %v2200 = vunpack.c.l.b16 %v453
  %v2201 = vunpack.c.l.b16 %v454
  %v2202 = vunpack.c.l.b16 %v455
  %v2203 = vunpack.c.l.b16 %v456
  %v2204 = vunpack.c.l.b16 %v457
  %v2205 = vunpack.c.l.b16 %v458
  %v2206 = vunpack.c.l.b16 %v459
  %v2207 = vunpack.c.l.b16 %v460
  %v2208 = vunpack.c.l.b16 %v461
  %v2209 = vunpack.c.l.b16 %v462
  %v2210 = vunpack.c.l.b16 %v463
  %v2211 = vunpack.c.l.b16 %v464
  %v2212 = vunpack.c.l.b16 %v465
  %v2213 = vunpack.c.l.b16 %v466
  %v2214 = vunpack.c.l.b16 %v467
  %v2215 = vunpack.c.l.b16 %v468
  %v2216 = vunpack.c.l.b16 %v469
  %v2217 = vunpack.c.l.b16 %v470
  %v2218 = vunpack.c.l.b16 %v471
  %v2219 = vunpack.c.l.b16 %v472
  %v2220 = vunpack.c.l.b16 %v473
  %v2221 = vunpack.c.l.b16 %v474
  %v2222 = vunpack.c.l.b16 %v475
  %v2223 = vunpack.c.l.b16 %v476
  %v2224 = vunpack.c.l.b16 %v477
  %v2225 = vunpack.c.l.b16 %v478
  %v2226 = vunpack.c.l.b16 %v479
  %v2227 = vunpack.c.l.b16 %v480
  %v2228 = vunpack.c.l.b16 %v481
  %v2229 = vunpack.c.l.b16 %v482
  %v2230 = vunpack.c.l.b16 %v483
  %v2231 = vunpack.c.l.b16 %v484
  %v2232 = vunpack.c.l.b16 %v485
  %v2233 = vunpack.c.l.b16 %v486
  %v2234 = vunpack.c.l.b16 %v487
  %v2235 = vunpack.c.l.b16 %v488
  %v2236 = vunpack.c.l.b16 %v489
  %v2237 = vunpack.c.l.b16 %v490
  %v2238 = vunpack.c.l.b16 %v491
  %v2239 = vunpack.c.l.b16 %v492
  %v2240 = vunpack.c.l.b16 %v493
  %v2241 = vunpack.c.l.b16 %v494
  %v2242 = vunpack.c.l.b16 %v495
  %v2243 = vunpack.c.l.b16 %v496
  %v2244 = vunpack.c.l.b16 %v497
  %v2245 = vunpack.c.l.b16 %v498
  %v2246 = vunpack.c.l.b16 %v499
  %v2247 = vunpack.c.l.b16 %v500
  %v2248 = vunpack.c.l.b16 %v501
  %v2249 = vunpack.c.l.b16 %v502
  %v2250 = vunpack.c.l.b16 %v503
  %v2251 = vunpack.c.l.b16 %v504
  %v2252 = vunpack.c.l.b16 %v505
  %v2253 = vunpack.c.l.b16 %v506
  %v2254 = vunpack.c.l.b16 %v507
  %v2255 = vunpack.c.l.b16 %v508
  %v2256 = vunpack.c.l.b16 %v509
  %v2257 = vunpack.c.l.b16 %v510
  %v2258 = vunpack.c.l.b16 %v511
  %v2259 = vunpack.c.l.b16 %v512
  %v2260 = vunpack.c.l.b16 %v513
  %v2261 = vunpack.c.l.b16 %v514
  %v2262 = vunpack.c.l.b16 %v515
  %v2263 = vunpack.c.l.b16 %v516
  %v2264 = vunpack.c.l.b16 %v517
  %v2265 = vunpack.c.l.b16 %v518
  %v2266 = vunpack.c.l.b16 %v519
  %v2267 = vunpack.c.l.b16 %v520
  %v2268 = vunpack.c.l.b16 %v521
  %v2269 = vunpack.c.l.b16 %v522
  %v2270 = vunpack.c.l.b16 %v523
  %v2271 = vunpack.c.l.b16 %v524
  %v2272 = vunpack.c.l.b16 %v525
  %v2273 = vunpack.c.l.b16 %v526
  %v2274 = vunpack.c.l.b16 %v527
  %v2275 = vunpack.c.l.b16 %v528
  %v2276 = vunpack.c.l.b16 %v529
  %v2277 = vunpack.c.l.b16 %v530
  %v2278 = vunpack.c.l.b16 %v531
  %v2279 = vunpack.c.l.b16 %v532
  %v2280 = vunpack.c.l.b16 %v533
  %v2281 = vunpack.c.l.b16 %v534
  %v2282 = vunpack.c.l.b16 %v535
  %v2283 = vunpack.c.l.b16 %v536
  %v2284 = vunpack.c.l.b16 %v537
  %v2285 = vunpack.c.l.b16 %v538
  %v2286 = vunpack.c.l.b16 %v539
  %v2287 = vunpack.c.l.b16 %v540
  %v2288 = vunpack.c.l.b16 %v541
  %v2289 = vunpack.c.l.b16 %v542
  %v2290 = vunpack.c.l.b16 %v543
  %v2291 = vunpack.c.l.b16 %v544
  %v2292 = vunpack.c.l.b16 %v545
  %v2293 = vunpack.c.l.b16 %v546
  %v2294 = vunpack.c.l.b16 %v547
  %v2295 = vunpack.c.l.b16 %v548
  %v2296 = vunpack.c.l.b16 %v549
  %v2297 = vunpack.c.l.b16 %v550
  %v2298 = vunpack.c.l.b16 %v551
  %v2299 = vunpack.c.l.b16 %v552
  %v2300 = vunpack.c.l.b16 %v553
  %v2301 = vunpack.c.l.b16 %v554
  %v2302 = vunpack.c.l.b16 %v555
  %v2303 = vunpack.c.l.b16 %v556
  %v2304 = vunpack.c.l.b16 %v557
  %v2305 = vunpack.c.l.b16 %v558
  %v2306 = vunpack.c.l.b16 %v559
  %v2307 = vunpack.c.l.b16 %v560
  %v2308 = vunpack.c.l.b16 %v561
  %v2309 = vunpack.c.l.b16 %v562
  %v2310 = vunpack.c.l.b16 %v563
  %v2311 = vunpack.c.l.b16 %v564
  %v2312 = vunpack.c.l.b16 %v565
  %v2313 = vunpack.c.l.b16 %v566
  %v2314 = vunpack.c.l.b16 %v567
  %v2315 = vunpack.c.l.b16 %v568
  %v2316 = vunpack.c.l.b16 %v569
  %v2317 = vunpack.c.l.b16 %v570
  %v2318 = vunpack.c.l.b16 %v571
  %v2319 = vunpack.c.l.b16 %v572
  %v2320 = vunpack.c.l.b16 %v573
  %v2321 = vunpack.c.l.b16 %v574
  %v2322 = vunpack.c.l.b16 %v575
  %v2323 = vunpack.c.l.b16 %v576
  %v2324 = vunpack.c.l.b16 %v577
  %v2325 = vunpack.c.l.b16 %v578
  %v2326 = vunpack.c.l.b16 %v579
  %v2327 = vunpack.c.l.b16 %v580
  %v2328 = vunpack.c.l.b16 %v581
  %v2329 = vunpack.c.l.b16 %v582
  %v2330 = vunpack.c.l.b16 %v583
  %v2331 = vunpack.c.l.b16 %v584
  %v2332 = vunpack.c.l.b16 %v585
  %v2333 = vunpack.c.l.b16 %v586
  %v2334 = vunpack.c.l.b16 %v587
  %v2335 = vunpack.c.l.b16 %v588
  %v2336 = vunpack.c.l.b16 %v589
  %v2337 = vunpack.c.l.b16 %v590
  %v2338 = vunpack.c.l.b16 %v591
  %v2339 = vunpack.c.l.b16 %v592
  %v2340 = vunpack.c.l.b16 %v593
  %v2341 = vunpack.c.l.b16 %v594
  %v2342 = vunpack.c.l.b16 %v595
  %v2343 = vunpack.c.l.b16 %v596
  %v2344 = vunpack.c.l.b16 %v597
  %v2345 = vunpack.c.l.b16 %v598
  %v2346 = vunpack.c.l.b16 %v599
  %v2347 = vunpack.c.l.b16 %v600
  %v2348 = vunpack.c.l.b16 %v601
  %v2349 = vunpack.c.l.b16 %v602
  %v2350 = vunpack.c.l.b16 %v603
  %v2351 = vunpack.c.l.b16 %v604
  %v2352 = vunpack.c.l.b16 %v605
  %v2353 = vunpack.c.l.b16 %v606
  %v2354 = vunpack.c.l.b16 %v607
  %v2355 = vunpack.c.l.b16 %v608
  %v2356 = vunpack.c.l.b16 %v609
  %v2357 = vunpack.c.l.b16 %v610
  %v2358 = vunpack.c.l.b16 %v611
  %v2359 = vunpack.c.l.b16 %v612
  %v2360 = vunpack.c.l.b16 %v613
  %v2361 = vunpack.c.l.b16 %v614
  %v2362 = vunpack.c.l.b16 %v615
  %v2363 = vunpack.c.l.b16 %v616
  %v2364 = vunpack.c.l.b16 %v617
  %v2365 = vunpack.c.l.b16 %v618
  %v2366 = vunpack.c.l.b16 %v619
  %v2367 = vunpack.c.l.b16 %v620
  %v2368 = vunpack.c.l.b16 %v621
  %v2369 = vunpack.c.l.b16 %v622
  %v2370 = vunpack.c.l.b16 %v623
  %v2371 = vunpack.c.l.b16 %v624
  %v2372 = vunpack.c.l.b16 %v625
  %v2373 = vunpack.c.l.b16 %v626
  %v2374 = vunpack.c.l.b16 %v627
  %v2375 = vunpack.c.l.b16 %v628
  %v2376 = vunpack.c.l.b16 %v629
  %v2377 = vunpack.c.l.b16 %v630
  %v2378 = vunpack.c.l.b16 %v631
  %v2379 = vunpack.c.l.b16 %v632
  %v2380 = vunpack.c.l.b16 %v633
  %v2381 = vunpack.c.l.b16 %v634
  %v2382 = vunpack.c.l.b16 %v635
  %v2383 = vunpack.c.l.b16 %v636
  %v2384 = vunpack.c.l.b16 %v637
  %v2385 = vunpack.c.l.b16 %v638
  %v2386 = vunpack.c.l.b16 %v639
  %v2387 = vunpack.c.l.b16 %v640
  %v2388 = vunpack.c.l.b16 %v641
  %v2389 = vunpack.c.l.b16 %v642
  %v2390 = vunpack.c.l.b16 %v643
  %v2391 = vunpack.c.l.b16 %v644
  %v2392 = vunpack.c.l.b16 %v645
  %v2393 = vunpack.c.l.b16 %v646
  %v2394 = vunpack.c.l.b16 %v647
  %v2395 = vunpack.c.l.b16 %v648
  %v2396 = vunpack.c.l.b16 %v649
  %v2397 = vunpack.c.l.b16 %v650
  %v2398 = vunpack.c.l.b16 %v651
  %v2399 = vunpack.c.l.b16 %v652
  %v2400 = vunpack.c.l.b16 %v653
  %v2401 = vunpack.c.l.b16 %v654
  %v2402 = vunpack.c.l.b16 %v655
  %v2403 = vunpack.c.l.b16 %v656
  %v2404 = vunpack.c.l.b16 %v657
  %v2405 = vunpack.c.l.b16 %v658
  %v2406 = vunpack.c.l.b16 %v659
  %v2407 = vunpack.c.l.b16 %v660
  %v2408 = vunpack.c.l.b16 %v661
  %v2409 = vunpack.c.l.b16 %v662
  %v2410 = vunpack.c.l.b16 %v663
  %v2411 = vunpack.c.l.b16 %v664
  %v2412 = vunpack.c.l.b16 %v665
  %v2413 = vunpack.c.l.b16 %v666
  %v2414 = vunpack.c.l.b16 %v667
  %v2415 = vunpack.c.l.b16 %v668
  %v2416 = vunpack.c.l.b16 %v669
  %v2417 = vunpack.c.l.b16 %v670
  %v2418 = vunpack.c.l.b16 %v671
  %v2419 = vunpack.c.l.b16 %v672
  %v2420 = vunpack.c.l.b16 %v673
  %v2421 = vunpack.c.l.b16 %v674
  %v2422 = vunpack.c.l.b16 %v675
  %v2423 = vunpack.c.l.b16 %v676
  %v2424 = vunpack.c.l.b16 %v677
  %v2425 = vunpack.c.l.b16 %v678
  %v2426 = vunpack.c.l.b16 %v679
  %v2427 = vunpack.c.l.b16 %v680
  %v2428 = vunpack.c.l.b16 %v681
  %v2429 = vunpack.c.l.b16 %v682
  %v2430 = vunpack.c.l.b16 %v683
  %v2431 = vunpack.c.l.b16 %v684
  %v2432 = vunpack.c.l.b16 %v685
  %v2433 = vunpack.c.l.b16 %v686
  %v2434 = vunpack.c.l.b16 %v687
  %v2435 = vunpack.c.l.b16 %v688
  %v2436 = vunpack.c.l.b16 %v689
  %v2437 = vunpack.c.l.b16 %v690
  %v2438 = vunpack.c.l.b16 %v691
  %v2439 = vunpack.c.l.b16 %v692
  %v2440 = vunpack.c.l.b16 %v693
  %v2441 = vunpack.c.l.b16 %v694
  %v2442 = vunpack.c.l.b16 %v695
  %v2443 = vunpack.c.l.b16 %v696
  %v2444 = vunpack.c.l.b16 %v697
  %v2445 = vunpack.c.l.b16 %v698
  %v2446 = vunpack.c.l.b16 %v699
  %v2447 = vunpack.c.l.b16 %v700
  %v2448 = vunpack.c.l.b16 %v701
  %v2449 = vunpack.c.l.b16 %v702
  %v2450 = vunpack.c.l.b16 %v703
  %v2451 = vunpack.c.l.b16 %v704
  %v2452 = vunpack.c.l.b16 %v705
  %v2453 = vunpack.c.l.b16 %v706
  %v2454 = vunpack.c.l.b16 %v707
  %v2455 = vunpack.c.l.b16 %v708
  %v2456 = vunpack.c.l.b16 %v709
  %v2457 = vunpack.c.l.b16 %v710
  %v2458 = vunpack.c.l.b16 %v711
  %v2459 = vunpack.c.l.b16 %v712
  %v2460 = vunpack.c.l.b16 %v713
  %v2461 = vunpack.c.l.b16 %v714
  %v2462 = vunpack.c.l.b16 %v715
  %v2463 = vunpack.c.l.b16 %v716
  %v2464 = vunpack.c.l.b16 %v717
  %v2465 = vunpack.c.l.b16 %v718
  %v2466 = vunpack.c.l.b16 %v719
  %v2467 = vunpack.c.l.b16 %v720
  %v2468 = vunpack.c.l.b16 %v721
  %v2469 = vunpack.c.l.b16 %v722
  %v2470 = vunpack.c.l.b16 %v723
  %v2471 = vunpack.c.l.b16 %v724
  %v2472 = vunpack.c.l.b16 %v725
  %v2473 = vunpack.c.l.b16 %v726
  %v2474 = vunpack.c.l.b16 %v727
  %v2475 = vunpack.c.l.b16 %v728
  %v2476 = vunpack.c.l.b16 %v729
  %v2477 = vunpack.c.l.b16 %v730
  %v2478 = vunpack.c.l.b16 %v731
  %v2479 = vunpack.c.l.b16 %v732
  %v2480 = vunpack.c.l.b16 %v733
  %v2481 = vunpack.c.l.b16 %v734
  %v2482 = vunpack.c.l.b16 %v735
  %v2483 = vunpack.c.l.b16 %v736
  %v2484 = vunpack.c.l.b16 %v737
  %v2485 = vunpack.c.l.b16 %v738
  %v2486 = vunpack.c.l.b16 %v739
  %v2487 = vunpack.c.l.b16 %v740
  %v2488 = vunpack.c.l.b16 %v741
  %v2489 = vunpack.c.l.b16 %v742
  %v2490 = vunpack.c.l.b16 %v743
  %v2491 = vunpack.c.l.b16 %v744
  %v2492 = vunpack.c.l.b16 %v745
  %v2493 = vunpack.c.l.b16 %v746
  %v2494 = vunpack.c.l.b16 %v747
  %v2495 = vunpack.c.l.b16 %v748
  %v2496 = vunpack.c.l.b16 %v749
  %v2497 = vunpack.c.l.b16 %v750
  %v2498 = vunpack.c.l.b16 %v751
  %v2499 = vunpack.c.l.b16 %v752
  %v2500 = vunpack.c.l.b16 %v753
  %v2501 = vunpack.c.l.b16 %v754
  %v2502 = vunpack.c.l.b16 %v755
  %v2503 = vunpack.c.l.b16 %v756
  %v2504 = vunpack.c.l.b16 %v757
  %v2505 = vunpack.c.l.b16 %v758
  %v2506 = vunpack.c.l.b16 %v759
  %v2507 = vunpack.c.l.b16 %v760
  %v2508 = vunpack.c.l.b16 %v761
  %v2509 = vunpack.c.l.b16 %v762
  %v2510 = vunpack.c.l.b16 %v763
  %v2511 = vunpack.c.l.b16 %v764
  %v2512 = vunpack.c.l.b16 %v765
  %v2513 = vunpack.c.l.b16 %v766
  %v2514 = vunpack.c.l.b16 %v767
  %v2515 = vunpack.c.l.b16 %v768
  %v2516 = vunpack.c.l.b16 %v769
  %v2517 = vunpack.c.l.b16 %v770
  %v2518 = vunpack.c.l.b16 %v771
  %v2519 = vunpack.c.l.b16 %v772
  %v2520 = vunpack.c.l.b16 %v773
  %v2521 = vunpack.c.l.b16 %v774
  %v2522 = vunpack.c.l.b16 %v775
  %v2523 = vunpack.c.l.b16 %v776
  %v2524 = vunpack.c.l.b16 %v777
  %v2525 = vunpack.c.l.b16 %v778
  %v2526 = vunpack.c.l.b16 %v779
  %v2527 = vunpack.c.l.b16 %v780
  %v2528 = vunpack.c.l.b16 %v781
  %v2529 = vunpack.c.l.b16 %v782
  %v2530 = vunpack.c.l.b16 %v783
  %v2531 = vunpack.c.l.b16 %v784
  %v2532 = vunpack.c.l.b16 %v785
  %v2533 = vunpack.c.l.b16 %v786
  %v2534 = vunpack.c.l.b16 %v787
  %v2535 = vunpack.c.l.b16 %v788
  %v2536 = vunpack.c.l.b16 %v789
  %v2537 = vunpack.c.l.b16 %v790
  %v2538 = vunpack.c.l.b16 %v791
  %v2539 = vunpack.c.l.b16 %v792
  %v2540 = vunpack.c.l.b16 %v793
  %v2541 = vunpack.c.l.b16 %v794
  %v2542 = vunpack.c.l.b16 %v795
  %v2543 = vunpack.c.l.b16 %v796
  %v2544 = vunpack.c.l.b16 %v797
  %v2545 = vunpack.c.l.b16 %v798
  %v2546 = vunpack.c.l.b16 %v799
  %v2547 = vunpack.c.l.b16 %v800
  %v2548 = vunpack.c.l.b16 %v801
  %v2549 = vunpack.c.l.b16 %v802
  %v2550 = vunpack.c.l.b16 %v803
  %v2551 = vunpack.c.l.b16 %v804
  %v2552 = vunpack.c.l.b16 %v805
  %v2553 = vunpack.c.l.b16 %v806
  %v2554 = vunpack.c.l.b16 %v807
  %v2555 = vunpack.c.l.b16 %v808
  %v2556 = vunpack.c.l.b16 %v809
  %v2557 = vunpack.c.l.b16 %v810
  %v2558 = vunpack.c.l.b16 %v811
  %v2559 = vunpack.c.l.b16 %v812
  %v2560 = vunpack.c.l.b16 %v813
  %v2561 = vunpack.c.l.b16 %v814
  %v2562 = vunpack.c.l.b16 %v815
  %v2563 = vunpack.c.l.b16 %v816
  %v2564 = vunpack.c.l.b16 %v817
  %v2565 = vunpack.c.l.b16 %v818
  %v2566 = vunpack.c.l.b16 %v819
  %v2567 = vunpack.c.l.b16 %v820
  %v2568 = vunpack.c.l.b16 %v821
  %v2569 = vunpack.c.l.b16 %v822
  %v2570 = vunpack.c.l.b16 %v823
  %v2571 = vunpack.c.l.b16 %v824
  %v2572 = vunpack.c.l.b16 %v825
  %v2573 = vunpack.c.l.b16 %v826
  %v2574 = vunpack.c.l.b16 %v827
  %v2575 = vunpack.c.l.b16 %v828
  %v2576 = vunpack.c.l.b16 %v829
  %v2577 = vpack.c.b16 %v1794, %v1793
  %v2578 = vpack.c.b16 %v1796, %v1795
  %v2579 = vpack.c.b16 %v1798, %v1797
  %v2580 = vpack.c.b16 %v1800, %v1799
  %v2581 = vpack.c.b16 %v1802, %v1801
  %v2582 = vpack.c.b16 %v1804, %v1803
  %v2583 = vpack.c.b16 %v1806, %v1805
  %v2584 = vpack.c.b16 %v1808, %v1807
  %v2585 = vpack.c.b16 %v1810, %v1809
  %v2586 = vpack.c.b16 %v1812, %v1811
  %v2587 = vpack.c.b16 %v1814, %v1813
  %v2588 = vpack.c.b16 %v1816, %v1815
  %v2589 = vpack.c.b16 %v1818, %v1817
  %v2590 = vpack.c.b16 %v1820, %v1819
  %v2591 = vpack.c.b16 %v1822, %v1821
  %v2592 = vpack.c.b16 %v1824, %v1823
  %v2593 = vpack.c.b16 %v1826, %v1825
  %v2594 = vpack.c.b16 %v1828, %v1827
  %v2595 = vpack.c.b16 %v1830, %v1829
  %v2596 = vpack.c.b16 %v1832, %v1831
  %v2597 = vpack.c.b16 %v1834, %v1833
  %v2598 = vpack.c.b16 %v1836, %v1835
  %v2599 = vpack.c.b16 %v1838, %v1837
  %v2600 = vpack.c.b16 %v1840, %v1839
  %v2601 = vpack.c.b16 %v1842, %v1841
  %v2602 = vpack.c.b16 %v1844, %v1843
  %v2603 = vpack.c.b16 %v1846, %v1845
  %v2604 = vpack.c.b16 %v1848, %v1847
  %v2605 = vpack.c.b16 %v1850, %v1849
  %v2606 = vpack.c.b16 %v1852, %v1851
  %v2607 = vpack.c.b16 %v1854, %v1853
  %v2608 = vpack.c.b16 %v1856, %v1855
  %v2609 = vpack.c.b16 %v1858, %v1857
  %v2610 = vpack.c.b16 %v1860, %v1859
  %v2611 = vpack.c.b16 %v1862, %v1861
  %v2612 = vpack.c.b16 %v1864, %v1863
  %v2613 = vpack.c.b16 %v1866, %v1865
  %v2614 = vpack.c.b16 %v1868, %v1867
  %v2615 = vpack.c.b16 %v1870, %v1869
  %v2616 = vpack.c.b16 %v1872, %v1871
  %v2617 = vpack.c.b16 %v1874, %v1873
  %v2618 = vpack.c.b16 %v1876, %v1875
  %v2619 = vpack.c.b16 %v1878, %v1877
  %v2620 = vpack.c.b16 %v1880, %v1879
  %v2621 = vpack.c.b16 %v1882, %v1881
  %v2622 = vpack.c.b16 %v1884, %v1883
  %v2623 = vpack.c.b16 %v1886, %v1885
  %v2624 = vpack.c.b16 %v1888, %v1887
  %v2625 = vpack.c.b16 %v1890, %v1889
  %v2626 = vpack.c.b16 %v1892, %v1891
  %v2627 = vpack.c.b16 %v1894, %v1893
  %v2628 = vpack.c.b16 %v1896, %v1895
  %v2629 = vpack.c.b16 %v1898, %v1897
  %v2630 = vpack.c.b16 %v1900, %v1899
  %v2631 = vpack.c.b16 %v1902, %v1901
  %v2632 = vpack.c.b16 %v1904, %v1903
  %v2633 = vpack.c.b16 %v1906, %v1905
  %v2634 = vpack.c.b16 %v1908, %v1907
  %v2635 = vpack.c.b16 %v1910, %v1909
  %v2636 = vpack.c.b16 %v1912, %v1911
  %v2637 = vpack.c.b16 %v1914, %v1913
  %v2638 = vpack.c.b16 %v1916, %v1915
  %v2639 = vpack.c.b16 %v1918, %v1917
  %v2640 = vpack.c.b16 %v1920, %v1919
  %v2641 = vpack.c.b16 %v1922, %v1921
  %v2642 = vpack.c.b16 %v1924, %v1923
  %v2643 = vpack.c.b16 %v1926, %v1925
  %v2644 = vpack.c.b16 %v1928, %v1927
  %v2645 = vpack.c.b16 %v1930, %v1929
  %v2646 = vpack.c.b16 %v1932, %v1931
  %v2647 = vpack.c.b16 %v1934, %v1933
  %v2648 = vpack.c.b16 %v1936, %v1935
  %v2649 = vpack.c.b16 %v1938, %v1937
  %v2650 = vpack.c.b16 %v1940, %v1939
  %v2651 = vpack.c.b16 %v1942, %v1941
  %v2652 = vpack.c.b16 %v1944, %v1943
  %v2653 = vpack.c.b16 %v1946, %v1945
  %v2654 = vpack.c.b16 %v1948, %v1947
  %v2655 = vpack.c.b16 %v1950, %v1949
  %v2656 = vpack.c.b16 %v1952, %v1951
  %v2657 = vpack.c.b16 %v1954, %v1953
  %v2658 = vpack.c.b16 %v1956, %v1955
  %v2659 = vpack.c.b16 %v1958, %v1957
  %v2660 = vpack.c.b16 %v1960, %v1959
  %v2661 = vpack.c.b16 %v1962, %v1961
  %v2662 = vpack.c.b16 %v1964, %v1963
  %v2663 = vpack.c.b16 %v1966, %v1965
  %v2664 = vpack.c.b16 %v1968, %v1967
  %v2665 = vpack.c.b16 %v1970, %v1969
  %v2666 = vpack.c.b16 %v1972, %v1971
  %v2667 = vpack.c.b16 %v1974, %v1973
  %v2668 = vpack.c.b16 %v1976, %v1975
  %v2669 = vpack.c.b16 %v1978, %v1977
  %v2670 = vpack.c.b16 %v1980, %v1979
  %v2671 = vpack.c.b16 %v1982, %v1981
  %v2672 = vpack.c.b16 %v1984, %v1983
  %v2673 = vpack.c.b16 %v1986, %v1985
  %v2674 = vpack.c.b16 %v1988, %v1987
  %v2675 = vpack.c.b16 %v1990, %v1989
  %v2676 = vpack.c.b16 %v1992, %v1991
  %v2677 = vpack.c.b16 %v1994, %v1993
  %v2678 = vpack.c.b16 %v1996, %v1995
  %v2679 = vpack.c.b16 %v1998, %v1997
  %v2680 = vpack.c.b16 %v2000, %v1999
  %v2681 = vpack.c.b16 %v2002, %v2001
  %v2682 = vpack.c.b16 %v2004, %v2003
  %v2683 = vpack.c.b16 %v2006, %v2005
  %v2684 = vpack.c.b16 %v2008, %v2007
  %v2685 = vpack.c.b16 %v2010, %v2009
  %v2686 = vpack.c.b16 %v2012, %v2011
  %v2687 = vpack.c.b16 %v2014, %v2013
  %v2688 = vpack.c.b16 %v2016, %v2015
  %v2689 = vpack.c.b16 %v2018, %v2017
  %v2690 = vpack.c.b16 %v2020, %v2019
  %v2691 = vpack.c.b16 %v2022, %v2021
  %v2692 = vpack.c.b16 %v2024, %v2023
  %v2693 = vpack.c.b16 %v2026, %v2025
  %v2694 = vpack.c.b16 %v2028, %v2027
  %v2695 = vpack.c.b16 %v2030, %v2029
  %v2696 = vpack.c.b16 %v2032, %v2031
  %v2697 = vpack.c.b16 %v2034, %v2033
  %v2698 = vpack.c.b16 %v2036, %v2035
  %v2699 = vpack.c.b16 %v2038, %v2037
  %v2700 = vpack.c.b16 %v2040, %v2039
  %v2701 = vpack.c.b16 %v2042, %v2041
  %v2702 = vpack.c.b16 %v2044, %v2043
  %v2703 = vpack.c.b16 %v2046, %v2045
  %v2704 = vpack.c.b16 %v2048, %v2047
  %v2705 = vpack.c.b16 %v2050, %v2049
  %v2706 = vpack.c.b16 %v2052, %v2051
  %v2707 = vpack.c.b16 %v2054, %v2053
  %v2708 = vpack.c.b16 %v2056, %v2055
  %v2709 = vpack.c.b16 %v2058, %v2057
  %v2710 = vpack.c.b16 %v2060, %v2059
  %v2711 = vpack.c.b16 %v2062, %v2061
  %v2712 = vpack.c.b16 %v2064, %v2063
  %v2713 = vpack.c.b16 %v2066, %v2065
  %v2714 = vpack.c.b16 %v2068, %v2067
  %v2715 = vpack.c.b16 %v2070, %v2069
  %v2716 = vpack.c.b16 %v2072, %v2071
  %v2717 = vpack.c.b16 %v2074, %v2073
  %v2718 = vpack.c.b16 %v2076, %v2075
  %v2719 = vpack.c.b16 %v2078, %v2077
  %v2720 = vpack.c.b16 %v2080, %v2079
  %v2721 = vpack.c.b16 %v2082, %v2081
  %v2722 = vpack.c.b16 %v2084, %v2083
  %v2723 = vpack.c.b16 %v2086, %v2085
  %v2724 = vpack.c.b16 %v2088, %v2087
  %v2725 = vpack.c.b16 %v2090, %v2089
  %v2726 = vpack.c.b16 %v2092, %v2091
  %v2727 = vpack.c.b16 %v2094, %v2093
  %v2728 = vpack.c.b16 %v2096, %v2095
  %v2729 = vpack.c.b16 %v2098, %v2097
  %v2730 = vpack.c.b16 %v2100, %v2099
  %v2731 = vpack.c.b16 %v2102, %v2101
  %v2732 = vpack.c.b16 %v2104, %v2103
  %v2733 = vpack.c.b16 %v2106, %v2105
  %v2734 = vpack.c.b16 %v2108, %v2107
  %v2735 = vpack.c.b16 %v2110, %v2109
  %v2736 = vpack.c.b16 %v2112, %v2111
  %v2737 = vpack.c.b16 %v2114, %v2113
  %v2738 = vpack.c.b16 %v2116, %v2115
  %v2739 = vpack.c.b16 %v2118, %v2117
  %v2740 = vpack.c.b16 %v2120, %v2119
  %v2741 = vpack.c.b16 %v2122, %v2121
  %v2742 = vpack.c.b16 %v2124, %v2123
  %v2743 = vpack.c.b16 %v2126, %v2125
  %v2744 = vpack.c.b16 %v2128, %v2127
  %v2745 = vpack.c.b16 %v2130, %v2129
  %v2746 = vpack.c.b16 %v2132, %v2131
  %v2747 = vpack.c.b16 %v2134, %v2133
  %v2748 = vpack.c.b16 %v2136, %v2135
  %v2749 = vpack.c.b16 %v2138, %v2137
  %v2750 = vpack.c.b16 %v2140, %v2139
  %v2751 = vpack.c.b16 %v2142, %v2141
  %v2752 = vpack.c.b16 %v2144, %v2143
  %v2753 = vpack.c.b16 %v2146, %v2145
  %v2754 = vpack.c.b16 %v2148, %v2147
  %v2755 = vpack.c.b16 %v2150, %v2149
  %v2756 = vpack.c.b16 %v2152, %v2151
  %v2757 = vpack.c.b16 %v2154, %v2153
  %v2758 = vpack.c.b16 %v2156, %v2155
  %v2759 = vpack.c.b16 %v2158, %v2157
  %v2760 = vpack.c.b16 %v2160, %v2159
  %v2761 = vpack.c.b16 %v2162, %v2161
  %v2762 = vpack.c.b16 %v2164, %v2163
  %v2763 = vpack.c.b16 %v2166, %v2165
  %v2764 = vpack.c.b16 %v2168, %v2167
  %v2765 = vpack.c.b16 %v2170, %v2169
  %v2766 = vpack.c.b16 %v2172, %v2171
  %v2767 = vpack.c.b16 %v2174, %v2173
  %v2768 = vpack.c.b16 %v2176, %v2175
  %v2769 = vpack.c.b16 %v2178, %v2177
  %v2770 = vpack.c.b16 %v2180, %v2179
  %v2771 = vpack.c.b16 %v2182, %v2181
  %v2772 = vpack.c.b16 %v2184, %v2183
  %v2773 = vpack.c.b16 %v2186, %v2185
  %v2774 = vpack.c.b16 %v2188, %v2187
  %v2775 = vpack.c.b16 %v2190, %v2189
  %v2776 = vpack.c.b16 %v2192, %v2191
  %v2777 = vpack.c.b16 %v2194, %v2193
  %v2778 = vpack.c.b16 %v2196, %v2195
  %v2779 = vpack.c.b16 %v2198, %v2197
  %v2780 = vpack.c.b16 %v2200, %v2199
  %v2781 = vpack.c.b16 %v2202, %v2201
  %v2782 = vpack.c.b16 %v2204, %v2203
  %v2783 = vpack.c.b16 %v2206, %v2205
  %v2784 = vpack.c.b16 %v2208, %v2207
  %v2785 = vpack.c.b16 %v2210, %v2209
  %v2786 = vpack.c.b16 %v2212, %v2211
  %v2787 = vpack.c.b16 %v2214, %v2213
  %v2788 = vpack.c.b16 %v2216, %v2215
  %v2789 = vpack.c.b16 %v2218, %v2217
  %v2790 = vpack.c.b16 %v2220, %v2219
  %v2791 = vpack.c.b16 %v2222, %v2221
  %v2792 = vpack.c.b16 %v2224, %v2223
  %v2793 = vpack.c.b16 %v2226, %v2225
  %v2794 = vpack.c.b16 %v2228, %v2227
  %v2795 = vpack.c.b16 %v2230, %v2229
  %v2796 = vpack.c.b16 %v2232, %v2231
  %v2797 = vpack.c.b16 %v2234, %v2233
  %v2798 = vpack.c.b16 %v2236, %v2235
  %v2799 = vpack.c.b16 %v2238, %v2237
  %v2800 = vpack.c.b16 %v2240, %v2239
  %v2801 = vpack.c.b16 %v2242, %v2241
  %v2802 = vpack.c.b16 %v2244, %v2243
  %v2803 = vpack.c.b16 %v2246, %v2245
  %v2804 = vpack.c.b16 %v2248, %v2247
  %v2805 = vpack.c.b16 %v2250, %v2249
  %v2806 = vpack.c.b16 %v2252, %v2251
  %v2807 = vpack.c.b16 %v2254, %v2253
  %v2808 = vpack.c.b16 %v2256, %v2255
  %v2809 = vpack.c.b16 %v2258, %v2257
  %v2810 = vpack.c.b16 %v2260, %v2259
  %v2811 = vpack.c.b16 %v2262, %v2261
  %v2812 = vpack.c.b16 %v2264, %v2263
  %v2813 = vpack.c.b16 %v2266, %v2265
  %v2814 = vpack.c.b16 %v2268, %v2267
  %v2815 = vpack.c.b16 %v2270, %v2269
  %v2816 = vpack.c.b16 %v2272, %v2271
  %v2817 = vpack.c.b16 %v2274, %v2273
  %v2818 = vpack.c.b16 %v2276, %v2275
  %v2819 = vpack.c.b16 %v2278, %v2277
  %v2820 = vpack.c.b16 %v2280, %v2279
  %v2821 = vpack.c.b16 %v2282, %v2281
  %v2822 = vpack.c.b16 %v2284, %v2283
  %v2823 = vpack.c.b16 %v2286, %v2285
  %v2824 = vpack.c.b16 %v2288, %v2287
  %v2825 = vpack.c.b16 %v2290, %v2289
  %v2826 = vpack.c.b16 %v2292, %v2291
  %v2827 = vpack.c.b16 %v2294, %v2293
  %v2828 = vpack.c.b16 %v2296, %v2295
  %v2829 = vpack.c.b16 %v2298, %v2297
  %v2830 = vpack.c.b16 %v2300, %v2299
  %v2831 = vpack.c.b16 %v2302, %v2301
  %v2832 = vpack.c.b16 %v2304, %v2303
  %v2833 = vpack.c.b16 %v2306, %v2305
  %v2834 = vpack.c.b16 %v2308, %v2307
  %v2835 = vpack.c.b16 %v2310, %v2309
  %v2836 = vpack.c.b16 %v2312, %v2311
  %v2837 = vpack.c.b16 %v2314, %v2313
  %v2838 = vpack.c.b16 %v2316, %v2315
  %v2839 = vpack.c.b16 %v2318, %v2317
  %v2840 = vpack.c.b16 %v2320, %v2319
  %v2841 = vpack.c.b16 %v2322, %v2321
  %v2842 = vpack.c.b16 %v2324, %v2323
  %v2843 = vpack.c.b16 %v2326, %v2325
  %v2844 = vpack.c.b16 %v2328, %v2327
  %v2845 = vpack.c.b16 %v2330, %v2329
  %v2846 = vpack.c.b16 %v2332, %v2331
  %v2847 = vpack.c.b16 %v2334, %v2333
  %v2848 = vpack.c.b16 %v2336, %v2335
  %v2849 = vpack.c.b16 %v2338, %v2337
  %v2850 = vpack.c.b16 %v2340, %v2339
  %v2851 = vpack.c.b16 %v2342, %v2341
  %v2852 = vpack.c.b16 %v2344, %v2343
  %v2853 = vpack.c.b16 %v2346, %v2345
  %v2854 = vpack.c.b16 %v2348, %v2347
  %v2855 = vpack.c.b16 %v2350, %v2349
  %v2856 = vpack.c.b16 %v2352, %v2351
  %v2857 = vpack.c.b16 %v2354, %v2353
  %v2858 = vpack.c.b16 %v2356, %v2355
  %v2859 = vpack.c.b16 %v2358, %v2357
  %v2860 = vpack.c.b16 %v2360, %v2359
  %v2861 = vpack.c.b16 %v2362, %v2361
  %v2862 = vpack.c.b16 %v2364, %v2363
  %v2863 = vpack.c.b16 %v2366, %v2365
  %v2864 = vpack.c.b16 %v2368, %v2367
  %v2865 = vpack.c.b16 %v2370, %v2369
  %v2866 = vpack.c.b16 %v2372, %v2371
  %v2867 = vpack.c.b16 %v2374, %v2373
  %v2868 = vpack.c.b16 %v2376, %v2375
  %v2869 = vpack.c.b16 %v2378, %v2377
  %v2870 = vpack.c.b16 %v2380, %v2379
  %v2871 = vpack.c.b16 %v2382, %v2381
  %v2872 = vpack.c.b16 %v2384, %v2383
  %v2873 = vpack.c.b16 %v2386, %v2385
  %v2874 = vpack.c.b16 %v2388, %v2387
  %v2875 = vpack.c.b16 %v2390, %v2389
  %v2876 = vpack.c.b16 %v2392, %v2391
  %v2877 = vpack.c.b16 %v2394, %v2393
  %v2878 = vpack.c.b16 %v2396, %v2395
  %v2879 = vpack.c.b16 %v2398, %v2397
  %v2880 = vpack.c.b16 %v2400, %v2399
  %v2881 = vpack.c.b16 %v2402, %v2401
  %v2882 = vpack.c.b16 %v2404, %v2403
  %v2883 = vpack.c.b16 %v2406, %v2405
  %v2884 = vpack.c.b16 %v2408, %v2407
  %v2885 = vpack.c.b16 %v2410, %v2409
  %v2886 = vpack.c.b16 %v2412, %v2411
  %v2887 = vpack.c.b16 %v2414, %v2413
  %v2888 = vpack.c.b16 %v2416, %v2415
  %v2889 = vpack.c.b16 %v2418, %v2417
  %v2890 = vpack.c.b16 %v2420, %v2419
  %v2891 = vpack.c.b16 %v2422, %v2421
  %v2892 = vpack.c.b16 %v2424, %v2423
  %v2893 = vpack.c.b16 %v2426, %v2425
  %v2894 = vpack.c.b16 %v2428, %v2427
  %v2895 = vpack.c.b16 %v2430, %v2429
  %v2896 = vpack.c.b16 %v2432, %v2431
  %v2897 = vpack.c.b16 %v2434, %v2433
  %v2898 = vpack.c.b16 %v2436, %v2435
  %v2899 = vpack.c.b16 %v2438, %v2437
  %v2900 = vpack.c.b16 %v2440, %v2439
  %v2901 = vpack.c.b16 %v2442, %v2441
  %v2902 = vpack.c.b16 %v2444, %v2443
  %v2903 = vpack.c.b16 %v2446, %v2445
  %v2904 = vpack.c.b16 %v2448, %v2447
  %v2905 = vpack.c.b16 %v2450, %v2449
  %v2906 = vpack.c.b16 %v2452, %v2451
  %v2907 = vpack.c.b16 %v2454, %v2453
  %v2908 = vpack.c.b16 %v2456, %v2455
  %v2909 = vpack.c.b16 %v2458, %v2457
  %v2910 = vpack.c.b16 %v2460, %v2459
  %v2911 = vpack.c.b16 %v2462, %v2461
  %v2912 = vpack.c.b16 %v2464, %v2463
  %v2913 = vpack.c.b16 %v2466, %v2465
  %v2914 = vpack.c.b16 %v2468, %v2467
  %v2915 = vpack.c.b16 %v2470, %v2469
  %v2916 = vpack.c.b16 %v2472, %v2471
  %v2917 = vpack.c.b16 %v2474, %v2473
  %v2918 = vpack.c.b16 %v2476, %v2475
  %v2919 = vpack.c.b16 %v2478, %v2477
  %v2920 = vpack.c.b16 %v2480, %v2479
  %v2921 = vpack.c.b16 %v2482, %v2481
  %v2922 = vpack.c.b16 %v2484, %v2483
  %v2923 = vpack.c.b16 %v2486, %v2485
  %v2924 = vpack.c.b16 %v2488, %v2487
  %v2925 = vpack.c.b16 %v2490, %v2489
  %v2926 = vpack.c.b16 %v2492, %v2491
  %v2927 = vpack.c.b16 %v2494, %v2493
  %v2928 = vpack.c.b16 %v2496, %v2495
  %v2929 = vpack.c.b16 %v2498, %v2497
  %v2930 = vpack.c.b16 %v2500, %v2499
  %v2931 = vpack.c.b16 %v2502, %v2501
  %v2932 = vpack.c.b16 %v2504, %v2503
  %v2933 = vpack.c.b16 %v2506, %v2505
  %v2934 = vpack.c.b16 %v2508, %v2507
  %v2935 = vpack.c.b16 %v2510, %v2509
  %v2936 = vpack.c.b16 %v2512, %v2511
  %v2937 = vpack.c.b16 %v2514, %v2513
  %v2938 = vpack.c.b16 %v2516, %v2515
  %v2939 = vpack.c.b16 %v2518, %v2517
  %v2940 = vpack.c.b16 %v2520, %v2519
  %v2941 = vpack.c.b16 %v2522, %v2521
  %v2942 = vpack.c.b16 %v2524, %v2523
  %v2943 = vpack.c.b16 %v2526, %v2525
  %v2944 = vpack.c.b16 %v2528, %v2527
  %v2945 = vpack.c.b16 %v2530, %v2529
  %v2946 = vpack.c.b16 %v2532, %v2531
  %v2947 = vpack.c.b16 %v2534, %v2533
  %v2948 = vpack.c.b16 %v2536, %v2535
  %v2949 = vpack.c.b16 %v2538, %v2537
  %v2950 = vpack.c.b16 %v2540, %v2539
  %v2951 = vpack.c.b16 %v2542, %v2541
  %v2952 = vpack.c.b16 %v2544, %v2543
  %v2953 = vpack.c.b16 %v2546, %v2545
  %v2954 = vpack.c.b16 %v2548, %v2547
  %v2955 = vpack.c.b16 %v2550, %v2549
  %v2956 = vpack.c.b16 %v2552, %v2551
  %v2957 = vpack.c.b16 %v2554, %v2553
  %v2958 = vpack.c.b16 %v2556, %v2555
  %v2959 = vpack.c.b16 %v2558, %v2557
  %v2960 = vpack.c.b16 %v2560, %v2559
  %v2961 = vpack.c.b16 %v2562, %v2561
  %v2962 = vpack.c.b16 %v2564, %v2563
  %v2963 = vpack.c.b16 %v2566, %v2565
  %v2964 = vpack.c.b16 %v2568, %v2567
  %v2965 = vpack.c.b16 %v2570, %v2569
  %v2966 = vpack.c.b16 %v2572, %v2571
  %v2967 = vpack.c.b16 %v2574, %v2573
  %v2968 = vpack.c.b16 %v2576, %v2575
  %3361 = vmatprep.subr.bf16.mxu0 0
  %3362 = vmatpush1.bf16.msra.mxu0 %v2577
  %3363 = vmatprep.subr.bf16.mxu0 0
  %3364 = vmatpush1.bf16.msra.mxu0 %v2578
  %3365 = vmatprep.subr.bf16.mxu0 0
  %3366 = vmatpush1.bf16.msra.mxu0 %v2579
  %3367 = vmatprep.subr.bf16.mxu0 0
  %3368 = vmatpush1.bf16.msra.mxu0 %v2580
  %3369 = vmatprep.subr.bf16.mxu0 0
  %3370 = vmatpush1.bf16.msra.mxu0 %v2581
  %3371 = vmatprep.subr.bf16.mxu0 0
  %3372 = vmatpush1.bf16.msra.mxu0 %v2582
  %3373 = vmatprep.subr.bf16.mxu0 0
  %3374 = vmatpush1.bf16.msra.mxu0 %v2583
  %3375 = vmatprep.subr.bf16.mxu0 0
  %3376 = vmatpush1.bf16.msra.mxu0 %v2584
  %3377 = vmatprep.subr.bf16.mxu0 0
  %3378 = vmatpush1.bf16.msra.mxu0 %v2585
  %3379 = vmatprep.subr.bf16.mxu0 0
  %3380 = vmatpush1.bf16.msra.mxu0 %v2586
  %3381 = vmatprep.subr.bf16.mxu0 0
  %3382 = vmatpush1.bf16.msra.mxu0 %v2587
  %3383 = vmatprep.subr.bf16.mxu0 0
  %3384 = vmatpush1.bf16.msra.mxu0 %v2588
  %3385 = vmatprep.subr.bf16.mxu0 0
  %3386 = vmatpush1.bf16.msra.mxu0 %v2589
  %3387 = vmatprep.subr.bf16.mxu0 0
  %3388 = vmatpush1.bf16.msra.mxu0 %v2590
  %3389 = vmatprep.subr.bf16.mxu0 0
  %3390 = vmatpush1.bf16.msra.mxu0 %v2591
  %3391 = vmatprep.subr.bf16.mxu0 0
  %3392 = vmatpush1.bf16.msra.mxu0 %v2592
  %3393 = vmatprep.mubr.bf16.mxu0 %v912
  %3394 = vmatmul.mubr.bf16.gmra.mrb[0].mxu0 %v911
  %v3395 = vpop.f32.mrb[0].mxu0
  %v3396 = vadd.f32 %v835, %v3395
  %v3397 = vpop.f32.mrb[0].mxu0
  %v3398 = vpop.f32.mrb[0].mxu0
  %v3399 = vpop.f32.mrb[0].mxu0
  %3400 = vdwg.mxu0
  %3401 = vmatprep.subr.bf16.mxu0 0
  %3402 = vmatpush1.bf16.msra.mxu0 %v2593
  %3403 = vmatprep.subr.bf16.mxu0 0
  %3404 = vmatpush1.bf16.msra.mxu0 %v2594
  %3405 = vmatprep.subr.bf16.mxu0 0
  %3406 = vmatpush1.bf16.msra.mxu0 %v2595
  %3407 = vmatprep.subr.bf16.mxu0 0
  %3408 = vmatpush1.bf16.msra.mxu0 %v2596
  %3409 = vmatprep.subr.bf16.mxu0 0
  %3410 = vmatpush1.bf16.msra.mxu0 %v2597
  %3411 = vmatprep.subr.bf16.mxu0 0
  %3412 = vmatpush1.bf16.msra.mxu0 %v2598
  %3413 = vmatprep.subr.bf16.mxu0 0
  %3414 = vmatpush1.bf16.msra.mxu0 %v2599
  %3415 = vmatprep.subr.bf16.mxu0 0
  %3416 = vmatpush1.bf16.msra.mxu0 %v2600
  %3417 = vmatprep.subr.bf16.mxu0 0
  %3418 = vmatpush1.bf16.msra.mxu0 %v2601
  %3419 = vmatprep.subr.bf16.mxu0 0
  %3420 = vmatpush1.bf16.msra.mxu0 %v2602
  %3421 = vmatprep.subr.bf16.mxu0 0
  %3422 = vmatpush1.bf16.msra.mxu0 %v2603
  %3423 = vmatprep.subr.bf16.mxu0 0
  %3424 = vmatpush1.bf16.msra.mxu0 %v2604
  %3425 = vmatprep.subr.bf16.mxu0 0
  %3426 = vmatpush1.bf16.msra.mxu0 %v2605
  %3427 = vmatprep.subr.bf16.mxu0 0
  %3428 = vmatpush1.bf16.msra.mxu0 %v2606
  %3429 = vmatprep.subr.bf16.mxu0 0
  %3430 = vmatpush1.bf16.msra.mxu0 %v2607
  %3431 = vmatprep.subr.bf16.mxu0 0
  %3432 = vmatpush1.bf16.msra.mxu0 %v2608
  %3433 = vmatprep.mubr.bf16.mxu0 %v914
  %3434 = vmatmul.mubr.bf16.gmra.mrb[0].mxu0 %v913
  %v3435 = vpop.f32.mrb[0].mxu0
  %v3436 = vadd.f32 %v3396, %v3435
  %v3437 = vpop.f32.mrb[0].mxu0
  %v3438 = vpop.f32.mrb[0].mxu0
  %v3439 = vpop.f32.mrb[0].mxu0
  %3440 = vdwg.mxu0
  %3441 = vmatprep.subr.bf16.mxu0 0
  %3442 = vmatpush1.bf16.msra.mxu0 %v2609
  %3443 = vmatprep.subr.bf16.mxu0 0
  %3444 = vmatpush1.bf16.msra.mxu0 %v2610
  %3445 = vmatprep.subr.bf16.mxu0 0
  %3446 = vmatpush1.bf16.msra.mxu0 %v2611
  %3447 = vmatprep.subr.bf16.mxu0 0
  %3448 = vmatpush1.bf16.msra.mxu0 %v2612
  %3449 = vmatprep.subr.bf16.mxu0 0
  %3450 = vmatpush1.bf16.msra.mxu0 %v2613
  %3451 = vmatprep.subr.bf16.mxu0 0
  %3452 = vmatpush1.bf16.msra.mxu0 %v2614
  %3453 = vmatprep.subr.bf16.mxu0 0
  %3454 = vmatpush1.bf16.msra.mxu0 %v2615
  %3455 = vmatprep.subr.bf16.mxu0 0
  %3456 = vmatpush1.bf16.msra.mxu0 %v2616
  %3457 = vmatprep.subr.bf16.mxu0 0
  %3458 = vmatpush1.bf16.msra.mxu0 %v2617
  %3459 = vmatprep.subr.bf16.mxu0 0
  %3460 = vmatpush1.bf16.msra.mxu0 %v2618
  %3461 = vmatprep.subr.bf16.mxu0 0
  %3462 = vmatpush1.bf16.msra.mxu0 %v2619
  %3463 = vmatprep.subr.bf16.mxu0 0
  %3464 = vmatpush1.bf16.msra.mxu0 %v2620
  %3465 = vmatprep.subr.bf16.mxu0 0
  %3466 = vmatpush1.bf16.msra.mxu0 %v2621
  %3467 = vmatprep.subr.bf16.mxu0 0
  %3468 = vmatpush1.bf16.msra.mxu0 %v2622
  %3469 = vmatprep.subr.bf16.mxu0 0
  %3470 = vmatpush1.bf16.msra.mxu0 %v2623
  %3471 = vmatprep.subr.bf16.mxu0 0
  %3472 = vmatpush1.bf16.msra.mxu0 %v2624
  %3473 = vmatprep.mubr.bf16.mxu0 %v916
  %3474 = vmatmul.mubr.bf16.gmra.mrb[0].mxu0 %v915
  %v3475 = vpop.f32.mrb[0].mxu0
  %v3476 = vadd.f32 %v3436, %v3475
  %v3477 = vpop.f32.mrb[0].mxu0
  %v3478 = vpop.f32.mrb[0].mxu0
  %v3479 = vpop.f32.mrb[0].mxu0
  %3480 = vdwg.mxu0
  %3481 = vmatprep.subr.bf16.mxu0 0
  %3482 = vmatpush1.bf16.msra.mxu0 %v2625
  %3483 = vmatprep.subr.bf16.mxu0 0
  %3484 = vmatpush1.bf16.msra.mxu0 %v2626
  %3485 = vmatprep.subr.bf16.mxu0 0
  %3486 = vmatpush1.bf16.msra.mxu0 %v2627
  %3487 = vmatprep.subr.bf16.mxu0 0
  %3488 = vmatpush1.bf16.msra.mxu0 %v2628
  %3489 = vmatprep.subr.bf16.mxu0 0
  %3490 = vmatpush1.bf16.msra.mxu0 %v2629
  %3491 = vmatprep.subr.bf16.mxu0 0
  %3492 = vmatpush1.bf16.msra.mxu0 %v2630
  %3493 = vmatprep.subr.bf16.mxu0 0
  %3494 = vmatpush1.bf16.msra.mxu0 %v2631
  %3495 = vmatprep.subr.bf16.mxu0 0
  %3496 = vmatpush1.bf16.msra.mxu0 %v2632
  %3497 = vmatprep.subr.bf16.mxu0 0
  %3498 = vmatpush1.bf16.msra.mxu0 %v2633
  %3499 = vmatprep.subr.bf16.mxu0 0
  %3500 = vmatpush1.bf16.msra.mxu0 %v2634
  %3501 = vmatprep.subr.bf16.mxu0 0
  %3502 = vmatpush1.bf16.msra.mxu0 %v2635
  %3503 = vmatprep.subr.bf16.mxu0 0
  %3504 = vmatpush1.bf16.msra.mxu0 %v2636
  %3505 = vmatprep.subr.bf16.mxu0 0
  %3506 = vmatpush1.bf16.msra.mxu0 %v2637
  %3507 = vmatprep.subr.bf16.mxu0 0
  %3508 = vmatpush1.bf16.msra.mxu0 %v2638
  %3509 = vmatprep.subr.bf16.mxu0 0
  %3510 = vmatpush1.bf16.msra.mxu0 %v2639
  %3511 = vmatprep.subr.bf16.mxu0 0
  %3512 = vmatpush1.bf16.msra.mxu0 %v2640
  %3513 = vmatprep.mubr.bf16.mxu0 %v918
  %3514 = vmatmul.mubr.bf16.gmra.mrb[0].mxu0 %v917
  %v3515 = vpop.f32.mrb[0].mxu0
  %v3516 = vadd.f32 %v3476, %v3515
  %v3517 = vpop.f32.mrb[0].mxu0
  %v3518 = vpop.f32.mrb[0].mxu0
  %v3519 = vpop.f32.mrb[0].mxu0
  %3520 = vdwg.mxu0
  %3521 = vmatprep.subr.bf16.mxu0 0
  %3522 = vmatpush1.bf16.msra.mxu0 %v2641
  %3523 = vmatprep.subr.bf16.mxu0 0
  %3524 = vmatpush1.bf16.msra.mxu0 %v2642
  %3525 = vmatprep.subr.bf16.mxu0 0
  %3526 = vmatpush1.bf16.msra.mxu0 %v2643
  %3527 = vmatprep.subr.bf16.mxu0 0
  %3528 = vmatpush1.bf16.msra.mxu0 %v2644
  %3529 = vmatprep.subr.bf16.mxu0 0
  %3530 = vmatpush1.bf16.msra.mxu0 %v2645
  %3531 = vmatprep.subr.bf16.mxu0 0
  %3532 = vmatpush1.bf16.msra.mxu0 %v2646
  %3533 = vmatprep.subr.bf16.mxu0 0
  %3534 = vmatpush1.bf16.msra.mxu0 %v2647
  %3535 = vmatprep.subr.bf16.mxu0 0
  %3536 = vmatpush1.bf16.msra.mxu0 %v2648
  %3537 = vmatprep.subr.bf16.mxu0 0
  %3538 = vmatpush1.bf16.msra.mxu0 %v2649
  %3539 = vmatprep.subr.bf16.mxu0 0
  %3540 = vmatpush1.bf16.msra.mxu0 %v2650
  %3541 = vmatprep.subr.bf16.mxu0 0
  %3542 = vmatpush1.bf16.msra.mxu0 %v2651
  %3543 = vmatprep.subr.bf16.mxu0 0
  %3544 = vmatpush1.bf16.msra.mxu0 %v2652
  %3545 = vmatprep.subr.bf16.mxu0 0
  %3546 = vmatpush1.bf16.msra.mxu0 %v2653
  %3547 = vmatprep.subr.bf16.mxu0 0
  %3548 = vmatpush1.bf16.msra.mxu0 %v2654
  %3549 = vmatprep.subr.bf16.mxu0 0
  %3550 = vmatpush1.bf16.msra.mxu0 %v2655
  %3551 = vmatprep.subr.bf16.mxu0 0
  %3552 = vmatpush1.bf16.msra.mxu0 %v2656
  %3553 = vmatprep.mubr.bf16.mxu0 %v920
  %3554 = vmatmul.mubr.bf16.gmra.mrb[0].mxu0 %v919
  %v3555 = vpop.f32.mrb[0].mxu0
  %v3556 = vadd.f32 %v3516, %v3555
  %v3557 = vpop.f32.mrb[0].mxu0
  %v3558 = vpop.f32.mrb[0].mxu0
  %v3559 = vpop.f32.mrb[0].mxu0
  %3560 = vdwg.mxu0
  %3561 = vmatprep.subr.bf16.mxu0 0
  %3562 = vmatpush1.bf16.msra.mxu0 %v2657
  %3563 = vmatprep.subr.bf16.mxu0 0
  %3564 = vmatpush1.bf16.msra.mxu0 %v2658
  %3565 = vmatprep.subr.bf16.mxu0 0
  %3566 = vmatpush1.bf16.msra.mxu0 %v2659
  %3567 = vmatprep.subr.bf16.mxu0 0
  %3568 = vmatpush1.bf16.msra.mxu0 %v2660
  %3569 = vmatprep.subr.bf16.mxu0 0
  %3570 = vmatpush1.bf16.msra.mxu0 %v2661
  %3571 = vmatprep.subr.bf16.mxu0 0
  %3572 = vmatpush1.bf16.msra.mxu0 %v2662
  %3573 = vmatprep.subr.bf16.mxu0 0
  %3574 = vmatpush1.bf16.msra.mxu0 %v2663
  %3575 = vmatprep.subr.bf16.mxu0 0
  %3576 = vmatpush1.bf16.msra.mxu0 %v2664
  %3577 = vmatprep.subr.bf16.mxu0 0
  %3578 = vmatpush1.bf16.msra.mxu0 %v2665
  %3579 = vmatprep.subr.bf16.mxu0 0
  %3580 = vmatpush1.bf16.msra.mxu0 %v2666
  %3581 = vmatprep.subr.bf16.mxu0 0
  %3582 = vmatpush1.bf16.msra.mxu0 %v2667
  %3583 = vmatprep.subr.bf16.mxu0 0
  %3584 = vmatpush1.bf16.msra.mxu0 %v2668
  %3585 = vmatprep.subr.bf16.mxu0 0
  %3586 = vmatpush1.bf16.msra.mxu0 %v2669
  %3587 = vmatprep.subr.bf16.mxu0 0
  %3588 = vmatpush1.bf16.msra.mxu0 %v2670
  %3589 = vmatprep.subr.bf16.mxu0 0
  %3590 = vmatpush1.bf16.msra.mxu0 %v2671
  %3591 = vmatprep.subr.bf16.mxu0 0
  %3592 = vmatpush1.bf16.msra.mxu0 %v2672
  %3593 = vmatprep.mubr.bf16.mxu0 %v922
  %3594 = vmatmul.mubr.bf16.gmra.mrb[0].mxu0 %v921
  %v3595 = vpop.f32.mrb[0].mxu0
  %v3596 = vadd.f32 %v3556, %v3595
  %v3597 = vpop.f32.mrb[0].mxu0
  %v3598 = vpop.f32.mrb[0].mxu0
  %v3599 = vpop.f32.mrb[0].mxu0
  %3600 = vdwg.mxu0
  %3601 = vmatprep.subr.bf16.mxu0 0
  %3602 = vmatpush1.bf16.msra.mxu0 %v2673
  %3603 = vmatprep.subr.bf16.mxu0 0
  %3604 = vmatpush1.bf16.msra.mxu0 %v2674
  %3605 = vmatprep.subr.bf16.mxu0 0
  %3606 = vmatpush1.bf16.msra.mxu0 %v2675
  %3607 = vmatprep.subr.bf16.mxu0 0
  %3608 = vmatpush1.bf16.msra.mxu0 %v2676
  %3609 = vmatprep.subr.bf16.mxu0 0
  %3610 = vmatpush1.bf16.msra.mxu0 %v2677
  %3611 = vmatprep.subr.bf16.mxu0 0
  %3612 = vmatpush1.bf16.msra.mxu0 %v2678
  %3613 = vmatprep.subr.bf16.mxu0 0
  %3614 = vmatpush1.bf16.msra.mxu0 %v2679
  %3615 = vmatprep.subr.bf16.mxu0 0
  %3616 = vmatpush1.bf16.msra.mxu0 %v2680
  %3617 = vmatprep.subr.bf16.mxu0 0
  %3618 = vmatpush1.bf16.msra.mxu0 %v2681
  %3619 = vmatprep.subr.bf16.mxu0 0
  %3620 = vmatpush1.bf16.msra.mxu0 %v2682
  %3621 = vmatprep.subr.bf16.mxu0 0
  %3622 = vmatpush1.bf16.msra.mxu0 %v2683
  %3623 = vmatprep.subr.bf16.mxu0 0
  %3624 = vmatpush1.bf16.msra.mxu0 %v2684
  %3625 = vmatprep.subr.bf16.mxu0 0
  %3626 = vmatpush1.bf16.msra.mxu0 %v2685
  %3627 = vmatprep.subr.bf16.mxu0 0
  %3628 = vmatpush1.bf16.msra.mxu0 %v2686
  %3629 = vmatprep.subr.bf16.mxu0 0
  %3630 = vmatpush1.bf16.msra.mxu0 %v2687
  %3631 = vmatprep.subr.bf16.mxu0 0
  %3632 = vmatpush1.bf16.msra.mxu0 %v2688
  %3633 = vmatprep.mubr.bf16.mxu0 %v924
  %3634 = vmatmul.mubr.bf16.gmra.mrb[0].mxu0 %v923
  %v3635 = vpop.f32.mrb[0].mxu0
  %v3636 = vadd.f32 %v3596, %v3635
  %v3637 = vpop.f32.mrb[0].mxu0
  %v3638 = vpop.f32.mrb[0].mxu0
  %v3639 = vpop.f32.mrb[0].mxu0
  %3640 = vdwg.mxu0
  %3641 = vmatprep.subr.bf16.mxu0 0
  %3642 = vmatpush1.bf16.msra.mxu0 %v2689
  %3643 = vmatprep.subr.bf16.mxu0 0
  %3644 = vmatpush1.bf16.msra.mxu0 %v2690
  %3645 = vmatprep.subr.bf16.mxu0 0
  %3646 = vmatpush1.bf16.msra.mxu0 %v2691
  %3647 = vmatprep.subr.bf16.mxu0 0
  %3648 = vmatpush1.bf16.msra.mxu0 %v2692
  %3649 = vmatprep.subr.bf16.mxu0 0
  %3650 = vmatpush1.bf16.msra.mxu0 %v2693
  %3651 = vmatprep.subr.bf16.mxu0 0
  %3652 = vmatpush1.bf16.msra.mxu0 %v2694
  %3653 = vmatprep.subr.bf16.mxu0 0
  %3654 = vmatpush1.bf16.msra.mxu0 %v2695
  %3655 = vmatprep.subr.bf16.mxu0 0
  %3656 = vmatpush1.bf16.msra.mxu0 %v2696
  %3657 = vmatprep.subr.bf16.mxu0 0
  %3658 = vmatpush1.bf16.msra.mxu0 %v2697
  %3659 = vmatprep.subr.bf16.mxu0 0
  %3660 = vmatpush1.bf16.msra.mxu0 %v2698
  %3661 = vmatprep.subr.bf16.mxu0 0
  %3662 = vmatpush1.bf16.msra.mxu0 %v2699
  %3663 = vmatprep.subr.bf16.mxu0 0
  %3664 = vmatpush1.bf16.msra.mxu0 %v2700
  %3665 = vmatprep.subr.bf16.mxu0 0
  %3666 = vmatpush1.bf16.msra.mxu0 %v2701
  %3667 = vmatprep.subr.bf16.mxu0 0
  %3668 = vmatpush1.bf16.msra.mxu0 %v2702
  %3669 = vmatprep.subr.bf16.mxu0 0
  %3670 = vmatpush1.bf16.msra.mxu0 %v2703
  %3671 = vmatprep.subr.bf16.mxu0 0
  %3672 = vmatpush1.bf16.msra.mxu0 %v2704
  %3673 = vmatprep.mubr.bf16.mxu0 %v926
  %3674 = vmatmul.mubr.bf16.gmra.mrb[0].mxu0 %v925
  %v3675 = vpop.f32.mrb[0].mxu0
  %v3676 = vadd.f32 %v3636, %v3675
  %v3677 = vpop.f32.mrb[0].mxu0
  %v3678 = vpop.f32.mrb[0].mxu0
  %v3679 = vpop.f32.mrb[0].mxu0
  %3680 = vdwg.mxu0
  %3681 = vmatprep.subr.bf16.mxu0 0
  %3682 = vmatpush1.bf16.msra.mxu0 %v2705
  %3683 = vmatprep.subr.bf16.mxu0 0
  %3684 = vmatpush1.bf16.msra.mxu0 %v2706
  %3685 = vmatprep.subr.bf16.mxu0 0
  %3686 = vmatpush1.bf16.msra.mxu0 %v2707
  %3687 = vmatprep.subr.bf16.mxu0 0
  %3688 = vmatpush1.bf16.msra.mxu0 %v2708
  %3689 = vmatprep.subr.bf16.mxu0 0
  %3690 = vmatpush1.bf16.msra.mxu0 %v2709
  %3691 = vmatprep.subr.bf16.mxu0 0
  %3692 = vmatpush1.bf16.msra.mxu0 %v2710
  %3693 = vmatprep.subr.bf16.mxu0 0
  %3694 = vmatpush1.bf16.msra.mxu0 %v2711
  %3695 = vmatprep.subr.bf16.mxu0 0
  %3696 = vmatpush1.bf16.msra.mxu0 %v2712
  %3697 = vmatprep.subr.bf16.mxu0 0
  %3698 = vmatpush1.bf16.msra.mxu0 %v2713
  %3699 = vmatprep.subr.bf16.mxu0 0
  %3700 = vmatpush1.bf16.msra.mxu0 %v2714
  %3701 = vmatprep.subr.bf16.mxu0 0
  %3702 = vmatpush1.bf16.msra.mxu0 %v2715
  %3703 = vmatprep.subr.bf16.mxu0 0
  %3704 = vmatpush1.bf16.msra.mxu0 %v2716
  %3705 = vmatprep.subr.bf16.mxu0 0
  %3706 = vmatpush1.bf16.msra.mxu0 %v2717
  %3707 = vmatprep.subr.bf16.mxu0 0
  %3708 = vmatpush1.bf16.msra.mxu0 %v2718
  %3709 = vmatprep.subr.bf16.mxu0 0
  %3710 = vmatpush1.bf16.msra.mxu0 %v2719
  %3711 = vmatprep.subr.bf16.mxu0 0
  %3712 = vmatpush1.bf16.msra.mxu0 %v2720
  %3713 = vmatprep.mubr.bf16.mxu0 %v928
  %3714 = vmatmul.mubr.bf16.gmra.mrb[0].mxu0 %v927
  %v3715 = vpop.f32.mrb[0].mxu0
  %v3716 = vadd.f32 %v3676, %v3715
  %v3717 = vpop.f32.mrb[0].mxu0
  %v3718 = vpop.f32.mrb[0].mxu0
  %v3719 = vpop.f32.mrb[0].mxu0
  %3720 = vdwg.mxu0
  %3721 = vmatprep.subr.bf16.mxu0 0
  %3722 = vmatpush1.bf16.msra.mxu0 %v2721
  %3723 = vmatprep.subr.bf16.mxu0 0
  %3724 = vmatpush1.bf16.msra.mxu0 %v2722
  %3725 = vmatprep.subr.bf16.mxu0 0
  %3726 = vmatpush1.bf16.msra.mxu0 %v2723
  %3727 = vmatprep.subr.bf16.mxu0 0
  %3728 = vmatpush1.bf16.msra.mxu0 %v2724
  %3729 = vmatprep.subr.bf16.mxu0 0
  %3730 = vmatpush1.bf16.msra.mxu0 %v2725
  %3731 = vmatprep.subr.bf16.mxu0 0
  %3732 = vmatpush1.bf16.msra.mxu0 %v2726
  %3733 = vmatprep.subr.bf16.mxu0 0
  %3734 = vmatpush1.bf16.msra.mxu0 %v2727
  %3735 = vmatprep.subr.bf16.mxu0 0
  %3736 = vmatpush1.bf16.msra.mxu0 %v2728
  %3737 = vmatprep.subr.bf16.mxu0 0
  %3738 = vmatpush1.bf16.msra.mxu0 %v2729
  %3739 = vmatprep.subr.bf16.mxu0 0
  %3740 = vmatpush1.bf16.msra.mxu0 %v2730
  %3741 = vmatprep.subr.bf16.mxu0 0
  %3742 = vmatpush1.bf16.msra.mxu0 %v2731
  %3743 = vmatprep.subr.bf16.mxu0 0
  %3744 = vmatpush1.bf16.msra.mxu0 %v2732
  %3745 = vmatprep.subr.bf16.mxu0 0
  %3746 = vmatpush1.bf16.msra.mxu0 %v2733
  %3747 = vmatprep.subr.bf16.mxu0 0
  %3748 = vmatpush1.bf16.msra.mxu0 %v2734
  %3749 = vmatprep.subr.bf16.mxu0 0
  %3750 = vmatpush1.bf16.msra.mxu0 %v2735
  %3751 = vmatprep.subr.bf16.mxu0 0
  %3752 = vmatpush1.bf16.msra.mxu0 %v2736
  %3753 = vmatprep.mubr.bf16.mxu0 %v930
  %3754 = vmatmul.mubr.bf16.gmra.mrb[0].mxu0 %v929
  %v3755 = vpop.f32.mrb[0].mxu0
  %v3756 = vadd.f32 %v3716, %v3755
  %v3757 = vpop.f32.mrb[0].mxu0
  %v3758 = vpop.f32.mrb[0].mxu0
  %v3759 = vpop.f32.mrb[0].mxu0
  %3760 = vdwg.mxu0
  %3761 = vmatprep.subr.bf16.mxu0 0
  %3762 = vmatpush1.bf16.msra.mxu0 %v2737
  %3763 = vmatprep.subr.bf16.mxu0 0
  %3764 = vmatpush1.bf16.msra.mxu0 %v2738
  %3765 = vmatprep.subr.bf16.mxu0 0
  %3766 = vmatpush1.bf16.msra.mxu0 %v2739
  %3767 = vmatprep.subr.bf16.mxu0 0
  %3768 = vmatpush1.bf16.msra.mxu0 %v2740
  %3769 = vmatprep.subr.bf16.mxu0 0
  %3770 = vmatpush1.bf16.msra.mxu0 %v2741
  %3771 = vmatprep.subr.bf16.mxu0 0
  %3772 = vmatpush1.bf16.msra.mxu0 %v2742
  %3773 = vmatprep.subr.bf16.mxu0 0
  %3774 = vmatpush1.bf16.msra.mxu0 %v2743
  %3775 = vmatprep.subr.bf16.mxu0 0
  %3776 = vmatpush1.bf16.msra.mxu0 %v2744
  %3777 = vmatprep.subr.bf16.mxu0 0
  %3778 = vmatpush1.bf16.msra.mxu0 %v2745
  %3779 = vmatprep.subr.bf16.mxu0 0
  %3780 = vmatpush1.bf16.msra.mxu0 %v2746
  %3781 = vmatprep.subr.bf16.mxu0 0
  %3782 = vmatpush1.bf16.msra.mxu0 %v2747
  %3783 = vmatprep.subr.bf16.mxu0 0
  %3784 = vmatpush1.bf16.msra.mxu0 %v2748
  %3785 = vmatprep.subr.bf16.mxu0 0
  %3786 = vmatpush1.bf16.msra.mxu0 %v2749
  %3787 = vmatprep.subr.bf16.mxu0 0
  %3788 = vmatpush1.bf16.msra.mxu0 %v2750
  %3789 = vmatprep.subr.bf16.mxu0 0
  %3790 = vmatpush1.bf16.msra.mxu0 %v2751
  %3791 = vmatprep.subr.bf16.mxu0 0
  %3792 = vmatpush1.bf16.msra.mxu0 %v2752
  %3793 = vmatprep.mubr.bf16.mxu0 %v932
  %3794 = vmatmul.mubr.bf16.gmra.mrb[0].mxu0 %v931
  %v3795 = vpop.f32.mrb[0].mxu0
  %v3796 = vadd.f32 %v3756, %v3795
  %v3797 = vpop.f32.mrb[0].mxu0
  %v3798 = vpop.f32.mrb[0].mxu0
  %v3799 = vpop.f32.mrb[0].mxu0
  %3800 = vdwg.mxu0
  %3801 = vmatprep.subr.bf16.mxu0 0
  %3802 = vmatpush1.bf16.msra.mxu0 %v2753
  %3803 = vmatprep.subr.bf16.mxu0 0
  %3804 = vmatpush1.bf16.msra.mxu0 %v2754
  %3805 = vmatprep.subr.bf16.mxu0 0
  %3806 = vmatpush1.bf16.msra.mxu0 %v2755
  %3807 = vmatprep.subr.bf16.mxu0 0
  %3808 = vmatpush1.bf16.msra.mxu0 %v2756
  %3809 = vmatprep.subr.bf16.mxu0 0
  %3810 = vmatpush1.bf16.msra.mxu0 %v2757
  %3811 = vmatprep.subr.bf16.mxu0 0
  %3812 = vmatpush1.bf16.msra.mxu0 %v2758
  %3813 = vmatprep.subr.bf16.mxu0 0
  %3814 = vmatpush1.bf16.msra.mxu0 %v2759
  %3815 = vmatprep.subr.bf16.mxu0 0
  %3816 = vmatpush1.bf16.msra.mxu0 %v2760
  %3817 = vmatprep.subr.bf16.mxu0 0
  %3818 = vmatpush1.bf16.msra.mxu0 %v2761
  %3819 = vmatprep.subr.bf16.mxu0 0
  %3820 = vmatpush1.bf16.msra.mxu0 %v2762
  %3821 = vmatprep.subr.bf16.mxu0 0
  %3822 = vmatpush1.bf16.msra.mxu0 %v2763
  %3823 = vmatprep.subr.bf16.mxu0 0
  %3824 = vmatpush1.bf16.msra.mxu0 %v2764
  %3825 = vmatprep.subr.bf16.mxu0 0
  %3826 = vmatpush1.bf16.msra.mxu0 %v2765
  %3827 = vmatprep.subr.bf16.mxu0 0
  %3828 = vmatpush1.bf16.msra.mxu0 %v2766
  %3829 = vmatprep.subr.bf16.mxu0 0
  %3830 = vmatpush1.bf16.msra.mxu0 %v2767
  %3831 = vmatprep.subr.bf16.mxu0 0
  %3832 = vmatpush1.bf16.msra.mxu0 %v2768
  %3833 = vmatprep.mubr.bf16.mxu0 %v934
  %3834 = vmatmul.mubr.bf16.gmra.mrb[0].mxu0 %v933
  %v3835 = vpop.f32.mrb[0].mxu0
  %v3836 = vadd.f32 %v3796, %v3835
  %v3837 = vpop.f32.mrb[0].mxu0
  %v3838 = vpop.f32.mrb[0].mxu0
  %v3839 = vpop.f32.mrb[0].mxu0
  %3840 = vdwg.mxu0
  %3841 = vmatprep.subr.bf16.mxu0 0
  %3842 = vmatpush1.bf16.msra.mxu0 %v2769
  %3843 = vmatprep.subr.bf16.mxu0 0
  %3844 = vmatpush1.bf16.msra.mxu0 %v2770
  %3845 = vmatprep.subr.bf16.mxu0 0
  %3846 = vmatpush1.bf16.msra.mxu0 %v2771
  %3847 = vmatprep.subr.bf16.mxu0 0
  %3848 = vmatpush1.bf16.msra.mxu0 %v2772
  %3849 = vmatprep.subr.bf16.mxu0 0
  %3850 = vmatpush1.bf16.msra.mxu0 %v2773
  %3851 = vmatprep.subr.bf16.mxu0 0
  %3852 = vmatpush1.bf16.msra.mxu0 %v2774
  %3853 = vmatprep.subr.bf16.mxu0 0
  %3854 = vmatpush1.bf16.msra.mxu0 %v2775
  %3855 = vmatprep.subr.bf16.mxu0 0
  %3856 = vmatpush1.bf16.msra.mxu0 %v2776
  %3857 = vmatprep.subr.bf16.mxu0 0
  %3858 = vmatpush1.bf16.msra.mxu0 %v2777
  %3859 = vmatprep.subr.bf16.mxu0 0
  %3860 = vmatpush1.bf16.msra.mxu0 %v2778
  %3861 = vmatprep.subr.bf16.mxu0 0
  %3862 = vmatpush1.bf16.msra.mxu0 %v2779
  %3863 = vmatprep.subr.bf16.mxu0 0
  %3864 = vmatpush1.bf16.msra.mxu0 %v2780
  %3865 = vmatprep.subr.bf16.mxu0 0
  %3866 = vmatpush1.bf16.msra.mxu0 %v2781
  %3867 = vmatprep.subr.bf16.mxu0 0
  %3868 = vmatpush1.bf16.msra.mxu0 %v2782
  %3869 = vmatprep.subr.bf16.mxu0 0
  %3870 = vmatpush1.bf16.msra.mxu0 %v2783
  %3871 = vmatprep.subr.bf16.mxu0 0
  %3872 = vmatpush1.bf16.msra.mxu0 %v2784
  %3873 = vmatprep.mubr.bf16.mxu0 %v936
  %3874 = vmatmul.mubr.bf16.gmra.mrb[0].mxu0 %v935
  %v3875 = vpop.f32.mrb[0].mxu0
  %v3876 = vadd.f32 %v3836, %v3875
  %v3877 = vpop.f32.mrb[0].mxu0
  %v3878 = vpop.f32.mrb[0].mxu0
  %v3879 = vpop.f32.mrb[0].mxu0
  %3880 = vdwg.mxu0
  %3881 = vmatprep.subr.bf16.mxu0 0
  %3882 = vmatpush1.bf16.msra.mxu0 %v2785
  %3883 = vmatprep.subr.bf16.mxu0 0
  %3884 = vmatpush1.bf16.msra.mxu0 %v2786
  %3885 = vmatprep.subr.bf16.mxu0 0
  %3886 = vmatpush1.bf16.msra.mxu0 %v2787
  %3887 = vmatprep.subr.bf16.mxu0 0
  %3888 = vmatpush1.bf16.msra.mxu0 %v2788
  %3889 = vmatprep.subr.bf16.mxu0 0
  %3890 = vmatpush1.bf16.msra.mxu0 %v2789
  %3891 = vmatprep.subr.bf16.mxu0 0
  %3892 = vmatpush1.bf16.msra.mxu0 %v2790
  %3893 = vmatprep.subr.bf16.mxu0 0
  %3894 = vmatpush1.bf16.msra.mxu0 %v2791
  %3895 = vmatprep.subr.bf16.mxu0 0
  %3896 = vmatpush1.bf16.msra.mxu0 %v2792
  %3897 = vmatprep.subr.bf16.mxu0 0
  %3898 = vmatpush1.bf16.msra.mxu0 %v2793
  %3899 = vmatprep.subr.bf16.mxu0 0
  %3900 = vmatpush1.bf16.msra.mxu0 %v2794
  %3901 = vmatprep.subr.bf16.mxu0 0
  %3902 = vmatpush1.bf16.msra.mxu0 %v2795
  %3903 = vmatprep.subr.bf16.mxu0 0
  %3904 = vmatpush1.bf16.msra.mxu0 %v2796
  %3905 = vmatprep.subr.bf16.mxu0 0
  %3906 = vmatpush1.bf16.msra.mxu0 %v2797
  %3907 = vmatprep.subr.bf16.mxu0 0
  %3908 = vmatpush1.bf16.msra.mxu0 %v2798
  %3909 = vmatprep.subr.bf16.mxu0 0
  %3910 = vmatpush1.bf16.msra.mxu0 %v2799
  %3911 = vmatprep.subr.bf16.mxu0 0
  %3912 = vmatpush1.bf16.msra.mxu0 %v2800
  %3913 = vmatprep.mubr.bf16.mxu0 %v938
  %3914 = vmatmul.mubr.bf16.gmra.mrb[0].mxu0 %v937
  %v3915 = vpop.f32.mrb[0].mxu0
  %v3916 = vadd.f32 %v3876, %v3915
  %v3917 = vpop.f32.mrb[0].mxu0
  %v3918 = vpop.f32.mrb[0].mxu0
  %v3919 = vpop.f32.mrb[0].mxu0
  %3920 = vdwg.mxu0
  %3921 = vmatprep.subr.bf16.mxu0 0
  %3922 = vmatpush1.bf16.msra.mxu0 %v2801
  %3923 = vmatprep.subr.bf16.mxu0 0
  %3924 = vmatpush1.bf16.msra.mxu0 %v2802
  %3925 = vmatprep.subr.bf16.mxu0 0
  %3926 = vmatpush1.bf16.msra.mxu0 %v2803
  %3927 = vmatprep.subr.bf16.mxu0 0
  %3928 = vmatpush1.bf16.msra.mxu0 %v2804
  %3929 = vmatprep.subr.bf16.mxu0 0
  %3930 = vmatpush1.bf16.msra.mxu0 %v2805
  %3931 = vmatprep.subr.bf16.mxu0 0
  %3932 = vmatpush1.bf16.msra.mxu0 %v2806
  %3933 = vmatprep.subr.bf16.mxu0 0
  %3934 = vmatpush1.bf16.msra.mxu0 %v2807
  %3935 = vmatprep.subr.bf16.mxu0 0
  %3936 = vmatpush1.bf16.msra.mxu0 %v2808
  %3937 = vmatprep.subr.bf16.mxu0 0
  %3938 = vmatpush1.bf16.msra.mxu0 %v2809
  %3939 = vmatprep.subr.bf16.mxu0 0
  %3940 = vmatpush1.bf16.msra.mxu0 %v2810
  %3941 = vmatprep.subr.bf16.mxu0 0
  %3942 = vmatpush1.bf16.msra.mxu0 %v2811
  %3943 = vmatprep.subr.bf16.mxu0 0
  %3944 = vmatpush1.bf16.msra.mxu0 %v2812
  %3945 = vmatprep.subr.bf16.mxu0 0
  %3946 = vmatpush1.bf16.msra.mxu0 %v2813
  %3947 = vmatprep.subr.bf16.mxu0 0
  %3948 = vmatpush1.bf16.msra.mxu0 %v2814
  %3949 = vmatprep.subr.bf16.mxu0 0
  %3950 = vmatpush1.bf16.msra.mxu0 %v2815
  %3951 = vmatprep.subr.bf16.mxu0 0
  %3952 = vmatpush1.bf16.msra.mxu0 %v2816
  %3953 = vmatprep.mubr.bf16.mxu0 %v940
  %3954 = vmatmul.mubr.bf16.gmra.mrb[0].mxu0 %v939
  %v3955 = vpop.f32.mrb[0].mxu0
  %v3956 = vadd.f32 %v3916, %v3955
  %v3957 = vpop.f32.mrb[0].mxu0
  %v3958 = vpop.f32.mrb[0].mxu0
  %v3959 = vpop.f32.mrb[0].mxu0
  %3960 = vdwg.mxu0
  %3961 = vmatprep.subr.bf16.mxu0 0
  %3962 = vmatpush1.bf16.msra.mxu0 %v2817
  %3963 = vmatprep.subr.bf16.mxu0 0
  %3964 = vmatpush1.bf16.msra.mxu0 %v2818
  %3965 = vmatprep.subr.bf16.mxu0 0
  %3966 = vmatpush1.bf16.msra.mxu0 %v2819
  %3967 = vmatprep.subr.bf16.mxu0 0
  %3968 = vmatpush1.bf16.msra.mxu0 %v2820
  %3969 = vmatprep.subr.bf16.mxu0 0
  %3970 = vmatpush1.bf16.msra.mxu0 %v2821
  %3971 = vmatprep.subr.bf16.mxu0 0
  %3972 = vmatpush1.bf16.msra.mxu0 %v2822
  %3973 = vmatprep.subr.bf16.mxu0 0
  %3974 = vmatpush1.bf16.msra.mxu0 %v2823
  %3975 = vmatprep.subr.bf16.mxu0 0
  %3976 = vmatpush1.bf16.msra.mxu0 %v2824
  %3977 = vmatprep.subr.bf16.mxu0 0
  %3978 = vmatpush1.bf16.msra.mxu0 %v2825
  %3979 = vmatprep.subr.bf16.mxu0 0
  %3980 = vmatpush1.bf16.msra.mxu0 %v2826
  %3981 = vmatprep.subr.bf16.mxu0 0
  %3982 = vmatpush1.bf16.msra.mxu0 %v2827
  %3983 = vmatprep.subr.bf16.mxu0 0
  %3984 = vmatpush1.bf16.msra.mxu0 %v2828
  %3985 = vmatprep.subr.bf16.mxu0 0
  %3986 = vmatpush1.bf16.msra.mxu0 %v2829
  %3987 = vmatprep.subr.bf16.mxu0 0
  %3988 = vmatpush1.bf16.msra.mxu0 %v2830
  %3989 = vmatprep.subr.bf16.mxu0 0
  %3990 = vmatpush1.bf16.msra.mxu0 %v2831
  %3991 = vmatprep.subr.bf16.mxu0 0
  %3992 = vmatpush1.bf16.msra.mxu0 %v2832
  %3993 = vmatprep.mubr.bf16.mxu0 %v942
  %3994 = vmatmul.mubr.bf16.gmra.mrb[0].mxu0 %v941
  %v3995 = vpop.f32.mrb[0].mxu0
  %v3996 = vadd.f32 %v3956, %v3995
  %v3997 = vpop.f32.mrb[0].mxu0
  %v3998 = vpop.f32.mrb[0].mxu0
  %v3999 = vpop.f32.mrb[0].mxu0
  %4000 = vdwg.mxu0
  %4001 = vmatprep.subr.bf16.mxu0 0
  %4002 = vmatpush1.bf16.msra.mxu0 %v2833
  %4003 = vmatprep.subr.bf16.mxu0 0
  %4004 = vmatpush1.bf16.msra.mxu0 %v2834
  %4005 = vmatprep.subr.bf16.mxu0 0
  %4006 = vmatpush1.bf16.msra.mxu0 %v2835
  %4007 = vmatprep.subr.bf16.mxu0 0
  %4008 = vmatpush1.bf16.msra.mxu0 %v2836
  %4009 = vmatprep.subr.bf16.mxu0 0
  %4010 = vmatpush1.bf16.msra.mxu0 %v2837
  %4011 = vmatprep.subr.bf16.mxu0 0
  %4012 = vmatpush1.bf16.msra.mxu0 %v2838
  %4013 = vmatprep.subr.bf16.mxu0 0
  %4014 = vmatpush1.bf16.msra.mxu0 %v2839
  %4015 = vmatprep.subr.bf16.mxu0 0
  %4016 = vmatpush1.bf16.msra.mxu0 %v2840
  %4017 = vmatprep.subr.bf16.mxu0 0
  %4018 = vmatpush1.bf16.msra.mxu0 %v2841
  %4019 = vmatprep.subr.bf16.mxu0 0
  %4020 = vmatpush1.bf16.msra.mxu0 %v2842
  %4021 = vmatprep.subr.bf16.mxu0 0
  %4022 = vmatpush1.bf16.msra.mxu0 %v2843
  %4023 = vmatprep.subr.bf16.mxu0 0
  %4024 = vmatpush1.bf16.msra.mxu0 %v2844
  %4025 = vmatprep.subr.bf16.mxu0 0
  %4026 = vmatpush1.bf16.msra.mxu0 %v2845
  %4027 = vmatprep.subr.bf16.mxu0 0
  %4028 = vmatpush1.bf16.msra.mxu0 %v2846
  %4029 = vmatprep.subr.bf16.mxu0 0
  %4030 = vmatpush1.bf16.msra.mxu0 %v2847
  %4031 = vmatprep.subr.bf16.mxu0 0
  %4032 = vmatpush1.bf16.msra.mxu0 %v2848
  %4033 = vmatprep.mubr.bf16.mxu0 %v944
  %4034 = vmatmul.mubr.bf16.gmra.mrb[0].mxu0 %v943
  %v4035 = vpop.f32.mrb[0].mxu0
  %v4036 = vadd.f32 %v3996, %v4035
  %v4037 = vpop.f32.mrb[0].mxu0
  %v4038 = vpop.f32.mrb[0].mxu0
  %v4039 = vpop.f32.mrb[0].mxu0
  %4040 = vdwg.mxu0
  %4041 = vmatprep.subr.bf16.mxu0 0
  %4042 = vmatpush1.bf16.msra.mxu0 %v2849
  %4043 = vmatprep.subr.bf16.mxu0 0
  %4044 = vmatpush1.bf16.msra.mxu0 %v2850
  %4045 = vmatprep.subr.bf16.mxu0 0
  %4046 = vmatpush1.bf16.msra.mxu0 %v2851
  %4047 = vmatprep.subr.bf16.mxu0 0
  %4048 = vmatpush1.bf16.msra.mxu0 %v2852
  %4049 = vmatprep.subr.bf16.mxu0 0
  %4050 = vmatpush1.bf16.msra.mxu0 %v2853
  %4051 = vmatprep.subr.bf16.mxu0 0
  %4052 = vmatpush1.bf16.msra.mxu0 %v2854
  %4053 = vmatprep.subr.bf16.mxu0 0
  %4054 = vmatpush1.bf16.msra.mxu0 %v2855
  %4055 = vmatprep.subr.bf16.mxu0 0
  %4056 = vmatpush1.bf16.msra.mxu0 %v2856
  %4057 = vmatprep.subr.bf16.mxu0 0
  %4058 = vmatpush1.bf16.msra.mxu0 %v2857
  %4059 = vmatprep.subr.bf16.mxu0 0
  %4060 = vmatpush1.bf16.msra.mxu0 %v2858
  %4061 = vmatprep.subr.bf16.mxu0 0
  %4062 = vmatpush1.bf16.msra.mxu0 %v2859
  %4063 = vmatprep.subr.bf16.mxu0 0
  %4064 = vmatpush1.bf16.msra.mxu0 %v2860
  %4065 = vmatprep.subr.bf16.mxu0 0
  %4066 = vmatpush1.bf16.msra.mxu0 %v2861
  %4067 = vmatprep.subr.bf16.mxu0 0
  %4068 = vmatpush1.bf16.msra.mxu0 %v2862
  %4069 = vmatprep.subr.bf16.mxu0 0
  %4070 = vmatpush1.bf16.msra.mxu0 %v2863
  %4071 = vmatprep.subr.bf16.mxu0 0
  %4072 = vmatpush1.bf16.msra.mxu0 %v2864
  %4073 = vmatprep.mubr.bf16.mxu0 %v946
  %4074 = vmatmul.mubr.bf16.gmra.mrb[0].mxu0 %v945
  %v4075 = vpop.f32.mrb[0].mxu0
  %v4076 = vadd.f32 %v4036, %v4075
  %v4077 = vpop.f32.mrb[0].mxu0
  %v4078 = vpop.f32.mrb[0].mxu0
  %v4079 = vpop.f32.mrb[0].mxu0
  %4080 = vdwg.mxu0
  %4081 = vmatprep.subr.bf16.mxu0 0
  %4082 = vmatpush1.bf16.msra.mxu0 %v2865
  %4083 = vmatprep.subr.bf16.mxu0 0
  %4084 = vmatpush1.bf16.msra.mxu0 %v2866
  %4085 = vmatprep.subr.bf16.mxu0 0
  %4086 = vmatpush1.bf16.msra.mxu0 %v2867
  %4087 = vmatprep.subr.bf16.mxu0 0
  %4088 = vmatpush1.bf16.msra.mxu0 %v2868
  %4089 = vmatprep.subr.bf16.mxu0 0
  %4090 = vmatpush1.bf16.msra.mxu0 %v2869
  %4091 = vmatprep.subr.bf16.mxu0 0
  %4092 = vmatpush1.bf16.msra.mxu0 %v2870
  %4093 = vmatprep.subr.bf16.mxu0 0
  %4094 = vmatpush1.bf16.msra.mxu0 %v2871
  %4095 = vmatprep.subr.bf16.mxu0 0
  %4096 = vmatpush1.bf16.msra.mxu0 %v2872
  %4097 = vmatprep.subr.bf16.mxu0 0
  %4098 = vmatpush1.bf16.msra.mxu0 %v2873
  %4099 = vmatprep.subr.bf16.mxu0 0
  %4100 = vmatpush1.bf16.msra.mxu0 %v2874
  %4101 = vmatprep.subr.bf16.mxu0 0
  %4102 = vmatpush1.bf16.msra.mxu0 %v2875
  %4103 = vmatprep.subr.bf16.mxu0 0
  %4104 = vmatpush1.bf16.msra.mxu0 %v2876
  %4105 = vmatprep.subr.bf16.mxu0 0
  %4106 = vmatpush1.bf16.msra.mxu0 %v2877
  %4107 = vmatprep.subr.bf16.mxu0 0
  %4108 = vmatpush1.bf16.msra.mxu0 %v2878
  %4109 = vmatprep.subr.bf16.mxu0 0
  %4110 = vmatpush1.bf16.msra.mxu0 %v2879
  %4111 = vmatprep.subr.bf16.mxu0 0
  %4112 = vmatpush1.bf16.msra.mxu0 %v2880
  %4113 = vmatprep.mubr.bf16.mxu0 %v948
  %4114 = vmatmul.mubr.bf16.gmra.mrb[0].mxu0 %v947
  %v4115 = vpop.f32.mrb[0].mxu0
  %v4116 = vadd.f32 %v4076, %v4115
  %v4117 = vpop.f32.mrb[0].mxu0
  %v4118 = vpop.f32.mrb[0].mxu0
  %v4119 = vpop.f32.mrb[0].mxu0
  %4120 = vdwg.mxu0
  %4121 = vmatprep.subr.bf16.mxu0 0
  %4122 = vmatpush1.bf16.msra.mxu0 %v2881
  %4123 = vmatprep.subr.bf16.mxu0 0
  %4124 = vmatpush1.bf16.msra.mxu0 %v2882
  %4125 = vmatprep.subr.bf16.mxu0 0
  %4126 = vmatpush1.bf16.msra.mxu0 %v2883
  %4127 = vmatprep.subr.bf16.mxu0 0
  %4128 = vmatpush1.bf16.msra.mxu0 %v2884
  %4129 = vmatprep.subr.bf16.mxu0 0
  %4130 = vmatpush1.bf16.msra.mxu0 %v2885
  %4131 = vmatprep.subr.bf16.mxu0 0
  %4132 = vmatpush1.bf16.msra.mxu0 %v2886
  %4133 = vmatprep.subr.bf16.mxu0 0
  %4134 = vmatpush1.bf16.msra.mxu0 %v2887
  %4135 = vmatprep.subr.bf16.mxu0 0
  %4136 = vmatpush1.bf16.msra.mxu0 %v2888
  %4137 = vmatprep.subr.bf16.mxu0 0
  %4138 = vmatpush1.bf16.msra.mxu0 %v2889
  %4139 = vmatprep.subr.bf16.mxu0 0
  %4140 = vmatpush1.bf16.msra.mxu0 %v2890
  %4141 = vmatprep.subr.bf16.mxu0 0
  %4142 = vmatpush1.bf16.msra.mxu0 %v2891
  %4143 = vmatprep.subr.bf16.mxu0 0
  %4144 = vmatpush1.bf16.msra.mxu0 %v2892
  %4145 = vmatprep.subr.bf16.mxu0 0
  %4146 = vmatpush1.bf16.msra.mxu0 %v2893
  %4147 = vmatprep.subr.bf16.mxu0 0
  %4148 = vmatpush1.bf16.msra.mxu0 %v2894
  %4149 = vmatprep.subr.bf16.mxu0 0
  %4150 = vmatpush1.bf16.msra.mxu0 %v2895
  %4151 = vmatprep.subr.bf16.mxu0 0
  %4152 = vmatpush1.bf16.msra.mxu0 %v2896
  %4153 = vmatprep.mubr.bf16.mxu0 %v950
  %4154 = vmatmul.mubr.bf16.gmra.mrb[0].mxu0 %v949
  %v4155 = vpop.f32.mrb[0].mxu0
  %v4156 = vadd.f32 %v4116, %v4155
  %v4157 = vpop.f32.mrb[0].mxu0
  %v4158 = vpop.f32.mrb[0].mxu0
  %v4159 = vpop.f32.mrb[0].mxu0
  %4160 = vdwg.mxu0
  %4161 = vmatprep.subr.bf16.mxu0 0
  %4162 = vmatpush1.bf16.msra.mxu0 %v2897
  %4163 = vmatprep.subr.bf16.mxu0 0
  %4164 = vmatpush1.bf16.msra.mxu0 %v2898
  %4165 = vmatprep.subr.bf16.mxu0 0
  %4166 = vmatpush1.bf16.msra.mxu0 %v2899
  %4167 = vmatprep.subr.bf16.mxu0 0
  %4168 = vmatpush1.bf16.msra.mxu0 %v2900
  %4169 = vmatprep.subr.bf16.mxu0 0
  %4170 = vmatpush1.bf16.msra.mxu0 %v2901
  %4171 = vmatprep.subr.bf16.mxu0 0
  %4172 = vmatpush1.bf16.msra.mxu0 %v2902
  %4173 = vmatprep.subr.bf16.mxu0 0
  %4174 = vmatpush1.bf16.msra.mxu0 %v2903
  %4175 = vmatprep.subr.bf16.mxu0 0
  %4176 = vmatpush1.bf16.msra.mxu0 %v2904
  %4177 = vmatprep.subr.bf16.mxu0 0
  %4178 = vmatpush1.bf16.msra.mxu0 %v2905
  %4179 = vmatprep.subr.bf16.mxu0 0
  %4180 = vmatpush1.bf16.msra.mxu0 %v2906
  %4181 = vmatprep.subr.bf16.mxu0 0
  %4182 = vmatpush1.bf16.msra.mxu0 %v2907
  %4183 = vmatprep.subr.bf16.mxu0 0
  %4184 = vmatpush1.bf16.msra.mxu0 %v2908
  %4185 = vmatprep.subr.bf16.mxu0 0
  %4186 = vmatpush1.bf16.msra.mxu0 %v2909
  %4187 = vmatprep.subr.bf16.mxu0 0
  %4188 = vmatpush1.bf16.msra.mxu0 %v2910
  %4189 = vmatprep.subr.bf16.mxu0 0
  %4190 = vmatpush1.bf16.msra.mxu0 %v2911
  %4191 = vmatprep.subr.bf16.mxu0 0
  %4192 = vmatpush1.bf16.msra.mxu0 %v2912
  %4193 = vmatprep.mubr.bf16.mxu0 %v952
  %4194 = vmatmul.mubr.bf16.gmra.mrb[0].mxu0 %v951
  %v4195 = vpop.f32.mrb[0].mxu0
  %v4196 = vadd.f32 %v4156, %v4195
  %v4197 = vpop.f32.mrb[0].mxu0
  %v4198 = vpop.f32.mrb[0].mxu0
  %v4199 = vpop.f32.mrb[0].mxu0
  %4200 = vdwg.mxu0
  %4201 = vmatprep.subr.bf16.mxu0 0
  %4202 = vmatpush1.bf16.msra.mxu0 %v2913
  %4203 = vmatprep.subr.bf16.mxu0 0
  %4204 = vmatpush1.bf16.msra.mxu0 %v2914
  %4205 = vmatprep.subr.bf16.mxu0 0
  %4206 = vmatpush1.bf16.msra.mxu0 %v2915
  %4207 = vmatprep.subr.bf16.mxu0 0
  %4208 = vmatpush1.bf16.msra.mxu0 %v2916
  %4209 = vmatprep.subr.bf16.mxu0 0
  %4210 = vmatpush1.bf16.msra.mxu0 %v2917
  %4211 = vmatprep.subr.bf16.mxu0 0
  %4212 = vmatpush1.bf16.msra.mxu0 %v2918
  %4213 = vmatprep.subr.bf16.mxu0 0
  %4214 = vmatpush1.bf16.msra.mxu0 %v2919
  %4215 = vmatprep.subr.bf16.mxu0 0
  %4216 = vmatpush1.bf16.msra.mxu0 %v2920
  %4217 = vmatprep.subr.bf16.mxu0 0
  %4218 = vmatpush1.bf16.msra.mxu0 %v2921
  %4219 = vmatprep.subr.bf16.mxu0 0
  %4220 = vmatpush1.bf16.msra.mxu0 %v2922
  %4221 = vmatprep.subr.bf16.mxu0 0
  %4222 = vmatpush1.bf16.msra.mxu0 %v2923
  %4223 = vmatprep.subr.bf16.mxu0 0
  %4224 = vmatpush1.bf16.msra.mxu0 %v2924
  %4225 = vmatprep.subr.bf16.mxu0 0
  %4226 = vmatpush1.bf16.msra.mxu0 %v2925
  %4227 = vmatprep.subr.bf16.mxu0 0
  %4228 = vmatpush1.bf16.msra.mxu0 %v2926
  %4229 = vmatprep.subr.bf16.mxu0 0
  %4230 = vmatpush1.bf16.msra.mxu0 %v2927
  %4231 = vmatprep.subr.bf16.mxu0 0
  %4232 = vmatpush1.bf16.msra.mxu0 %v2928
  %4233 = vmatprep.mubr.bf16.mxu0 %v954
  %4234 = vmatmul.mubr.bf16.gmra.mrb[0].mxu0 %v953
  %v4235 = vpop.f32.mrb[0].mxu0
  %v4236 = vadd.f32 %v4196, %v4235
  %v4237 = vpop.f32.mrb[0].mxu0
  %v4238 = vpop.f32.mrb[0].mxu0
  %v4239 = vpop.f32.mrb[0].mxu0
  %4240 = vdwg.mxu0
  %4241 = vmatprep.subr.bf16.mxu0 0
  %4242 = vmatpush1.bf16.msra.mxu0 %v2929
  %4243 = vmatprep.subr.bf16.mxu0 0
  %4244 = vmatpush1.bf16.msra.mxu0 %v2930
  %4245 = vmatprep.subr.bf16.mxu0 0
  %4246 = vmatpush1.bf16.msra.mxu0 %v2931
  %4247 = vmatprep.subr.bf16.mxu0 0
  %4248 = vmatpush1.bf16.msra.mxu0 %v2932
  %4249 = vmatprep.subr.bf16.mxu0 0
  %4250 = vmatpush1.bf16.msra.mxu0 %v2933
  %4251 = vmatprep.subr.bf16.mxu0 0
  %4252 = vmatpush1.bf16.msra.mxu0 %v2934
  %4253 = vmatprep.subr.bf16.mxu0 0
  %4254 = vmatpush1.bf16.msra.mxu0 %v2935
  %4255 = vmatprep.subr.bf16.mxu0 0
  %4256 = vmatpush1.bf16.msra.mxu0 %v2936
  %4257 = vmatprep.subr.bf16.mxu0 0
  %4258 = vmatpush1.bf16.msra.mxu0 %v2937
  %4259 = vmatprep.subr.bf16.mxu0 0
  %4260 = vmatpush1.bf16.msra.mxu0 %v2938
  %4261 = vmatprep.subr.bf16.mxu0 0
  %4262 = vmatpush1.bf16.msra.mxu0 %v2939
  %4263 = vmatprep.subr.bf16.mxu0 0
  %4264 = vmatpush1.bf16.msra.mxu0 %v2940
  %4265 = vmatprep.subr.bf16.mxu0 0
  %4266 = vmatpush1.bf16.msra.mxu0 %v2941
  %4267 = vmatprep.subr.bf16.mxu0 0
  %4268 = vmatpush1.bf16.msra.mxu0 %v2942
  %4269 = vmatprep.subr.bf16.mxu0 0
  %4270 = vmatpush1.bf16.msra.mxu0 %v2943
  %4271 = vmatprep.subr.bf16.mxu0 0
  %4272 = vmatpush1.bf16.msra.mxu0 %v2944
  %4273 = vmatprep.mubr.bf16.mxu0 %v956
  %4274 = vmatmul.mubr.bf16.gmra.mrb[0].mxu0 %v955
  %v4275 = vpop.f32.mrb[0].mxu0
  %v4276 = vadd.f32 %v4236, %v4275
  %v4277 = vpop.f32.mrb[0].mxu0
  %v4278 = vpop.f32.mrb[0].mxu0
  %v4279 = vpop.f32.mrb[0].mxu0
  %4280 = vdwg.mxu0
  %4281 = vmatprep.subr.bf16.mxu0 0
  %4282 = vmatpush1.bf16.msra.mxu0 %v2945
  %4283 = vmatprep.subr.bf16.mxu0 0
  %4284 = vmatpush1.bf16.msra.mxu0 %v2946
  %4285 = vmatprep.subr.bf16.mxu0 0
  %4286 = vmatpush1.bf16.msra.mxu0 %v2947
  %4287 = vmatprep.subr.bf16.mxu0 0
  %4288 = vmatpush1.bf16.msra.mxu0 %v2948
  %4289 = vmatprep.subr.bf16.mxu0 0
  %4290 = vmatpush1.bf16.msra.mxu0 %v2949
  %4291 = vmatprep.subr.bf16.mxu0 0
  %4292 = vmatpush1.bf16.msra.mxu0 %v2950
  %4293 = vmatprep.subr.bf16.mxu0 0
  %4294 = vmatpush1.bf16.msra.mxu0 %v2951
  %4295 = vmatprep.subr.bf16.mxu0 0
  %4296 = vmatpush1.bf16.msra.mxu0 %v2952
  %4297 = vmatprep.subr.bf16.mxu0 0
  %4298 = vmatpush1.bf16.msra.mxu0 %v2953
  %4299 = vmatprep.subr.bf16.mxu0 0
  %4300 = vmatpush1.bf16.msra.mxu0 %v2954
  %4301 = vmatprep.subr.bf16.mxu0 0
  %4302 = vmatpush1.bf16.msra.mxu0 %v2955
  %4303 = vmatprep.subr.bf16.mxu0 0
  %4304 = vmatpush1.bf16.msra.mxu0 %v2956
  %4305 = vmatprep.subr.bf16.mxu0 0
  %4306 = vmatpush1.bf16.msra.mxu0 %v2957
  %4307 = vmatprep.subr.bf16.mxu0 0
  %4308 = vmatpush1.bf16.msra.mxu0 %v2958
  %4309 = vmatprep.subr.bf16.mxu0 0
  %4310 = vmatpush1.bf16.msra.mxu0 %v2959
  %4311 = vmatprep.subr.bf16.mxu0 0
  %4312 = vmatpush1.bf16.msra.mxu0 %v2960
  %4313 = vmatprep.mubr.bf16.mxu0 %v958
  %4314 = vmatmul.mubr.bf16.gmra.mrb[0].mxu0 %v957
  %v4315 = vpop.f32.mrb[0].mxu0
  %v4316 = vadd.f32 %v4276, %v4315
  %v4317 = vpop.f32.mrb[0].mxu0
  %v4318 = vpop.f32.mrb[0].mxu0
  %v4319 = vpop.f32.mrb[0].mxu0
  %4320 = vdwg.mxu0
  %4321 = vmatprep.subr.bf16.mxu0 0
  %4322 = vmatpush1.bf16.msra.mxu0 %v2961
  %4323 = vmatprep.subr.bf16.mxu0 0
  %4324 = vmatpush1.bf16.msra.mxu0 %v2962
  %4325 = vmatprep.subr.bf16.mxu0 0
  %4326 = vmatpush1.bf16.msra.mxu0 %v2963
  %4327 = vmatprep.subr.bf16.mxu0 0
  %4328 = vmatpush1.bf16.msra.mxu0 %v2964
  %4329 = vmatprep.subr.bf16.mxu0 0
  %4330 = vmatpush1.bf16.msra.mxu0 %v2965
  %4331 = vmatprep.subr.bf16.mxu0 0
  %4332 = vmatpush1.bf16.msra.mxu0 %v2966
  %4333 = vmatprep.subr.bf16.mxu0 0
  %4334 = vmatpush1.bf16.msra.mxu0 %v2967
  %4335 = vmatprep.subr.bf16.mxu0 0
  %4336 = vmatpush1.bf16.msra.mxu0 %v2968
  %4337 = vmatprep.subr.bf16.mxu0 0
  %4338 = vmatpush1.bf16.msra.mxu0 0
  %4339 = vmatprep.subr.bf16.mxu0 0
  %4340 = vmatpush1.bf16.msra.mxu0 0
  %4341 = vmatprep.subr.bf16.mxu0 0
  %4342 = vmatpush1.bf16.msra.mxu0 0
  %4343 = vmatprep.subr.bf16.mxu0 0
  %4344 = vmatpush1.bf16.msra.mxu0 0
  %4345 = vmatprep.subr.bf16.mxu0 0
  %4346 = vmatpush1.bf16.msra.mxu0 0
  %4347 = vmatprep.subr.bf16.mxu0 0
  %4348 = vmatpush1.bf16.msra.mxu0 0
  %4349 = vmatprep.subr.bf16.mxu0 0
  %4350 = vmatpush1.bf16.msra.mxu0 0
  %4351 = vmatprep.subr.bf16.mxu0 0
  %4352 = vmatpush1.bf16.msra.mxu0 0
  %4353 = vmatprep.mubr.bf16.mxu0 0
  %4354 = vmatmul.mubr.bf16.gmra.mrb[0].mxu0 %v959
  %v4355 = vpop.f32.mrb[0].mxu0
  %v4356 = vadd.f32 %v4316, %v4355
  %v4357 = vpop.f32.mrb[0].mxu0
  %v4358 = vpop.f32.mrb[0].mxu0
  %v4359 = vpop.f32.mrb[0].mxu0
  %4360 = vdwg.mxu0
  %v4361 = vmax.f32 %v4356, 0.0
  %v4362 = vld [vmem:[%s3] sm:$0xff]
  %v4363 = vld [vmem:[%s3 + $0x8] sm:$0xff]
  %v4364 = vld [vmem:[%s3 + $0x10] sm:$0xff]
  %v4365 = vld [vmem:[%s3 + $0x18] sm:$0xff]
  %v4366 = vld [vmem:[%s3 + $0x20] sm:$0xff]
  %v4367 = vld [vmem:[%s3 + $0x28] sm:$0xff]
  %v4368 = vld [vmem:[%s3 + $0x30] sm:$0xff]
  %v4369 = vld [vmem:[%s3 + $0x38] sm:$0xff]
  %v4370 = vld [vmem:[%s3 + $0x40] sm:$0xff]
  %v4371 = vld [vmem:[%s3 + $0x48] sm:$0xff]
  %v4372 = vld [vmem:[%s3 + $0x50] sm:$0xff]
  %v4373 = vld [vmem:[%s3 + $0x58] sm:$0xff]
  %v4374 = vld [vmem:[%s3 + $0x60] sm:$0xff]
  %v4375 = vld [vmem:[%s3 + $0x68] sm:$0xff]
  %v4376 = vld [vmem:[%s3 + $0x70] sm:$0xff]
  %v4377 = vld [vmem:[%s3 + $0x78] sm:$0xff]
  %v4378 = vld [vmem:[%s4] sm:$0x1]
  %v4380 = vlaneseq
  %v4381 = vshrl.u32 %v4380, 7
  %v4382 = vsub.s32 0, %v4381
  %v4383 = vrot.slane %v4378, %v4382
  %4385 = vmatprep.subr.mxu0 0.0
  %4386 = vmatpush1.msra.mxu0 %v4362
  %4387 = vmatprep.subr.mxu0 0.0
  %4388 = vmatpush1.msra.mxu0 %v4363
  %4389 = vmatprep.subr.mxu0 0.0
  %4390 = vmatpush1.msra.mxu0 %v4364
  %4391 = vmatprep.subr.mxu0 0.0
  %4392 = vmatpush1.msra.mxu0 %v4365
  %4393 = vmatprep.subr.mxu0 0.0
  %4394 = vmatpush1.msra.mxu0 %v4366
  %4395 = vmatprep.subr.mxu0 0.0
  %4396 = vmatpush1.msra.mxu0 %v4367
  %4397 = vmatprep.subr.mxu0 0.0
  %4398 = vmatpush1.msra.mxu0 %v4368
  %4399 = vmatprep.subr.mxu0 0.0
  %4400 = vmatpush1.msra.mxu0 %v4369
  %4401 = vmatprep.subr.mxu0 0.0
  %4402 = vmatpush1.msra.mxu0 %v4370
  %4403 = vmatprep.subr.mxu0 0.0
  %4404 = vmatpush1.msra.mxu0 %v4371
  %4405 = vmatprep.subr.mxu0 0.0
  %4406 = vmatpush1.msra.mxu0 %v4372
  %4407 = vmatprep.subr.mxu0 0.0
  %4408 = vmatpush1.msra.mxu0 %v4373
  %4409 = vmatprep.subr.mxu0 0.0
  %4410 = vmatpush1.msra.mxu0 %v4374
  %4411 = vmatprep.subr.mxu0 0.0
  %4412 = vmatpush1.msra.mxu0 %v4375
  %4413 = vmatprep.subr.mxu0 0.0
  %4414 = vmatpush1.msra.mxu0 %v4376
  %4415 = vmatprep.subr.mxu0 0.0
  %4416 = vmatpush1.msra.mxu0 %v4377
  %4417 = vmatprep.subr.mxu0 0.0
  %4418 = vmatpush1.msra.mxu0 0.0
  %4419 = vmatprep.subr.mxu0 0.0
  %4420 = vmatpush1.msra.mxu0 0.0
  %4421 = vmatprep.subr.mxu0 0.0
  %4422 = vmatpush1.msra.mxu0 0.0
  %4423 = vmatprep.subr.mxu0 0.0
  %4424 = vmatpush1.msra.mxu0 0.0
  %4425 = vmatprep.subr.mxu0 0.0
  %4426 = vmatpush1.msra.mxu0 0.0
  %4427 = vmatprep.subr.mxu0 0.0
  %4428 = vmatpush1.msra.mxu0 0.0
  %4429 = vmatprep.subr.mxu0 0.0
  %4430 = vmatpush1.msra.mxu0 0.0
  %4431 = vmatprep.subr.mxu0 0.0
  %4432 = vmatpush1.msra.mxu0 0.0
  %4433 = vmatprep.subr.mxu0 0.0
  %4434 = vmatpush1.msra.mxu0 0.0
  %4435 = vmatprep.subr.mxu0 0.0
  %4436 = vmatpush1.msra.mxu0 0.0
  %4437 = vmatprep.subr.mxu0 0.0
  %4438 = vmatpush1.msra.mxu0 0.0
  %4439 = vmatprep.subr.mxu0 0.0
  %4440 = vmatpush1.msra.mxu0 0.0
  %4441 = vmatprep.subr.mxu0 0.0
  %4442 = vmatpush1.msra.mxu0 0.0
  %4443 = vmatprep.subr.mxu0 0.0
  %4444 = vmatpush1.msra.mxu0 0.0
  %4445 = vmatprep.subr.mxu0 0.0
  %4446 = vmatpush1.msra.mxu0 0.0
  %4447 = vmatprep.subr.mxu0 0.0
  %4448 = vmatpush1.msra.mxu0 0.0
  %4449 = vmatprep.mubr.f32.mxu0 0.0
  %4450 = vmatmul.mubr.f32.gmra.mrb[0].mxu0 %v4361
  %v4451 = vpop.f32.mrb[0].mxu0
  %v4452 = vadd.f32 %v4383, %v4451
  %v4453 = vpop.f32.mrb[0].mxu0
  %4454 = vdwg.mxu0
  %4455 = vst [vmem:[%s5] sm:$0xff] %v4452
  // Predicated region
  $region22: #{nature_cnn_forward.7} parent=0 // pred_check
    _
  $region23: #{nature_cnn_forward.7} parent=0 // pred_check_branch
    %4457 = sbr.rel (0) target = $region25
  $region24: #{nature_cnn_forward.7} parent=0 // pred_region
    _
  $region25: #{nature_cnn_forward.7} parent=0 // pred_fallthru
    _
  // Predicated region
  $region26: #{nature_cnn_forward.7} parent=0 // pred_check
    _
  $region27: #{nature_cnn_forward.7} parent=0 // pred_check_branch
    %4459 = sbr.rel (0) target = $region29
  $region28: #{nature_cnn_forward.7} parent=0 // pred_region
    _
  $region29: #{nature_cnn_forward.7} parent=0 // pred_fallthru
    _

</llo_original>
